<compile_context>
chip_gen: v7x
topology: tpu7x:2x2x1
jax: 0.10.0
libtpu: 0.0.40
codegen_flags: <defaults>
</compile_context>

<pallas_src>
import jax
import jax.numpy as jnp
from jax.experimental import pallas as pl
from jax.experimental.pallas import tpu as pltpu

EPS = 1e-5  # PyTorch InstanceNorm2d default


# ----------------------------- Pallas kernel --------------------------------
def _residual_block_kernel(x_ref, w1_ref, g1_ref, be1_ref,
                           w2_ref, g2_ref, be2_ref,
                           o_ref, pad_ref, patch_ref):
    # x_ref   : (C, H*W)      f32, lane-dense activation for this batch element
    # w*_ref  : (C, 9*C)      bf16, conv weight pre-flattened to im2col order
    # g*/be*  : (C, 1)        f32, InstanceNorm affine params
    # o_ref   : (C, H*W)      output block (lane-dense)
    # pad_ref : (C, H+2, W+2) f32 VMEM scratch: reflection-padded activation
    # patch_ref: (9*C, H*W)   f32 VMEM scratch: im2col patches
    C, Hp, Wp = pad_ref.shape
    H, W = Hp - 2, Wp - 2
    HW = H * W
    inv_hw = 1.0 / HW

    x = x_ref[...].astype(jnp.float32)                       # (C, HW)

    def reflect_pad(y_flat):
        # ReflectionPad2d(1) via slice-stores into scratch (assumes H, W >= 2).
        y = y_flat.reshape(C, H, W)
        pad_ref[:, 1:H + 1, 1:W + 1] = y                      # interior
        pad_ref[:, 0:1, 1:W + 1] = y[:, 1:2, :]               # top row    <- row 1
        pad_ref[:, H + 1:H + 2, 1:W + 1] = y[:, H - 2:H - 1, :]  # bottom  <- row H-2
        pad_ref[:, :, 0:1] = pad_ref[:, :, 2:3]               # left col (corners ok)
        pad_ref[:, :, W + 1:W + 2] = pad_ref[:, :, W - 1:W]   # right col

    def im2col():
        # patch[(kh*3+kw)*C + c_in, r*W + c] = pad[c_in, r+kh, c+kw]
        pad = pad_ref[...]
        for kh in range(3):
            for kw in range(3):
                t = kh * 3 + kw
                patch_ref[t * C:(t + 1) * C, :] = (
                    pad[:, kh:kh + H, kw:kw + W].reshape(C, HW))

    def conv3x3(w2d_bf16):
        # One MXU matmul: (C, 9C) @ (9C, HW), bf16 operands, f32 accumulate.
        return jnp.dot(w2d_bf16, patch_ref[...].astype(jnp.bfloat16),
                       preferred_element_type=jnp.float32)

    def instance_norm(y, g, be):
        # One-pass biased stats over the lane (spatial) axis.
        mean = jnp.sum(y, axis=1, keepdims=True) * inv_hw
        var = jnp.sum(y * y, axis=1, keepdims=True) * inv_hw - mean * mean
        scale = g * jax.lax.rsqrt(var + EPS)
        return y * scale + (be - mean * scale)

    # ---- conv1 + IN1 + ReLU   (conv bias omitted: IN cancels it exactly) ----
    reflect_pad(x)
    im2col()
    h = instance_norm(conv3x3(w1_ref[...]), g1_ref[...], be1_ref[...])
    h = jnp.maximum(h, 0.0)

    # ---- conv2 + IN2 ----
    reflect_pad(h)
    im2col()
    h = instance_norm(conv3x3(w2_ref[...]), g2_ref[...], be2_ref[...])

    # ---- residual add, lane-dense store ----
    o_ref[...] = (x + h).astype(o_ref.dtype)


# ------------------------------- wrapper -------------------------------------
@jax.jit
def residual_block(x, w1, b1, g1, be1, w2, b2, g2, be2):
    # b1 / b2 are accepted for API parity with the PyTorch module but are not
    # sent to the kernel: InstanceNorm's mean subtraction cancels them exactly.
    N, C, H, W = x.shape
    HW = H * W

    x_flat = x.reshape(N, C, HW)          # free reshape of contiguous NCHW

    def flatten_w(w):                     # (C_out,C_in,3,3) -> (C_out, 9*C_in)
        return jnp.transpose(w, (0, 2, 3, 1)).reshape(C, 9 * C).astype(jnp.bfloat16)

    w1f, w2f = flatten_w(w1), flatten_w(w2)
    g1c, be1c = g1.reshape(C, 1), be1.reshape(C, 1)
    g2c, be2c = g2.reshape(C, 1), be2.reshape(C, 1)

    act_spec = pl.BlockSpec((None, C, HW), lambda n: (n, 0, 0))
    w_spec = pl.BlockSpec((C, 9 * C), lambda n: (0, 0))
    vec_spec = pl.BlockSpec((C, 1), lambda n: (0, 0))

    # Explicit VMEM budget: double-buffered act in/out + weights + scratch.
    rup = lambda a, m: -(-a // m) * m
    lanes = rup(HW, 128)
    act_b = rup(C, 8) * lanes * 4
    pad_b = rup(C, 8) * rup(H + 2, 8) * rup(W + 2, 128) * 4
    patch_b = rup(9 * C, 8) * lanes * 4
    w_b = rup(C, 16) * rup(9 * C, 128) * 2
    need = 2 * 2 * act_b + 2 * 2 * w_b + pad_b + patch_b
    vmem_limit = int(min(max(4 * need, 32 << 20), 100 << 20))

    out_flat = pl.pallas_call(
        _residual_block_kernel,
        grid=(N,),
        in_specs=[act_spec, w_spec, vec_spec, vec_spec,
                  w_spec, vec_spec, vec_spec],
        out_specs=act_spec,
        out_shape=jax.ShapeDtypeStruct((N, C, HW), x.dtype),
        scratch_shapes=[pltpu.VMEM((C, H + 2, W + 2), jnp.float32),
                        pltpu.VMEM((9 * C, HW), jnp.float32)],
        compiler_params=pltpu.CompilerParams(
            dimension_semantics=("parallel",),
            vmem_limit_bytes=vmem_limit),
    )(x_flat, w1f, g1c, be1c, w2f, g2c, be2c)

    return out_flat.reshape(N, C, H, W)


# --------------------------- parameter setup (glue) ---------------------------
def spectral_normalize(w, key, n_iter=30):
    """W / sigma(W), sigma estimated by power iteration on W.reshape(out, -1)."""
    wm = w.reshape(w.shape[0], -1)
    u = jax.random.normal(key, (w.shape[0],), dtype=w.dtype)
    u = u / (jnp.linalg.norm(u) + 1e-12)
    v = jnp.zeros((wm.shape[1],), w.dtype)
    for _ in range(n_iter):
        v = wm.T @ u
        v = v / (jnp.linalg.norm(v) + 1e-12)
        u = wm @ v
        u = u / (jnp.linalg.norm(u) + 1e-12)
    sigma = u @ (wm @ v)
    return w / sigma


# ------------------------------ pure-JAX reference ----------------------------
def reference_forward(x, w1, b1, g1, be1, w2, b2, g2, be2, mxu_bf16=False):
    """Reference forward. mxu_bf16=True mirrors the kernel's bf16 MXU operands."""
    q = (lambda a: a.astype(jnp.bfloat16).astype(jnp.float32)) if mxu_bf16 \
        else (lambda a: a)

    def conv(xi, w, b):
        xp = jnp.pad(xi, ((0, 0), (0, 0), (1, 1), (1, 1)), mode="reflect")
        y = jax.lax.conv_general_dilated(
            q(xp), q(w), window_strides=(1, 1), padding="VALID",
            dimension_numbers=("NCHW", "OIHW", "NCHW"),
            precision=jax.lax.Precision.HIGHEST)
        return y + b.reshape(1, -1, 1, 1)

    def inorm(y, g, be):
        m = y.mean(axis=(2, 3), keepdims=True)
        v = ((y - m) ** 2).mean(axis=(2, 3), keepdims=True)
        return (g.reshape(1, -1, 1, 1) * (y - m) / jnp.sqrt(v + EPS)
                + be.reshape(1, -1, 1, 1))

    h = inorm(conv(x, w1, b1), g1, be1)
    h = jnp.maximum(h, 0.0)
    h = inorm(conv(h, w2, b2), g2, be2)
    return x + h


# ----------------------------------- main -------------------------------------
if __name__ == "__main__":
    key = jax.random.PRNGKey(0)
    N, C, H, W = 2, 4, 16, 16

    ks = jax.random.split(key, 12)
    x = jax.random.normal(ks[0], (N, C, H, W), jnp.float32)

    w1_raw = jax.random.normal(ks[1], (C, C, 3, 3), jnp.float32) * 0.2
    b1 = jax.random.normal(ks[2], (C,), jnp.float32) * 0.1
    g1 = 1.0 + 0.1 * jax.random.normal(ks[3], (C,), jnp.float32)
    be1 = 0.1 * jax.random.normal(ks[4], (C,), jnp.float32)

    w2_raw = jax.random.normal(ks[5], (C, C, 3, 3), jnp.float32) * 0.2
    b2 = jax.random.normal(ks[6], (C,), jnp.float32) * 0.1
    g2 = 1.0 + 0.1 * jax.random.normal(ks[7], (C,), jnp.float32)
    be2 = 0.1 * jax.random.normal(ks[8], (C,), jnp.float32)

    # spectral_norm(weight): weight preprocessing, plain JAX glue
    w1 = spectral_normalize(w1_raw, ks[9])
    w2 = spectral_normalize(w2_raw, ks[10])

    out = jax.block_until_ready(
        residual_block(x, w1, b1, g1, be1, w2, b2, g2, be2))
    assert out.shape == (N, C, H, W)

    # Tight check vs a reference that mirrors the kernel's bf16 MXU operands.
    ref_bf16 = reference_forward(x, w1, b1, g1, be1, w2, b2, g2, be2,
                                 mxu_bf16=True)
    err_bf16 = float(jnp.max(jnp.abs(out - ref_bf16)))
    assert jnp.allclose(out, ref_bf16, atol=5e-2, rtol=5e-2), err_bf16

    # Looser sanity check vs the exact-f32 (PyTorch-semantics) reference; the
    # only expected difference is bf16 quantization of the MXU operands.
    ref_f32 = reference_forward(x, w1, b1, g1, be1, w2, b2, g2, be2)
    err_f32 = float(jnp.max(jnp.abs(out - ref_f32)))
    assert jnp.allclose(out, ref_f32, atol=2.5e-1, rtol=5e-2), err_f32

    print("KERNEL_OK")
</pallas_src>

<mosaic_0001>
module attributes {stable_mosaic.version = 11 : i64} {
  func.func @_residual_block_kernel(%arg0: i32, %arg1: memref<1x4x256xf32, #tpu.memory_space<vmem>>, %arg2: memref<4x36xbf16, #tpu.memory_space<vmem>>, %arg3: memref<4x1xf32, #tpu.memory_space<vmem>>, %arg4: memref<4x1xf32, #tpu.memory_space<vmem>>, %arg5: memref<4x36xbf16, #tpu.memory_space<vmem>>, %arg6: memref<4x1xf32, #tpu.memory_space<vmem>>, %arg7: memref<4x1xf32, #tpu.memory_space<vmem>>, %arg8: memref<1x4x256xf32, #tpu.memory_space<vmem>>, %arg9: memref<4x18x18xf32, #tpu.memory_space<vmem>>, %arg10: memref<36x256xf32, #tpu.memory_space<vmem>>) attributes {dimension_semantics = [#tpu.dimension_semantics<parallel>], iteration_bounds = array<i64: 2>, scalar_prefetch = 0 : i64, scratch_operands = 2 : i64, tpu.core_type = #tpu.core_type<tc>, window_params = [{transform_indices = @transform_0, window_bounds = array<i64: 1, 4, 256>}, {pipeline_mode = #tpu.pipeline_mode<synchronous>, transform_indices = @transform_1, window_bounds = array<i64: 4, 36>}, {pipeline_mode = #tpu.pipeline_mode<synchronous>, transform_indices = @transform_2, window_bounds = array<i64: 4, 1>}, {pipeline_mode = #tpu.pipeline_mode<synchronous>, transform_indices = @transform_3, window_bounds = array<i64: 4, 1>}, {pipeline_mode = #tpu.pipeline_mode<synchronous>, transform_indices = @transform_4, window_bounds = array<i64: 4, 36>}, {pipeline_mode = #tpu.pipeline_mode<synchronous>, transform_indices = @transform_5, window_bounds = array<i64: 4, 1>}, {pipeline_mode = #tpu.pipeline_mode<synchronous>, transform_indices = @transform_6, window_bounds = array<i64: 4, 1>}, {transform_indices = @transform_7, window_bounds = array<i64: 1, 4, 256>}]} {
    %c0 = arith.constant 0 : index
    %c0_0 = arith.constant 0 : index
    %c0_1 = arith.constant 0 : index
    %0 = vector.load %arg1[%c0, %c0_0, %c0_1] : memref<1x4x256xf32, #tpu.memory_space<vmem>>, vector<1x4x256xf32>
    %1 = vector.shape_cast %0 : vector<1x4x256xf32> to vector<4x256xf32>
    %2 = vector.shape_cast %1 : vector<4x256xf32> to vector<4x16x16xf32>
    %c0_2 = arith.constant 0 : index
    %c1 = arith.constant 1 : index
    %c1_3 = arith.constant 1 : index
    %3 = vector.load %arg9[%c0_2, %c1, %c1_3] : memref<4x18x18xf32, #tpu.memory_space<vmem>>, vector<4x16x16xf32>
    tpu.vector_store %arg9[%c0_2, %c1, %c1_3], %2 {strides = array<i32>} : memref<4x18x18xf32, #tpu.memory_space<vmem>>, vector<4x16x16xf32>,
    %4 = vector.extract_strided_slice %2 {offsets = [0, 1, 0], sizes = [4, 1, 16], strides = [1, 1, 1]} : vector<4x16x16xf32> to vector<4x1x16xf32>
    %c0_4 = arith.constant 0 : index
    %c0_5 = arith.constant 0 : index
    %c1_6 = arith.constant 1 : index
    %5 = vector.load %arg9[%c0_4, %c0_5, %c1_6] : memref<4x18x18xf32, #tpu.memory_space<vmem>>, vector<4x1x16xf32>
    tpu.vector_store %arg9[%c0_4, %c0_5, %c1_6], %4 {strides = array<i32>} : memref<4x18x18xf32, #tpu.memory_space<vmem>>, vector<4x1x16xf32>,
    %6 = vector.extract_strided_slice %2 {offsets = [0, 14, 0], sizes = [4, 1, 16], strides = [1, 1, 1]} : vector<4x16x16xf32> to vector<4x1x16xf32>
    %c0_7 = arith.constant 0 : index
    %c17 = arith.constant 17 : index
    %c1_8 = arith.constant 1 : index
    %7 = vector.load %arg9[%c0_7, %c17, %c1_8] : memref<4x18x18xf32, #tpu.memory_space<vmem>>, vector<4x1x16xf32>
    tpu.vector_store %arg9[%c0_7, %c17, %c1_8], %6 {strides = array<i32>} : memref<4x18x18xf32, #tpu.memory_space<vmem>>, vector<4x1x16xf32>,
    %c0_9 = arith.constant 0 : index
    %c0_10 = arith.constant 0 : index
    %c2 = arith.constant 2 : index
    %8 = vector.load %arg9[%c0_9, %c0_10, %c2] : memref<4x18x18xf32, #tpu.memory_space<vmem>>, vector<4x18x1xf32>
    %c0_11 = arith.constant 0 : index
    %c0_12 = arith.constant 0 : index
    %c0_13 = arith.constant 0 : index
    %9 = vector.load %arg9[%c0_11, %c0_12, %c0_13] : memref<4x18x18xf32, #tpu.memory_space<vmem>>, vector<4x18x1xf32>
    tpu.vector_store %arg9[%c0_11, %c0_12, %c0_13], %8 {strides = array<i32>} : memref<4x18x18xf32, #tpu.memory_space<vmem>>, vector<4x18x1xf32>,
    %c0_14 = arith.constant 0 : index
    %c0_15 = arith.constant 0 : index
    %c15 = arith.constant 15 : index
    %10 = vector.load %arg9[%c0_14, %c0_15, %c15] : memref<4x18x18xf32, #tpu.memory_space<vmem>>, vector<4x18x1xf32>
    %c0_16 = arith.constant 0 : index
    %c0_17 = arith.constant 0 : index
    %c17_18 = arith.constant 17 : index
    %11 = vector.load %arg9[%c0_16, %c0_17, %c17_18] : memref<4x18x18xf32, #tpu.memory_space<vmem>>, vector<4x18x1xf32>
    tpu.vector_store %arg9[%c0_16, %c0_17, %c17_18], %10 {strides = array<i32>} : memref<4x18x18xf32, #tpu.memory_space<vmem>>, vector<4x18x1xf32>,
    %c0_19 = arith.constant 0 : index
    %c0_20 = arith.constant 0 : index
    %c0_21 = arith.constant 0 : index
    %12 = vector.load %arg9[%c0_19, %c0_20, %c0_21] : memref<4x18x18xf32, #tpu.memory_space<vmem>>, vector<4x18x18xf32>
    %13 = vector.extract_strided_slice %12 {offsets = [0, 0, 0], sizes = [4, 16, 16], strides = [1, 1, 1]} : vector<4x18x18xf32> to vector<4x16x16xf32>
    %14 = vector.shape_cast %13 : vector<4x16x16xf32> to vector<4x256xf32>
    %c0_22 = arith.constant 0 : index
    %c0_23 = arith.constant 0 : index
    %15 = vector.load %arg10[%c0_22, %c0_23] : memref<36x256xf32, #tpu.memory_space<vmem>>, vector<4x256xf32>
    tpu.vector_store %arg10[%c0_22, %c0_23], %14 {strides = array<i32>} : memref<36x256xf32, #tpu.memory_space<vmem>>, vector<4x256xf32>,
    %16 = vector.extract_strided_slice %12 {offsets = [0, 0, 1], sizes = [4, 16, 16], strides = [1, 1, 1]} : vector<4x18x18xf32> to vector<4x16x16xf32>
    %17 = vector.shape_cast %16 : vector<4x16x16xf32> to vector<4x256xf32>
    %c4 = arith.constant 4 : index
    %c0_24 = arith.constant 0 : index
    %18 = vector.load %arg10[%c4, %c0_24] : memref<36x256xf32, #tpu.memory_space<vmem>>, vector<4x256xf32>
    tpu.vector_store %arg10[%c4, %c0_24], %17 {strides = array<i32>} : memref<36x256xf32, #tpu.memory_space<vmem>>, vector<4x256xf32>,
    %19 = vector.extract_strided_slice %12 {offsets = [0, 0, 2], sizes = [4, 16, 16], strides = [1, 1, 1]} : vector<4x18x18xf32> to vector<4x16x16xf32>
    %20 = vector.shape_cast %19 : vector<4x16x16xf32> to vector<4x256xf32>
    %c8 = arith.constant 8 : index
    %c0_25 = arith.constant 0 : index
    %21 = vector.load %arg10[%c8, %c0_25] : memref<36x256xf32, #tpu.memory_space<vmem>>, vector<4x256xf32>
    tpu.vector_store %arg10[%c8, %c0_25], %20 {strides = array<i32>} : memref<36x256xf32, #tpu.memory_space<vmem>>, vector<4x256xf32>,
    %22 = vector.extract_strided_slice %12 {offsets = [0, 1, 0], sizes = [4, 16, 16], strides = [1, 1, 1]} : vector<4x18x18xf32> to vector<4x16x16xf32>
    %23 = vector.shape_cast %22 : vector<4x16x16xf32> to vector<4x256xf32>
    %c12 = arith.constant 12 : index
    %c0_26 = arith.constant 0 : index
    %24 = vector.load %arg10[%c12, %c0_26] : memref<36x256xf32, #tpu.memory_space<vmem>>, vector<4x256xf32>
    tpu.vector_store %arg10[%c12, %c0_26], %23 {strides = array<i32>} : memref<36x256xf32, #tpu.memory_space<vmem>>, vector<4x256xf32>,
    %25 = vector.extract_strided_slice %12 {offsets = [0, 1, 1], sizes = [4, 16, 16], strides = [1, 1, 1]} : vector<4x18x18xf32> to vector<4x16x16xf32>
    %26 = vector.shape_cast %25 : vector<4x16x16xf32> to vector<4x256xf32>
    %c16 = arith.constant 16 : index
    %c0_27 = arith.constant 0 : index
    %27 = vector.load %arg10[%c16, %c0_27] : memref<36x256xf32, #tpu.memory_space<vmem>>, vector<4x256xf32>
    tpu.vector_store %arg10[%c16, %c0_27], %26 {strides = array<i32>} : memref<36x256xf32, #tpu.memory_space<vmem>>, vector<4x256xf32>,
    %28 = vector.extract_strided_slice %12 {offsets = [0, 1, 2], sizes = [4, 16, 16], strides = [1, 1, 1]} : vector<4x18x18xf32> to vector<4x16x16xf32>
    %29 = vector.shape_cast %28 : vector<4x16x16xf32> to vector<4x256xf32>
    %c20 = arith.constant 20 : index
    %c0_28 = arith.constant 0 : index
    %30 = vector.load %arg10[%c20, %c0_28] : memref<36x256xf32, #tpu.memory_space<vmem>>, vector<4x256xf32>
    tpu.vector_store %arg10[%c20, %c0_28], %29 {strides = array<i32>} : memref<36x256xf32, #tpu.memory_space<vmem>>, vector<4x256xf32>,
    %31 = vector.extract_strided_slice %12 {offsets = [0, 2, 0], sizes = [4, 16, 16], strides = [1, 1, 1]} : vector<4x18x18xf32> to vector<4x16x16xf32>
    %32 = vector.shape_cast %31 : vector<4x16x16xf32> to vector<4x256xf32>
    %c24 = arith.constant 24 : index
    %c0_29 = arith.constant 0 : index
    %33 = vector.load %arg10[%c24, %c0_29] : memref<36x256xf32, #tpu.memory_space<vmem>>, vector<4x256xf32>
    tpu.vector_store %arg10[%c24, %c0_29], %32 {strides = array<i32>} : memref<36x256xf32, #tpu.memory_space<vmem>>, vector<4x256xf32>,
    %34 = vector.extract_strided_slice %12 {offsets = [0, 2, 1], sizes = [4, 16, 16], strides = [1, 1, 1]} : vector<4x18x18xf32> to vector<4x16x16xf32>
    %35 = vector.shape_cast %34 : vector<4x16x16xf32> to vector<4x256xf32>
    %c28 = arith.constant 28 : index
    %c0_30 = arith.constant 0 : index
    %36 = vector.load %arg10[%c28, %c0_30] : memref<36x256xf32, #tpu.memory_space<vmem>>, vector<4x256xf32>
    tpu.vector_store %arg10[%c28, %c0_30], %35 {strides = array<i32>} : memref<36x256xf32, #tpu.memory_space<vmem>>, vector<4x256xf32>,
    %37 = vector.extract_strided_slice %12 {offsets = [0, 2, 2], sizes = [4, 16, 16], strides = [1, 1, 1]} : vector<4x18x18xf32> to vector<4x16x16xf32>
    %38 = vector.shape_cast %37 : vector<4x16x16xf32> to vector<4x256xf32>
    %c32 = arith.constant 32 : index
    %c0_31 = arith.constant 0 : index
    %39 = vector.load %arg10[%c32, %c0_31] : memref<36x256xf32, #tpu.memory_space<vmem>>, vector<4x256xf32>
    tpu.vector_store %arg10[%c32, %c0_31], %38 {strides = array<i32>} : memref<36x256xf32, #tpu.memory_space<vmem>>, vector<4x256xf32>,
    %c0_32 = arith.constant 0 : index
    %c0_33 = arith.constant 0 : index
    %40 = vector.load %arg2[%c0_32, %c0_33] : memref<4x36xbf16, #tpu.memory_space<vmem>>, vector<4x36xbf16>
    %c0_34 = arith.constant 0 : index
    %c0_35 = arith.constant 0 : index
    %41 = vector.load %arg10[%c0_34, %c0_35] : memref<36x256xf32, #tpu.memory_space<vmem>>, vector<36x256xf32>
    %42 = arith.truncf %41 : vector<36x256xf32> to vector<36x256xbf16>
    %cst = arith.constant dense<0.000000e+00> : vector<4x256xf32>
    %43 = tpu.matmul %40, %42, %cst {dimension_numbers = #tpu.dot_dimension_numbers<[1], [0], [0], [1], [0, 0, 1, 1], [], []>} : vector<4x36xbf16>, vector<36x256xbf16>, vector<4x256xf32> -> vector<4x256xf32>
    %c0_36 = arith.constant 0 : index
    %c0_37 = arith.constant 0 : index
    %44 = vector.load %arg3[%c0_36, %c0_37] : memref<4x1xf32, #tpu.memory_space<vmem>>, vector<4x1xf32>
    %c0_38 = arith.constant 0 : index
    %c0_39 = arith.constant 0 : index
    %45 = vector.load %arg4[%c0_38, %c0_39] : memref<4x1xf32, #tpu.memory_space<vmem>>, vector<4x1xf32>
    %cst_40 = arith.constant dense<0.000000e+00> : vector<4xf32>
    %46 = vector.multi_reduction <add>, %43, %cst_40 [1] : vector<4x256xf32> to vector<4xf32>
    %47 = vector.shape_cast %46 : vector<4xf32> to vector<4x1xf32>
    %cst_41 = arith.constant 3.906250e-03 : f32
    %48 = vector.broadcast %cst_41 : f32 to vector<4x1xf32>
    %49 = arith.mulf %47, %48 : vector<4x1xf32>
    %50 = arith.mulf %43, %43 : vector<4x256xf32>
    %cst_42 = arith.constant dense<0.000000e+00> : vector<4xf32>
    %51 = vector.multi_reduction <add>, %50, %cst_42 [1] : vector<4x256xf32> to vector<4xf32>
    %52 = vector.shape_cast %51 : vector<4xf32> to vector<4x1xf32>
    %cst_43 = arith.constant 3.906250e-03 : f32
    %53 = vector.broadcast %cst_43 : f32 to vector<4x1xf32>
    %54 = arith.mulf %52, %53 : vector<4x1xf32>
    %55 = arith.mulf %49, %49 : vector<4x1xf32>
    %56 = arith.subf %54, %55 : vector<4x1xf32>
    %cst_44 = arith.constant 9.99999974E-6 : f32
    %57 = vector.broadcast %cst_44 : f32 to vector<4x1xf32>
    %58 = arith.addf %56, %57 : vector<4x1xf32>
    %59 = math.rsqrt %58 : vector<4x1xf32>
    %60 = arith.mulf %44, %59 : vector<4x1xf32>
    %61 = vector.broadcast %60 : vector<4x1xf32> to vector<4x256xf32>
    %62 = arith.mulf %43, %61 : vector<4x256xf32>
    %63 = arith.mulf %49, %60 : vector<4x1xf32>
    %64 = arith.subf %45, %63 : vector<4x1xf32>
    %65 = vector.broadcast %64 : vector<4x1xf32> to vector<4x256xf32>
    %66 = arith.addf %62, %65 : vector<4x256xf32>
    %cst_45 = arith.constant 0.000000e+00 : f32
    %67 = vector.broadcast %cst_45 : f32 to vector<4x256xf32>
    %68 = arith.maximumf %66, %67 : vector<4x256xf32>
    %69 = vector.shape_cast %68 : vector<4x256xf32> to vector<4x16x16xf32>
    %c0_46 = arith.constant 0 : index
    %c1_47 = arith.constant 1 : index
    %c1_48 = arith.constant 1 : index
    %70 = vector.load %arg9[%c0_46, %c1_47, %c1_48] : memref<4x18x18xf32, #tpu.memory_space<vmem>>, vector<4x16x16xf32>
    tpu.vector_store %arg9[%c0_46, %c1_47, %c1_48], %69 {strides = array<i32>} : memref<4x18x18xf32, #tpu.memory_space<vmem>>, vector<4x16x16xf32>,
    %71 = vector.extract_strided_slice %69 {offsets = [0, 1, 0], sizes = [4, 1, 16], strides = [1, 1, 1]} : vector<4x16x16xf32> to vector<4x1x16xf32>
    %c0_49 = arith.constant 0 : index
    %c0_50 = arith.constant 0 : index
    %c1_51 = arith.constant 1 : index
    %72 = vector.load %arg9[%c0_49, %c0_50, %c1_51] : memref<4x18x18xf32, #tpu.memory_space<vmem>>, vector<4x1x16xf32>
    tpu.vector_store %arg9[%c0_49, %c0_50, %c1_51], %71 {strides = array<i32>} : memref<4x18x18xf32, #tpu.memory_space<vmem>>, vector<4x1x16xf32>,
    %73 = vector.extract_strided_slice %69 {offsets = [0, 14, 0], sizes = [4, 1, 16], strides = [1, 1, 1]} : vector<4x16x16xf32> to vector<4x1x16xf32>
    %c0_52 = arith.constant 0 : index
    %c17_53 = arith.constant 17 : index
    %c1_54 = arith.constant 1 : index
    %74 = vector.load %arg9[%c0_52, %c17_53, %c1_54] : memref<4x18x18xf32, #tpu.memory_space<vmem>>, vector<4x1x16xf32>
    tpu.vector_store %arg9[%c0_52, %c17_53, %c1_54], %73 {strides = array<i32>} : memref<4x18x18xf32, #tpu.memory_space<vmem>>, vector<4x1x16xf32>,
    %c0_55 = arith.constant 0 : index
    %c0_56 = arith.constant 0 : index
    %c2_57 = arith.constant 2 : index
    %75 = vector.load %arg9[%c0_55, %c0_56, %c2_57] : memref<4x18x18xf32, #tpu.memory_space<vmem>>, vector<4x18x1xf32>
    %c0_58 = arith.constant 0 : index
    %c0_59 = arith.constant 0 : index
    %c0_60 = arith.constant 0 : index
    %76 = vector.load %arg9[%c0_58, %c0_59, %c0_60] : memref<4x18x18xf32, #tpu.memory_space<vmem>>, vector<4x18x1xf32>
    tpu.vector_store %arg9[%c0_58, %c0_59, %c0_60], %75 {strides = array<i32>} : memref<4x18x18xf32, #tpu.memory_space<vmem>>, vector<4x18x1xf32>,
    %c0_61 = arith.constant 0 : index
    %c0_62 = arith.constant 0 : index
    %c15_63 = arith.constant 15 : index
    %77 = vector.load %arg9[%c0_61, %c0_62, %c15_63] : memref<4x18x18xf32, #tpu.memory_space<vmem>>, vector<4x18x1xf32>
    %c0_64 = arith.constant 0 : index
    %c0_65 = arith.constant 0 : index
    %c17_66 = arith.constant 17 : index
    %78 = vector.load %arg9[%c0_64, %c0_65, %c17_66] : memref<4x18x18xf32, #tpu.memory_space<vmem>>, vector<4x18x1xf32>
    tpu.vector_store %arg9[%c0_64, %c0_65, %c17_66], %77 {strides = array<i32>} : memref<4x18x18xf32, #tpu.memory_space<vmem>>, vector<4x18x1xf32>,
    %c0_67 = arith.constant 0 : index
    %c0_68 = arith.constant 0 : index
    %c0_69 = arith.constant 0 : index
    %79 = vector.load %arg9[%c0_67, %c0_68, %c0_69] : memref<4x18x18xf32, #tpu.memory_space<vmem>>, vector<4x18x18xf32>
    %80 = vector.extract_strided_slice %79 {offsets = [0, 0, 0], sizes = [4, 16, 16], strides = [1, 1, 1]} : vector<4x18x18xf32> to vector<4x16x16xf32>
    %81 = vector.shape_cast %80 : vector<4x16x16xf32> to vector<4x256xf32>
    %c0_70 = arith.constant 0 : index
    %c0_71 = arith.constant 0 : index
    %82 = vector.load %arg10[%c0_70, %c0_71] : memref<36x256xf32, #tpu.memory_space<vmem>>, vector<4x256xf32>
    tpu.vector_store %arg10[%c0_70, %c0_71], %81 {strides = array<i32>} : memref<36x256xf32, #tpu.memory_space<vmem>>, vector<4x256xf32>,
    %83 = vector.extract_strided_slice %79 {offsets = [0, 0, 1], sizes = [4, 16, 16], strides = [1, 1, 1]} : vector<4x18x18xf32> to vector<4x16x16xf32>
    %84 = vector.shape_cast %83 : vector<4x16x16xf32> to vector<4x256xf32>
    %c4_72 = arith.constant 4 : index
    %c0_73 = arith.constant 0 : index
    %85 = vector.load %arg10[%c4_72, %c0_73] : memref<36x256xf32, #tpu.memory_space<vmem>>, vector<4x256xf32>
    tpu.vector_store %arg10[%c4_72, %c0_73], %84 {strides = array<i32>} : memref<36x256xf32, #tpu.memory_space<vmem>>, vector<4x256xf32>,
    %86 = vector.extract_strided_slice %79 {offsets = [0, 0, 2], sizes = [4, 16, 16], strides = [1, 1, 1]} : vector<4x18x18xf32> to vector<4x16x16xf32>
    %87 = vector.shape_cast %86 : vector<4x16x16xf32> to vector<4x256xf32>
    %c8_74 = arith.constant 8 : index
    %c0_75 = arith.constant 0 : index
    %88 = vector.load %arg10[%c8_74, %c0_75] : memref<36x256xf32, #tpu.memory_space<vmem>>, vector<4x256xf32>
    tpu.vector_store %arg10[%c8_74, %c0_75], %87 {strides = array<i32>} : memref<36x256xf32, #tpu.memory_space<vmem>>, vector<4x256xf32>,
    %89 = vector.extract_strided_slice %79 {offsets = [0, 1, 0], sizes = [4, 16, 16], strides = [1, 1, 1]} : vector<4x18x18xf32> to vector<4x16x16xf32>
    %90 = vector.shape_cast %89 : vector<4x16x16xf32> to vector<4x256xf32>
    %c12_76 = arith.constant 12 : index
    %c0_77 = arith.constant 0 : index
    %91 = vector.load %arg10[%c12_76, %c0_77] : memref<36x256xf32, #tpu.memory_space<vmem>>, vector<4x256xf32>
    tpu.vector_store %arg10[%c12_76, %c0_77], %90 {strides = array<i32>} : memref<36x256xf32, #tpu.memory_space<vmem>>, vector<4x256xf32>,
    %92 = vector.extract_strided_slice %79 {offsets = [0, 1, 1], sizes = [4, 16, 16], strides = [1, 1, 1]} : vector<4x18x18xf32> to vector<4x16x16xf32>
    %93 = vector.shape_cast %92 : vector<4x16x16xf32> to vector<4x256xf32>
    %c16_78 = arith.constant 16 : index
    %c0_79 = arith.constant 0 : index
    %94 = vector.load %arg10[%c16_78, %c0_79] : memref<36x256xf32, #tpu.memory_space<vmem>>, vector<4x256xf32>
    tpu.vector_store %arg10[%c16_78, %c0_79], %93 {strides = array<i32>} : memref<36x256xf32, #tpu.memory_space<vmem>>, vector<4x256xf32>,
    %95 = vector.extract_strided_slice %79 {offsets = [0, 1, 2], sizes = [4, 16, 16], strides = [1, 1, 1]} : vector<4x18x18xf32> to vector<4x16x16xf32>
    %96 = vector.shape_cast %95 : vector<4x16x16xf32> to vector<4x256xf32>
    %c20_80 = arith.constant 20 : index
    %c0_81 = arith.constant 0 : index
    %97 = vector.load %arg10[%c20_80, %c0_81] : memref<36x256xf32, #tpu.memory_space<vmem>>, vector<4x256xf32>
    tpu.vector_store %arg10[%c20_80, %c0_81], %96 {strides = array<i32>} : memref<36x256xf32, #tpu.memory_space<vmem>>, vector<4x256xf32>,
    %98 = vector.extract_strided_slice %79 {offsets = [0, 2, 0], sizes = [4, 16, 16], strides = [1, 1, 1]} : vector<4x18x18xf32> to vector<4x16x16xf32>
    %99 = vector.shape_cast %98 : vector<4x16x16xf32> to vector<4x256xf32>
    %c24_82 = arith.constant 24 : index
    %c0_83 = arith.constant 0 : index
    %100 = vector.load %arg10[%c24_82, %c0_83] : memref<36x256xf32, #tpu.memory_space<vmem>>, vector<4x256xf32>
    tpu.vector_store %arg10[%c24_82, %c0_83], %99 {strides = array<i32>} : memref<36x256xf32, #tpu.memory_space<vmem>>, vector<4x256xf32>,
    %101 = vector.extract_strided_slice %79 {offsets = [0, 2, 1], sizes = [4, 16, 16], strides = [1, 1, 1]} : vector<4x18x18xf32> to vector<4x16x16xf32>
    %102 = vector.shape_cast %101 : vector<4x16x16xf32> to vector<4x256xf32>
    %c28_84 = arith.constant 28 : index
    %c0_85 = arith.constant 0 : index
    %103 = vector.load %arg10[%c28_84, %c0_85] : memref<36x256xf32, #tpu.memory_space<vmem>>, vector<4x256xf32>
    tpu.vector_store %arg10[%c28_84, %c0_85], %102 {strides = array<i32>} : memref<36x256xf32, #tpu.memory_space<vmem>>, vector<4x256xf32>,
    %104 = vector.extract_strided_slice %79 {offsets = [0, 2, 2], sizes = [4, 16, 16], strides = [1, 1, 1]} : vector<4x18x18xf32> to vector<4x16x16xf32>
    %105 = vector.shape_cast %104 : vector<4x16x16xf32> to vector<4x256xf32>
    %c32_86 = arith.constant 32 : index
    %c0_87 = arith.constant 0 : index
    %106 = vector.load %arg10[%c32_86, %c0_87] : memref<36x256xf32, #tpu.memory_space<vmem>>, vector<4x256xf32>
    tpu.vector_store %arg10[%c32_86, %c0_87], %105 {strides = array<i32>} : memref<36x256xf32, #tpu.memory_space<vmem>>, vector<4x256xf32>,
    %c0_88 = arith.constant 0 : index
    %c0_89 = arith.constant 0 : index
    %107 = vector.load %arg5[%c0_88, %c0_89] : memref<4x36xbf16, #tpu.memory_space<vmem>>, vector<4x36xbf16>
    %c0_90 = arith.constant 0 : index
    %c0_91 = arith.constant 0 : index
    %108 = vector.load %arg10[%c0_90, %c0_91] : memref<36x256xf32, #tpu.memory_space<vmem>>, vector<36x256xf32>
    %109 = arith.truncf %108 : vector<36x256xf32> to vector<36x256xbf16>
    %cst_92 = arith.constant dense<0.000000e+00> : vector<4x256xf32>
    %110 = tpu.matmul %107, %109, %cst_92 {dimension_numbers = #tpu.dot_dimension_numbers<[1], [0], [0], [1], [0, 0, 1, 1], [], []>} : vector<4x36xbf16>, vector<36x256xbf16>, vector<4x256xf32> -> vector<4x256xf32>
    %c0_93 = arith.constant 0 : index
    %c0_94 = arith.constant 0 : index
    %111 = vector.load %arg6[%c0_93, %c0_94] : memref<4x1xf32, #tpu.memory_space<vmem>>, vector<4x1xf32>
    %c0_95 = arith.constant 0 : index
    %c0_96 = arith.constant 0 : index
    %112 = vector.load %arg7[%c0_95, %c0_96] : memref<4x1xf32, #tpu.memory_space<vmem>>, vector<4x1xf32>
    %cst_97 = arith.constant dense<0.000000e+00> : vector<4xf32>
    %113 = vector.multi_reduction <add>, %110, %cst_97 [1] : vector<4x256xf32> to vector<4xf32>
    %114 = vector.shape_cast %113 : vector<4xf32> to vector<4x1xf32>
    %cst_98 = arith.constant 3.906250e-03 : f32
    %115 = vector.broadcast %cst_98 : f32 to vector<4x1xf32>
    %116 = arith.mulf %114, %115 : vector<4x1xf32>
    %117 = arith.mulf %110, %110 : vector<4x256xf32>
    %cst_99 = arith.constant dense<0.000000e+00> : vector<4xf32>
    %118 = vector.multi_reduction <add>, %117, %cst_99 [1] : vector<4x256xf32> to vector<4xf32>
    %119 = vector.shape_cast %118 : vector<4xf32> to vector<4x1xf32>
    %cst_100 = arith.constant 3.906250e-03 : f32
    %120 = vector.broadcast %cst_100 : f32 to vector<4x1xf32>
    %121 = arith.mulf %119, %120 : vector<4x1xf32>
    %122 = arith.mulf %116, %116 : vector<4x1xf32>
    %123 = arith.subf %121, %122 : vector<4x1xf32>
    %cst_101 = arith.constant 9.99999974E-6 : f32
    %124 = vector.broadcast %cst_101 : f32 to vector<4x1xf32>
    %125 = arith.addf %123, %124 : vector<4x1xf32>
    %126 = math.rsqrt %125 : vector<4x1xf32>
    %127 = arith.mulf %111, %126 : vector<4x1xf32>
    %128 = vector.broadcast %127 : vector<4x1xf32> to vector<4x256xf32>
    %129 = arith.mulf %110, %128 : vector<4x256xf32>
    %130 = arith.mulf %116, %127 : vector<4x1xf32>
    %131 = arith.subf %112, %130 : vector<4x1xf32>
    %132 = vector.broadcast %131 : vector<4x1xf32> to vector<4x256xf32>
    %133 = arith.addf %129, %132 : vector<4x256xf32>
    %134 = arith.addf %1, %133 : vector<4x256xf32>
    %c0_102 = arith.constant 0 : index
    %c0_103 = arith.constant 0 : index
    %c0_104 = arith.constant 0 : index
    %135 = vector.load %arg8[%c0_102, %c0_103, %c0_104] : memref<1x4x256xf32, #tpu.memory_space<vmem>>, vector<1x4x256xf32>
    %136 = vector.shape_cast %135 : vector<1x4x256xf32> to vector<4x256xf32>
    %137 = vector.shape_cast %134 : vector<4x256xf32> to vector<1x4x256xf32>
    tpu.vector_store %arg8[%c0_102, %c0_103, %c0_104], %137 {strides = array<i32>} : memref<1x4x256xf32, #tpu.memory_space<vmem>>, vector<1x4x256xf32>,
    return
  }
  func.func @transform_0(%arg0: i32) -> (i32, i32, i32) {
    %c0_i32 = arith.constant 0 : i32
    %c0_i32_0 = arith.constant 0 : i32
    %c0_i32_1 = arith.constant 0 : i32
    return %arg0, %c0_i32, %c0_i32_0 : i32, i32, i32
  }
  func.func @transform_1(%arg0: i32) -> (i32, i32) {
    %c0_i32 = arith.constant 0 : i32
    %c0_i32_0 = arith.constant 0 : i32
    %c0_i32_1 = arith.constant 0 : i32
    return %c0_i32, %c0_i32_0 : i32, i32
  }
  func.func @transform_2(%arg0: i32) -> (i32, i32) {
    %c0_i32 = arith.constant 0 : i32
    %c0_i32_0 = arith.constant 0 : i32
    %c0_i32_1 = arith.constant 0 : i32
    return %c0_i32, %c0_i32_0 : i32, i32
  }
  func.func @transform_3(%arg0: i32) -> (i32, i32) {
    %c0_i32 = arith.constant 0 : i32
    %c0_i32_0 = arith.constant 0 : i32
    %c0_i32_1 = arith.constant 0 : i32
    return %c0_i32, %c0_i32_0 : i32, i32
  }
  func.func @transform_4(%arg0: i32) -> (i32, i32) {
    %c0_i32 = arith.constant 0 : i32
    %c0_i32_0 = arith.constant 0 : i32
    %c0_i32_1 = arith.constant 0 : i32
    return %c0_i32, %c0_i32_0 : i32, i32
  }
  func.func @transform_5(%arg0: i32) -> (i32, i32) {
    %c0_i32 = arith.constant 0 : i32
    %c0_i32_0 = arith.constant 0 : i32
    %c0_i32_1 = arith.constant 0 : i32
    return %c0_i32, %c0_i32_0 : i32, i32
  }
  func.func @transform_6(%arg0: i32) -> (i32, i32) {
    %c0_i32 = arith.constant 0 : i32
    %c0_i32_0 = arith.constant 0 : i32
    %c0_i32_1 = arith.constant 0 : i32
    return %c0_i32, %c0_i32_0 : i32, i32
  }
  func.func @transform_7(%arg0: i32) -> (i32, i32, i32) {
    %c0_i32 = arith.constant 0 : i32
    %c0_i32_0 = arith.constant 0 : i32
    %c0_i32_1 = arith.constant 0 : i32
    return %arg0, %c0_i32, %c0_i32_0 : i32, i32, i32
  }
}

</mosaic_0001>

<llo_original>
// kernel: residual_block.1
$region0: #{residual_block.1}
  #allocation0 [shape = 'u32[]', space=smem, size = 0x4, offset = 0x4, fixed_abs, tag = 'smem constant byte address 0x4 - core index']
  #allocation1 [shape = 'u32[144,128]{1,0:T(1,128)}', space=vmem, size = 0x12000, scoped, tag = 'internal scratch']
  #allocation2 [shape = 'f32[4,18,18]{2,1,0:T(8,128)}', space=vmem, size = 0xc000, scoped, tag = 'scratch operand']
  #allocation3 [shape = 'f32[36,256]{1,0:T(8,128)}', space=vmem, size = 0xa000, scoped, tag = 'scratch operand']
  %s0 = inlined_call_operand.vmem [shape: f32[2,4,256], index: 0, kind: input, shape index: {}]
  %s1 = inlined_call_operand.vmem [shape: bf16[4,36], index: 1, kind: input, shape index: {}]
  %s2 = inlined_call_operand.vmem [shape: f32[4,1], index: 2, kind: input, shape index: {}]
  %s3 = inlined_call_operand.vmem [shape: f32[4,1], index: 3, kind: input, shape index: {}]
  %s4 = inlined_call_operand.vmem [shape: bf16[4,36], index: 4, kind: input, shape index: {}]
  %s5 = inlined_call_operand.vmem [shape: f32[4,1], index: 5, kind: input, shape index: {}]
  %s6 = inlined_call_operand.vmem [shape: f32[4,1], index: 6, kind: input, shape index: {}]
  %s7 = inlined_call_operand.vmem [shape: f32[2,4,256], index: 7, kind: output, shape index: {}]
  %s8 = sld [smem:[#allocation0]]
  $region61: #{residual_block.1} parent=0
    _
  %s10 = ssub.s32 1, %s8
  %s11 = scalar_select 0, %s10, %s8
  loop: start=0, step=1, limit=4
  $region2: #{residual_block.1} parent=0 // loop_pre_header
    _
  $region3: #{residual_block.1} parent=0 // loop_header
    %s13 = sphi 0, %s17
    %p14 = scmp.ge.s32.totalorder %s13, 4
    %s23 = sphi 0, %s25
    %s26 = sphi 0, %s23
    %s27 = sphi 0, %s26
    %s43 = sphi 0, %s27
    %s47 = sphi 0, %s47
    %s49 = sphi 0, %s47
    %s50 = sphi 0, %s49
    %s64 = sphi 0, %s50
    %s68 = sphi 0, %s68
    %s70 = sphi 0, %s68
    %s71 = sphi 0, %s70
    %s85 = sphi 0, %s71
    %s89 = sphi 0, %s89
    %s91 = sphi 0, %s89
    %s92 = sphi 0, %s91
    %s106 = sphi 0, %s92
    %s110 = sphi 0, %s110
    %s112 = sphi 0, %s110
    %s113 = sphi 0, %s112
    %s127 = sphi 0, %s113
    %s131 = sphi 0, %s131
    %s133 = sphi 0, %s131
    %s134 = sphi 0, %s133
    %s148 = sphi 0, %s134
    %s152 = sphi 0, %s152
    %s154 = sphi 0, %s152
    %s155 = sphi 0, %s154
    %s169 = sphi 0, %s155
    %s175 = sphi 0, %s177
    %s178 = sphi 0, %s175
    %s179 = sphi 0, %s178
    %s195 = sphi 0, %s179
  $region4: #{residual_block.1} parent=0 // loop_header_branch
    %16 = sbr.rel (%p14) target = $region8
  $region5: #{residual_block.1} parent=0 // loop_body
    %s18 = ssub.s32 %s13, 1
    %s19 = ssub.s32 %s13, 2
    %s20 = sadd.s32 %s13, 1
    %s21 = ssub.s32 %s13, %s20
    %p22 = scmp.eq.s32.totalorder %s21, 0
    %s24 = sadd.s32 %s23, 1
    %s25 = scalar_select %p22, %s23, %s24
    %p28 = pneg %p22
    %p29 = scmp.eq.s32.totalorder %s13, 1
    %p30 = por %p28, %p29
    %p31 = scmp.ne.s32.totalorder %s23, %s26
    %p32 = scmp.eq.s32.totalorder %s13, 0
    %p33 = por %p31, %p32
    %p34 = scmp.ne.s32.totalorder %s23, %s26
    %p35 = scmp.eq.s32.totalorder %s18, 1
    %p36 = por %p34, %p35
    %p37 = scmp.ne.s32.totalorder %s26, %s27
    %p38 = scmp.eq.s32.totalorder %s18, 0
    %p39 = por %p37, %p38
    %p40 = scmp.ne.s32.totalorder %s26, %s27
    %p41 = scmp.eq.s32.totalorder %s19, 1
    %p42 = por %p40, %p41
    %p44 = scmp.ne.s32.totalorder %s27, %s43
    %p45 = scmp.eq.s32.totalorder %s19, 0
    %p46 = por %p44, %p45
    %s48 = sadd.s32 %s47, 1
    %p51 = scmp.eq.s32.totalorder %s13, 1
    %p52 = scmp.ne.s32.totalorder %s47, %s49
    %p53 = scmp.eq.s32.totalorder %s13, 0
    %p54 = por %p52, %p53
    %p55 = scmp.ne.s32.totalorder %s47, %s49
    %p56 = scmp.eq.s32.totalorder %s18, 1
    %p57 = por %p55, %p56
    %p58 = scmp.ne.s32.totalorder %s49, %s50
    %p59 = scmp.eq.s32.totalorder %s18, 0
    %p60 = por %p58, %p59
    %p61 = scmp.ne.s32.totalorder %s49, %s50
    %p62 = scmp.eq.s32.totalorder %s19, 1
    %p63 = por %p61, %p62
    %p65 = scmp.ne.s32.totalorder %s50, %s64
    %p66 = scmp.eq.s32.totalorder %s19, 0
    %p67 = por %p65, %p66
    %s69 = sadd.s32 %s68, 1
    %p72 = scmp.eq.s32.totalorder %s13, 1
    %p73 = scmp.ne.s32.totalorder %s68, %s70
    %p74 = scmp.eq.s32.totalorder %s13, 0
    %p75 = por %p73, %p74
    %p76 = scmp.ne.s32.totalorder %s68, %s70
    %p77 = scmp.eq.s32.totalorder %s18, 1
    %p78 = por %p76, %p77
    %p79 = scmp.ne.s32.totalorder %s70, %s71
    %p80 = scmp.eq.s32.totalorder %s18, 0
    %p81 = por %p79, %p80
    %p82 = scmp.ne.s32.totalorder %s70, %s71
    %p83 = scmp.eq.s32.totalorder %s19, 1
    %p84 = por %p82, %p83
    %p86 = scmp.ne.s32.totalorder %s71, %s85
    %p87 = scmp.eq.s32.totalorder %s19, 0
    %p88 = por %p86, %p87
    %s90 = sadd.s32 %s89, 1
    %p93 = scmp.eq.s32.totalorder %s13, 1
    %p94 = scmp.ne.s32.totalorder %s89, %s91
    %p95 = scmp.eq.s32.totalorder %s13, 0
    %p96 = por %p94, %p95
    %p97 = scmp.ne.s32.totalorder %s89, %s91
    %p98 = scmp.eq.s32.totalorder %s18, 1
    %p99 = por %p97, %p98
    %p100 = scmp.ne.s32.totalorder %s91, %s92
    %p101 = scmp.eq.s32.totalorder %s18, 0
    %p102 = por %p100, %p101
    %p103 = scmp.ne.s32.totalorder %s91, %s92
    %p104 = scmp.eq.s32.totalorder %s19, 1
    %p105 = por %p103, %p104
    %p107 = scmp.ne.s32.totalorder %s92, %s106
    %p108 = scmp.eq.s32.totalorder %s19, 0
    %p109 = por %p107, %p108
    %s111 = sadd.s32 %s110, 1
    %p114 = scmp.eq.s32.totalorder %s13, 1
    %p115 = scmp.ne.s32.totalorder %s110, %s112
    %p116 = scmp.eq.s32.totalorder %s13, 0
    %p117 = por %p115, %p116
    %p118 = scmp.ne.s32.totalorder %s110, %s112
    %p119 = scmp.eq.s32.totalorder %s18, 1
    %p120 = por %p118, %p119
    %p121 = scmp.ne.s32.totalorder %s112, %s113
    %p122 = scmp.eq.s32.totalorder %s18, 0
    %p123 = por %p121, %p122
    %p124 = scmp.ne.s32.totalorder %s112, %s113
    %p125 = scmp.eq.s32.totalorder %s19, 1
    %p126 = por %p124, %p125
    %p128 = scmp.ne.s32.totalorder %s113, %s127
    %p129 = scmp.eq.s32.totalorder %s19, 0
    %p130 = por %p128, %p129
    %s132 = sadd.s32 %s131, 1
    %p135 = scmp.eq.s32.totalorder %s13, 1
    %p136 = scmp.ne.s32.totalorder %s131, %s133
    %p137 = scmp.eq.s32.totalorder %s13, 0
    %p138 = por %p136, %p137
    %p139 = scmp.ne.s32.totalorder %s131, %s133
    %p140 = scmp.eq.s32.totalorder %s18, 1
    %p141 = por %p139, %p140
    %p142 = scmp.ne.s32.totalorder %s133, %s134
    %p143 = scmp.eq.s32.totalorder %s18, 0
    %p144 = por %p142, %p143
    %p145 = scmp.ne.s32.totalorder %s133, %s134
    %p146 = scmp.eq.s32.totalorder %s19, 1
    %p147 = por %p145, %p146
    %p149 = scmp.ne.s32.totalorder %s134, %s148
    %p150 = scmp.eq.s32.totalorder %s19, 0
    %p151 = por %p149, %p150
    %s153 = sadd.s32 %s152, 1
    %p156 = scmp.eq.s32.totalorder %s13, 1
    %p157 = scmp.ne.s32.totalorder %s152, %s154
    %p158 = scmp.eq.s32.totalorder %s13, 0
    %p159 = por %p157, %p158
    %p160 = scmp.ne.s32.totalorder %s152, %s154
    %p161 = scmp.eq.s32.totalorder %s18, 1
    %p162 = por %p160, %p161
    %p163 = scmp.ne.s32.totalorder %s154, %s155
    %p164 = scmp.eq.s32.totalorder %s18, 0
    %p165 = por %p163, %p164
    %p166 = scmp.ne.s32.totalorder %s154, %s155
    %p167 = scmp.eq.s32.totalorder %s19, 1
    %p168 = por %p166, %p167
    %p170 = scmp.ne.s32.totalorder %s155, %s169
    %p171 = scmp.eq.s32.totalorder %s19, 0
    %p172 = por %p170, %p171
    %s173 = ssub.s32 %s13, %s20
    %p174 = scmp.eq.s32.totalorder %s173, 0
    %s176 = sadd.s32 %s175, 1
    %s177 = scalar_select %p174, %s175, %s176
    %p180 = pneg %p174
    %p181 = scmp.eq.s32.totalorder %s13, 1
    %p182 = por %p180, %p181
    %p183 = scmp.ne.s32.totalorder %s175, %s178
    %p184 = scmp.eq.s32.totalorder %s13, 0
    %p185 = por %p183, %p184
    %p186 = scmp.ne.s32.totalorder %s175, %s178
    %p187 = scmp.eq.s32.totalorder %s18, 1
    %p188 = por %p186, %p187
    %p189 = scmp.ne.s32.totalorder %s178, %s179
    %p190 = scmp.eq.s32.totalorder %s18, 0
    %p191 = por %p189, %p190
    %p192 = scmp.ne.s32.totalorder %s178, %s179
    %p193 = scmp.eq.s32.totalorder %s19, 1
    %p194 = por %p192, %p193
    %p196 = scmp.ne.s32.totalorder %s179, %s195
    %p197 = scmp.eq.s32.totalorder %s19, 0
    %p198 = por %p196, %p197
    %p199 = scmp.le.s32.totalorder 1, %s13
    %p200 = scmp.lt.s32.totalorder %s13, 3
    %p201 = pnand %p199, %p200
    %p202 = pneg %p201
    // Predicated region
    $region9: #{residual_block.1} parent=5 // pred_check
      _
    $region10: #{residual_block.1} parent=5 // pred_check_branch
      %204 = sbr.rel (%p201) target = $region12
    $region11: #{residual_block.1} parent=5 // pred_region
      %s205 = ssub.s32 %s13, 1
      // Predicated region
      $region13: #{residual_block.1} parent=11 // pred_check
        %p206 = pneg %p60
      $region14: #{residual_block.1} parent=11 // pred_check_branch
        %208 = sbr.rel (%p206) target = $region16
      $region15: #{residual_block.1} parent=11 // pred_region
        _
      $region16: #{residual_block.1} parent=11 // pred_fallthru
        _
      // Predicated region
      $region17: #{residual_block.1} parent=11 // pred_check
        %p209 = pneg %p81
      $region18: #{residual_block.1} parent=11 // pred_check_branch
        %211 = sbr.rel (%p209) target = $region20
      $region19: #{residual_block.1} parent=11 // pred_region
        _
      $region20: #{residual_block.1} parent=11 // pred_fallthru
        _
      // Predicated region
      $region21: #{residual_block.1} parent=11 // pred_check
        %p212 = pneg %p102
      $region22: #{residual_block.1} parent=11 // pred_check_branch
        %214 = sbr.rel (%p212) target = $region24
      $region23: #{residual_block.1} parent=11 // pred_region
        _
      $region24: #{residual_block.1} parent=11 // pred_fallthru
        _
      // Predicated region
      $region25: #{residual_block.1} parent=11 // pred_check
        %p215 = pneg %p123
      $region26: #{residual_block.1} parent=11 // pred_check_branch
        %217 = sbr.rel (%p215) target = $region28
      $region27: #{residual_block.1} parent=11 // pred_region
        _
      $region28: #{residual_block.1} parent=11 // pred_fallthru
        _
      // Predicated region
      $region29: #{residual_block.1} parent=11 // pred_check
        %p218 = pneg %p144
      $region30: #{residual_block.1} parent=11 // pred_check_branch
        %220 = sbr.rel (%p218) target = $region32
      $region31: #{residual_block.1} parent=11 // pred_region
        _
      $region32: #{residual_block.1} parent=11 // pred_fallthru
        _
      // Predicated region
      $region33: #{residual_block.1} parent=11 // pred_check
        %p221 = pneg %p165
      $region34: #{residual_block.1} parent=11 // pred_check_branch
        %223 = sbr.rel (%p221) target = $region36
      $region35: #{residual_block.1} parent=11 // pred_region
        _
      $region36: #{residual_block.1} parent=11 // pred_fallthru
        _
    $region12: #{residual_block.1} parent=5 // pred_fallthru
      _
    %p224 = scmp.lt.s32.totalorder %s13, 2
    // Predicated region
    $region37: #{residual_block.1} parent=5 // pred_check
      %p225 = pneg %p224
    $region38: #{residual_block.1} parent=5 // pred_check_branch
      %227 = sbr.rel (%p225) target = $region40
    $region39: #{residual_block.1} parent=5 // pred_region
      // Predicated region
      $region41: #{residual_block.1} parent=39 // pred_check
        %p228 = pneg %p33
      $region42: #{residual_block.1} parent=39 // pred_check_branch
        %230 = sbr.rel (%p228) target = $region44
      $region43: #{residual_block.1} parent=39 // pred_region
        %p231 = scmp.lt.s32.totalorder %s13, 1
        %s232 = scalar_select %p231, %s13, 1
        %s233 = smul.addr %s232, 2
        %s234 = smul.addr %s233, 4
        %s235 = scalar_lea.vmem %s0, %s234
      $region44: #{residual_block.1} parent=39 // pred_fallthru
        _
    $region40: #{residual_block.1} parent=5 // pred_fallthru
      _
    %p236 = scmp.le.s32.totalorder 1, %s13
    %p237 = scmp.lt.s32.totalorder %s13, 3
    %p238 = pnand %p236, %p237
    %p239 = pneg %p238
    // Predicated region
    $region45: #{residual_block.1} parent=5 // pred_check
      _
    $region46: #{residual_block.1} parent=5 // pred_check_branch
      %241 = sbr.rel (%p238) target = $region48
    $region47: #{residual_block.1} parent=5 // pred_region
      %s242 = ssub.s32 %s13, 1
      %p243 = scmp.lt.s32.totalorder %s18, 1
      %s244 = scalar_select %p243, %s18, 1
      %s245 = smul.addr %s244, 2
      %s246 = smul.addr %s245, 4
      %s247 = scalar_lea.vmem %s0, %s246
      %p248 = pneg %p39
      %p249 = pneg %p36
      %p250 = pneg %p60
      %p251 = pneg %p57
      %p252 = pneg %p81
      %p253 = pneg %p78
      %p254 = pneg %p102
      %p255 = pneg %p99
      %p256 = pneg %p123
      %p257 = pneg %p120
      %p258 = pneg %p144
      %p259 = pneg %p141
      %p260 = pneg %p165
      %p261 = pneg %p162
      %p262 = pneg %p191
      %p263 = pneg %p188
      %p264 = scmp.lt.s32.totalorder %s18, 1
      %s265 = scalar_select %p264, %s18, 1
      %s266 = smul.addr %s265, 2
      %s267 = smul.addr %s266, 4
      %s268 = scalar_lea.vmem %s7, %s267
      %p269 = scmp.lt.s32.totalorder %s18, 1
      %s270 = scalar_select %p269, %s18, 1
      %s271 = smul.addr %s270, 2
      %s272 = smul.addr %s271, 4
      %s273 = scalar_lea.vmem %s0, %s272
      %p274 = scmp.lt.s32.totalorder %s18, 1
      %s275 = scalar_select %p274, %s18, 1
      %s276 = smul.addr %s275, 2
      %s277 = smul.addr %s276, 4
      %s278 = scalar_lea.vmem %s7, %s277
      %v280 = vld [vmem:[%s273] sm:$0xff]
      %v282 = vrot.slane %v280, 4
      %284 = vrot.lane.b32.xlu0 %v280, 112
      %v285 = vpop.permute.xlu0 %284
      %v286 = vrot.slane %v285, 4
      %288 = vrot.lane.b32.xlu0 %v280, 96
      %v289 = vpop.permute.xlu0 %288
      %v290 = vrot.slane %v289, 4
      %292 = vrot.lane.b32.xlu0 %v280, 80
      %v293 = vpop.permute.xlu0 %292
      %v294 = vrot.slane %v293, 4
      %296 = vrot.lane.b32.xlu0 %v280, 64
      %v297 = vpop.permute.xlu0 %296
      %v298 = vrot.slane %v297, 4
      %300 = vrot.lane.b32.xlu0 %v280, 48
      %v301 = vpop.permute.xlu0 %300
      %v302 = vrot.slane %v301, 4
      %304 = vrot.lane.b32.xlu0 %v280, 32
      %v305 = vpop.permute.xlu0 %304
      %v306 = vrot.slane %v305, 4
      %308 = vrot.lane.b32.xlu0 %v280, 16
      %v309 = vpop.permute.xlu0 %308
      %v310 = vrot.slane %v309, 4
      %v319 = vcombine.low %v280, %v289
      %v321 = vunpack.c.l.s4 1983009808
      %v322 = vunpack.c.0.s8 %v321
      %v323 = vlaneseq
      %v324 = vshrl.u32 %v323, 7
      %v325 = vsub.s32 %v322, %v324
      %v326 = vrot.slane %v319, %v325
      %v327 = vcombine.low %v285, %v293
      %v329 = vunpack.c.l.s4 1983009808
      %v330 = vunpack.c.0.s8 %v329
      %v331 = vlaneseq
      %v332 = vshrl.u32 %v331, 7
      %v333 = vsub.s32 %v330, %v332
      %v334 = vrot.slane %v327, %v333
      %v335 = vcombine.low %v326, %v334
      %v336 = vcombine.high %v326, %v334
      %v338 = vunpack.c.l.s4 1934713408
      %v339 = vunpack.c.0.s8 %v338
      %v340 = vlaneseq
      %v341 = vshrl.u32 %v340, 7
      %v342 = vsub.s32 %v339, %v341
      %v343 = vrot.slane %v335, %v342
      %v345 = vunpack.c.l.s4 1934713408
      %v346 = vunpack.c.0.s8 %v345
      %v347 = vlaneseq
      %v348 = vshrl.u32 %v347, 7
      %v349 = vsub.s32 %v346, %v348
      %v350 = vrot.slane %v336, %v349
      %v351 = vcombine.high %v343, 0.0
      %v352 = vcombine.high %v350, 0.0
      %v353 = vcombine.low %v297, %v305
      %v355 = vunpack.c.l.s4 1983009808
      %v356 = vunpack.c.0.s8 %v355
      %v357 = vlaneseq
      %v358 = vshrl.u32 %v357, 7
      %v359 = vsub.s32 %v356, %v358
      %v360 = vrot.slane %v353, %v359
      %v361 = vcombine.low %v301, %v309
      %v363 = vunpack.c.l.s4 1983009808
      %v364 = vunpack.c.0.s8 %v363
      %v365 = vlaneseq
      %v366 = vshrl.u32 %v365, 7
      %v367 = vsub.s32 %v364, %v366
      %v368 = vrot.slane %v361, %v367
      %v369 = vcombine.low %v360, %v368
      %v370 = vcombine.high %v360, %v368
      %v372 = vunpack.c.l.s4 1934713408
      %v373 = vunpack.c.0.s8 %v372
      %v374 = vlaneseq
      %v375 = vshrl.u32 %v374, 7
      %v376 = vsub.s32 %v373, %v375
      %v377 = vrot.slane %v369, %v376
      %v379 = vunpack.c.l.s4 1934713408
      %v380 = vunpack.c.0.s8 %v379
      %v381 = vlaneseq
      %v382 = vshrl.u32 %v381, 7
      %v383 = vsub.s32 %v380, %v382
      %v384 = vrot.slane %v370, %v383
      %v385 = vcombine.high %v377, 0.0
      %v386 = vcombine.high %v384, 0.0
      %v387 = vcombine.low %v282, %v290
      %v389 = vunpack.c.l.s4 1983009808
      %v390 = vunpack.c.0.s8 %v389
      %v391 = vlaneseq
      %v392 = vshrl.u32 %v391, 7
      %v393 = vsub.s32 %v390, %v392
      %v394 = vrot.slane %v387, %v393
      %v395 = vcombine.low %v286, %v294
      %v397 = vunpack.c.l.s4 1983009808
      %v398 = vunpack.c.0.s8 %v397
      %v399 = vlaneseq
      %v400 = vshrl.u32 %v399, 7
      %v401 = vsub.s32 %v398, %v400
      %v402 = vrot.slane %v395, %v401
      %v403 = vcombine.low %v394, %v402
      %v404 = vcombine.high %v394, %v402
      %v406 = vunpack.c.l.s4 1934713408
      %v407 = vunpack.c.0.s8 %v406
      %v408 = vlaneseq
      %v409 = vshrl.u32 %v408, 7
      %v410 = vsub.s32 %v407, %v409
      %v411 = vrot.slane %v403, %v410
      %v413 = vunpack.c.l.s4 1934713408
      %v414 = vunpack.c.0.s8 %v413
      %v415 = vlaneseq
      %v416 = vshrl.u32 %v415, 7
      %v417 = vsub.s32 %v414, %v416
      %v418 = vrot.slane %v404, %v417
      %v419 = vcombine.high %v411, 0.0
      %v420 = vcombine.high %v418, 0.0
      %v421 = vcombine.low %v298, %v306
      %v423 = vunpack.c.l.s4 1983009808
      %v424 = vunpack.c.0.s8 %v423
      %v425 = vlaneseq
      %v426 = vshrl.u32 %v425, 7
      %v427 = vsub.s32 %v424, %v426
      %v428 = vrot.slane %v421, %v427
      %v429 = vcombine.low %v302, %v310
      %v431 = vunpack.c.l.s4 1983009808
      %v432 = vunpack.c.0.s8 %v431
      %v433 = vlaneseq
      %v434 = vshrl.u32 %v433, 7
      %v435 = vsub.s32 %v432, %v434
      %v436 = vrot.slane %v429, %v435
      %v437 = vcombine.low %v428, %v436
      %v438 = vcombine.high %v428, %v436
      %v440 = vunpack.c.l.s4 1934713408
      %v441 = vunpack.c.0.s8 %v440
      %v442 = vlaneseq
      %v443 = vshrl.u32 %v442, 7
      %v444 = vsub.s32 %v441, %v443
      %v445 = vrot.slane %v437, %v444
      %v447 = vunpack.c.l.s4 1934713408
      %v448 = vunpack.c.0.s8 %v447
      %v449 = vlaneseq
      %v450 = vshrl.u32 %v449, 7
      %v451 = vsub.s32 %v448, %v450
      %v452 = vrot.slane %v438, %v451
      %v453 = vcombine.high %v445, 0.0
      %v454 = vcombine.high %v452, 0.0
      %v471 = vcombine.low %v343, %v377
      %v472 = vcombine.low %v411, %v445
      %v473 = vcombine.low %v351, %v385
      %v474 = vcombine.low %v419, %v453
      %v475 = vcombine.low %v350, %v384
      %v476 = vcombine.low %v418, %v452
      %v477 = vcombine.low %v352, %v386
      %v478 = vcombine.low %v420, %v454
      %479 = vrot.lane.b32.xlu0 %v471, 1
      %v480 = vpop.permute.xlu0 %479
      %481 = vrot.lane.b32.xlu0 %v472, 1
      %v482 = vpop.permute.xlu0 %481
      %483 = vrot.lane.b32.xlu0 %v473, 1
      %v484 = vpop.permute.xlu0 %483
      %485 = vrot.lane.b32.xlu0 %v474, 1
      %v486 = vpop.permute.xlu0 %485
      %487 = vrot.lane.b32.xlu0 %v475, 1
      %v488 = vpop.permute.xlu0 %487
      %489 = vrot.lane.b32.xlu0 %v476, 1
      %v490 = vpop.permute.xlu0 %489
      %491 = vrot.lane.b32.xlu0 %v477, 1
      %v492 = vpop.permute.xlu0 %491
      %493 = vrot.lane.b32.xlu0 %v478, 1
      %v494 = vpop.permute.xlu0 %493
      %vm503 = vcmask 138248
      %504 = vst.msk [vmem:[#allocation2 + $0x1] sm:$0xff] %vm503, %v480
      %505 = vst.msk [vmem:[#allocation2 + $0x9] sm:$0xff] %vm503, %v482
      %506 = vst.msk [vmem:[#allocation2 + $0x19] sm:$0xff] %vm503, %v484
      %507 = vst.msk [vmem:[#allocation2 + $0x21] sm:$0xff] %vm503, %v486
      %508 = vst.msk [vmem:[#allocation2 + $0x31] sm:$0xff] %vm503, %v488
      %509 = vst.msk [vmem:[#allocation2 + $0x39] sm:$0xff] %vm503, %v490
      %510 = vst.msk [vmem:[#allocation2 + $0x49] sm:$0xff] %vm503, %v492
      %511 = vst.msk [vmem:[#allocation2 + $0x51] sm:$0xff] %vm503, %v494
      %v512 = vlaneseq
      %v513 = vshrl.u32 %v512, 7
      %v514 = vsub.s32 1, %v513
      %v515 = vrot.slane %v343, %v514
      %v516 = vlaneseq
      %v517 = vshrl.u32 %v516, 7
      %v518 = vsub.s32 1, %v517
      %v519 = vrot.slane %v351, %v518
      %v520 = vlaneseq
      %v521 = vshrl.u32 %v520, 7
      %v522 = vsub.s32 1, %v521
      %v523 = vrot.slane %v350, %v522
      %v524 = vlaneseq
      %v525 = vshrl.u32 %v524, 7
      %v526 = vsub.s32 1, %v525
      %v527 = vrot.slane %v352, %v526
      %528 = vrot.lane.b32.xlu0 %v515, 1
      %v529 = vpop.permute.xlu0 %528
      %530 = vrot.lane.b32.xlu0 %v519, 1
      %v531 = vpop.permute.xlu0 %530
      %532 = vrot.lane.b32.xlu0 %v523, 1
      %v533 = vpop.permute.xlu0 %532
      %534 = vrot.lane.b32.xlu0 %v527, 1
      %v535 = vpop.permute.xlu0 %534
      %vm540 = vcmask 132105
      %541 = vst.msk [vmem:[#allocation2 - $0x1] sm:$0x2] %vm540, %v529
      %542 = vst.msk [vmem:[#allocation2 + $0x17] sm:$0x2] %vm540, %v531
      %543 = vst.msk [vmem:[#allocation2 + $0x2f] sm:$0x2] %vm540, %v533
      %544 = vst.msk [vmem:[#allocation2 + $0x47] sm:$0x2] %vm540, %v535
      %v545 = vlaneseq
      %v546 = vshrl.u32 %v545, 7
      %v547 = vsub.s32 2, %v546
      %v548 = vrot.slane %v445, %v547
      %v549 = vlaneseq
      %v550 = vshrl.u32 %v549, 7
      %v551 = vsub.s32 2, %v550
      %v552 = vrot.slane %v453, %v551
      %v553 = vlaneseq
      %v554 = vshrl.u32 %v553, 7
      %v555 = vsub.s32 2, %v554
      %v556 = vrot.slane %v452, %v555
      %v557 = vlaneseq
      %v558 = vshrl.u32 %v557, 7
      %v559 = vsub.s32 2, %v558
      %v560 = vrot.slane %v454, %v559
      %561 = vrot.lane.b32.xlu0 %v548, 1
      %v562 = vpop.permute.xlu0 %561
      %563 = vrot.lane.b32.xlu0 %v552, 1
      %v564 = vpop.permute.xlu0 %563
      %565 = vrot.lane.b32.xlu0 %v556, 1
      %v566 = vpop.permute.xlu0 %565
      %567 = vrot.lane.b32.xlu0 %v560, 1
      %v568 = vpop.permute.xlu0 %567
      %vm573 = vcmask 133130
      %574 = vst.msk [vmem:[#allocation2 + $0xf] sm:$0x4] %vm573, %v562
      %575 = vst.msk [vmem:[#allocation2 + $0x27] sm:$0x4] %vm573, %v564
      %576 = vst.msk [vmem:[#allocation2 + $0x3f] sm:$0x4] %vm573, %v566
      %577 = vst.msk [vmem:[#allocation2 + $0x57] sm:$0x4] %vm573, %v568
      %v578 = vld [vmem:[#allocation2] sm:$0xff]
      %v579 = vld [vmem:[#allocation2 + $0x8] sm:$0xff]
      %v580 = vld [vmem:[#allocation2 + $0x10] sm:$0x3]
      %v581 = vld [vmem:[#allocation2 + $0x18] sm:$0xff]
      %v582 = vld [vmem:[#allocation2 + $0x20] sm:$0xff]
      %v583 = vld [vmem:[#allocation2 + $0x28] sm:$0x3]
      %v584 = vld [vmem:[#allocation2 + $0x30] sm:$0xff]
      %v585 = vld [vmem:[#allocation2 + $0x38] sm:$0xff]
      %v586 = vld [vmem:[#allocation2 + $0x40] sm:$0x3]
      %v587 = vld [vmem:[#allocation2 + $0x48] sm:$0xff]
      %v588 = vld [vmem:[#allocation2 + $0x50] sm:$0xff]
      %v589 = vld [vmem:[#allocation2 + $0x58] sm:$0x3]
      %602 = vrot.lane.b32.xlu0 %v578, 126
      %v603 = vpop.permute.xlu0 %602
      %604 = vrot.lane.b32.xlu0 %v579, 126
      %v605 = vpop.permute.xlu0 %604
      %606 = vrot.lane.b32.xlu0 %v580, 126
      %v607 = vpop.permute.xlu0 %606
      %608 = vrot.lane.b32.xlu0 %v581, 126
      %v609 = vpop.permute.xlu0 %608
      %610 = vrot.lane.b32.xlu0 %v582, 126
      %v611 = vpop.permute.xlu0 %610
      %612 = vrot.lane.b32.xlu0 %v583, 126
      %v613 = vpop.permute.xlu0 %612
      %614 = vrot.lane.b32.xlu0 %v584, 126
      %v615 = vpop.permute.xlu0 %614
      %616 = vrot.lane.b32.xlu0 %v585, 126
      %v617 = vpop.permute.xlu0 %616
      %618 = vrot.lane.b32.xlu0 %v586, 126
      %v619 = vpop.permute.xlu0 %618
      %620 = vrot.lane.b32.xlu0 %v587, 126
      %v621 = vpop.permute.xlu0 %620
      %622 = vrot.lane.b32.xlu0 %v588, 126
      %v623 = vpop.permute.xlu0 %622
      %624 = vrot.lane.b32.xlu0 %v589, 126
      %v625 = vpop.permute.xlu0 %624
      %vm638 = vcmask 7168
      %639 = vst.msk [vmem:[#allocation2] sm:$0xff] %vm638, %v603
      %640 = vst.msk [vmem:[#allocation2 + $0x8] sm:$0xff] %vm638, %v605
      %vm641 = vcmask 1024
      %642 = vst.msk [vmem:[#allocation2 + $0x10] sm:$0x3] %vm641, %v607
      %643 = vst.msk [vmem:[#allocation2 + $0x18] sm:$0xff] %vm638, %v609
      %644 = vst.msk [vmem:[#allocation2 + $0x20] sm:$0xff] %vm638, %v611
      %645 = vst.msk [vmem:[#allocation2 + $0x28] sm:$0x3] %vm641, %v613
      %646 = vst.msk [vmem:[#allocation2 + $0x30] sm:$0xff] %vm638, %v615
      %647 = vst.msk [vmem:[#allocation2 + $0x38] sm:$0xff] %vm638, %v617
      %648 = vst.msk [vmem:[#allocation2 + $0x40] sm:$0x3] %vm641, %v619
      %649 = vst.msk [vmem:[#allocation2 + $0x48] sm:$0xff] %vm638, %v621
      %650 = vst.msk [vmem:[#allocation2 + $0x50] sm:$0xff] %vm638, %v623
      %651 = vst.msk [vmem:[#allocation2 + $0x58] sm:$0x3] %vm641, %v625
      %v652 = vld [vmem:[#allocation2] sm:$0xff]
      %v653 = vld [vmem:[#allocation2 + $0x8] sm:$0xff]
      %v654 = vld [vmem:[#allocation2 + $0x10] sm:$0x3]
      %v655 = vld [vmem:[#allocation2 + $0x18] sm:$0xff]
      %v656 = vld [vmem:[#allocation2 + $0x20] sm:$0xff]
      %v657 = vld [vmem:[#allocation2 + $0x28] sm:$0x3]
      %v658 = vld [vmem:[#allocation2 + $0x30] sm:$0xff]
      %v659 = vld [vmem:[#allocation2 + $0x38] sm:$0xff]
      %v660 = vld [vmem:[#allocation2 + $0x40] sm:$0x3]
      %v661 = vld [vmem:[#allocation2 + $0x48] sm:$0xff]
      %v662 = vld [vmem:[#allocation2 + $0x50] sm:$0xff]
      %v663 = vld [vmem:[#allocation2 + $0x58] sm:$0x3]
      %676 = vrot.lane.b32.xlu0 %v652, 2
      %v677 = vpop.permute.xlu0 %676
      %678 = vrot.lane.b32.xlu0 %v653, 2
      %v679 = vpop.permute.xlu0 %678
      %680 = vrot.lane.b32.xlu0 %v654, 2
      %v681 = vpop.permute.xlu0 %680
      %682 = vrot.lane.b32.xlu0 %v655, 2
      %v683 = vpop.permute.xlu0 %682
      %684 = vrot.lane.b32.xlu0 %v656, 2
      %v685 = vpop.permute.xlu0 %684
      %686 = vrot.lane.b32.xlu0 %v657, 2
      %v687 = vpop.permute.xlu0 %686
      %688 = vrot.lane.b32.xlu0 %v658, 2
      %v689 = vpop.permute.xlu0 %688
      %690 = vrot.lane.b32.xlu0 %v659, 2
      %v691 = vpop.permute.xlu0 %690
      %692 = vrot.lane.b32.xlu0 %v660, 2
      %v693 = vpop.permute.xlu0 %692
      %694 = vrot.lane.b32.xlu0 %v661, 2
      %v695 = vpop.permute.xlu0 %694
      %696 = vrot.lane.b32.xlu0 %v662, 2
      %v697 = vpop.permute.xlu0 %696
      %698 = vrot.lane.b32.xlu0 %v663, 2
      %v699 = vpop.permute.xlu0 %698
      %vm712 = vcmask 146568
      %713 = vst.msk [vmem:[#allocation2] sm:$0xff] %vm712, %v677
      %714 = vst.msk [vmem:[#allocation2 + $0x8] sm:$0xff] %vm712, %v679
      %vm715 = vcmask 140424
      %716 = vst.msk [vmem:[#allocation2 + $0x10] sm:$0x3] %vm715, %v681
      %717 = vst.msk [vmem:[#allocation2 + $0x18] sm:$0xff] %vm712, %v683
      %718 = vst.msk [vmem:[#allocation2 + $0x20] sm:$0xff] %vm712, %v685
      %719 = vst.msk [vmem:[#allocation2 + $0x28] sm:$0x3] %vm715, %v687
      %720 = vst.msk [vmem:[#allocation2 + $0x30] sm:$0xff] %vm712, %v689
      %721 = vst.msk [vmem:[#allocation2 + $0x38] sm:$0xff] %vm712, %v691
      %722 = vst.msk [vmem:[#allocation2 + $0x40] sm:$0x3] %vm715, %v693
      %723 = vst.msk [vmem:[#allocation2 + $0x48] sm:$0xff] %vm712, %v695
      %724 = vst.msk [vmem:[#allocation2 + $0x50] sm:$0xff] %vm712, %v697
      %725 = vst.msk [vmem:[#allocation2 + $0x58] sm:$0x3] %vm715, %v699
      %v726 = vld [vmem:[#allocation2] sm:$0xff]
      %v727 = vld [vmem:[#allocation2 + $0x8] sm:$0xff]
      %v728 = vld [vmem:[#allocation2 + $0x10] sm:$0x3]
      %v729 = vld [vmem:[#allocation2 + $0x18] sm:$0xff]
      %v730 = vld [vmem:[#allocation2 + $0x20] sm:$0xff]
      %v731 = vld [vmem:[#allocation2 + $0x28] sm:$0x3]
      %v732 = vld [vmem:[#allocation2 + $0x30] sm:$0xff]
      %v733 = vld [vmem:[#allocation2 + $0x38] sm:$0xff]
      %v734 = vld [vmem:[#allocation2 + $0x40] sm:$0x3]
      %v735 = vld [vmem:[#allocation2 + $0x48] sm:$0xff]
      %v736 = vld [vmem:[#allocation2 + $0x50] sm:$0xff]
      %v737 = vld [vmem:[#allocation2 + $0x58] sm:$0x3]
      %v738 = vcombine.low %v726, %v732
      %v739 = vcombine.high %v726, %v732
      %v741 = vunpack.c.l.s4 1983009808
      %v742 = vunpack.c.0.s8 %v741
      %v743 = vlaneseq
      %v744 = vshrl.u32 %v743, 7
      %v745 = vsub.s32 %v742, %v744
      %v746 = vrot.slane %v738, %v745
      %v748 = vunpack.c.l.s4 1983009808
      %v749 = vunpack.c.0.s8 %v748
      %v750 = vlaneseq
      %v751 = vshrl.u32 %v750, 7
      %v752 = vsub.s32 %v749, %v751
      %v753 = vrot.slane %v739, %v752
      %v754 = vcombine.low %v729, %v735
      %v755 = vcombine.high %v729, %v735
      %v757 = vunpack.c.l.s4 1983009808
      %v758 = vunpack.c.0.s8 %v757
      %v759 = vlaneseq
      %v760 = vshrl.u32 %v759, 7
      %v761 = vsub.s32 %v758, %v760
      %v762 = vrot.slane %v754, %v761
      %v764 = vunpack.c.l.s4 1983009808
      %v765 = vunpack.c.0.s8 %v764
      %v766 = vlaneseq
      %v767 = vshrl.u32 %v766, 7
      %v768 = vsub.s32 %v765, %v767
      %v769 = vrot.slane %v755, %v768
      %v770 = vcombine.low %v746, %v762
      %v771 = vcombine.high %v746, %v762
      %v773 = vunpack.c.l.s4 1934713408
      %v774 = vunpack.c.0.s8 %v773
      %v775 = vlaneseq
      %v776 = vshrl.u32 %v775, 7
      %v777 = vsub.s32 %v774, %v776
      %v778 = vrot.slane %v770, %v777
      %v780 = vunpack.c.l.s4 1934713408
      %v781 = vunpack.c.0.s8 %v780
      %v782 = vlaneseq
      %v783 = vshrl.u32 %v782, 7
      %v784 = vsub.s32 %v781, %v783
      %v785 = vrot.slane %v771, %v784
      %v786 = vcombine.low %v753, %v769
      %v787 = vcombine.high %v753, %v769
      %v789 = vunpack.c.l.s4 1934713408
      %v790 = vunpack.c.0.s8 %v789
      %v791 = vlaneseq
      %v792 = vshrl.u32 %v791, 7
      %v793 = vsub.s32 %v790, %v792
      %v794 = vrot.slane %v786, %v793
      %v796 = vunpack.c.l.s4 1934713408
      %v797 = vunpack.c.0.s8 %v796
      %v798 = vlaneseq
      %v799 = vshrl.u32 %v798, 7
      %v800 = vsub.s32 %v797, %v799
      %v801 = vrot.slane %v787, %v800
      %v802 = vcombine.high %v778, 0.0
      %v803 = vcombine.high %v785, 0.0
      %v804 = vcombine.high %v794, 0.0
      %v805 = vcombine.high %v801, 0.0
      %v806 = vcombine.low %v727, %v733
      %v807 = vcombine.high %v727, %v733
      %v809 = vunpack.c.l.s4 1983009808
      %v810 = vunpack.c.0.s8 %v809
      %v811 = vlaneseq
      %v812 = vshrl.u32 %v811, 7
      %v813 = vsub.s32 %v810, %v812
      %v814 = vrot.slane %v806, %v813
      %v816 = vunpack.c.l.s4 1983009808
      %v817 = vunpack.c.0.s8 %v816
      %v818 = vlaneseq
      %v819 = vshrl.u32 %v818, 7
      %v820 = vsub.s32 %v817, %v819
      %v821 = vrot.slane %v807, %v820
      %v822 = vcombine.low %v730, %v736
      %v823 = vcombine.high %v730, %v736
      %v825 = vunpack.c.l.s4 1983009808
      %v826 = vunpack.c.0.s8 %v825
      %v827 = vlaneseq
      %v828 = vshrl.u32 %v827, 7
      %v829 = vsub.s32 %v826, %v828
      %v830 = vrot.slane %v822, %v829
      %v832 = vunpack.c.l.s4 1983009808
      %v833 = vunpack.c.0.s8 %v832
      %v834 = vlaneseq
      %v835 = vshrl.u32 %v834, 7
      %v836 = vsub.s32 %v833, %v835
      %v837 = vrot.slane %v823, %v836
      %v838 = vcombine.low %v814, %v830
      %v839 = vcombine.high %v814, %v830
      %v841 = vunpack.c.l.s4 1934713408
      %v842 = vunpack.c.0.s8 %v841
      %v843 = vlaneseq
      %v844 = vshrl.u32 %v843, 7
      %v845 = vsub.s32 %v842, %v844
      %v846 = vrot.slane %v838, %v845
      %v848 = vunpack.c.l.s4 1934713408
      %v849 = vunpack.c.0.s8 %v848
      %v850 = vlaneseq
      %v851 = vshrl.u32 %v850, 7
      %v852 = vsub.s32 %v849, %v851
      %v853 = vrot.slane %v839, %v852
      %v854 = vcombine.low %v821, %v837
      %v855 = vcombine.high %v821, %v837
      %v857 = vunpack.c.l.s4 1934713408
      %v858 = vunpack.c.0.s8 %v857
      %v859 = vlaneseq
      %v860 = vshrl.u32 %v859, 7
      %v861 = vsub.s32 %v858, %v860
      %v862 = vrot.slane %v854, %v861
      %v864 = vunpack.c.l.s4 1934713408
      %v865 = vunpack.c.0.s8 %v864
      %v866 = vlaneseq
      %v867 = vshrl.u32 %v866, 7
      %v868 = vsub.s32 %v865, %v867
      %v869 = vrot.slane %v855, %v868
      %v870 = vcombine.high %v846, 0.0
      %v871 = vcombine.high %v853, 0.0
      %v872 = vcombine.high %v862, 0.0
      %v873 = vcombine.high %v869, 0.0
      %875 = vrot.lane.b32.xlu0 %v802, 16
      %v876 = vpop.permute.xlu0 %875
      %879 = vrot.lane.b32.xlu0 %v785, 32
      %v880 = vpop.permute.xlu0 %879
      %883 = vrot.lane.b32.xlu0 %v803, 48
      %v884 = vpop.permute.xlu0 %883
      %887 = vrot.lane.b32.xlu0 %v794, 64
      %v888 = vpop.permute.xlu0 %887
      %891 = vrot.lane.b32.xlu0 %v804, 80
      %v892 = vpop.permute.xlu0 %891
      %895 = vrot.lane.b32.xlu0 %v801, 96
      %v896 = vpop.permute.xlu0 %895
      %899 = vrot.lane.b32.xlu0 %v805, 112
      %v900 = vpop.permute.xlu0 %899
      %903 = vrot.lane.b32.xlu0 %v870, 16
      %v904 = vpop.permute.xlu0 %903
      %907 = vrot.lane.b32.xlu0 %v853, 32
      %v908 = vpop.permute.xlu0 %907
      %911 = vrot.lane.b32.xlu0 %v871, 48
      %v912 = vpop.permute.xlu0 %911
      %915 = vrot.lane.b32.xlu0 %v862, 64
      %v916 = vpop.permute.xlu0 %915
      %919 = vrot.lane.b32.xlu0 %v872, 80
      %v920 = vpop.permute.xlu0 %919
      %923 = vrot.lane.b32.xlu0 %v869, 96
      %v924 = vpop.permute.xlu0 %923
      %927 = vrot.lane.b32.xlu0 %v873, 112
      %v928 = vpop.permute.xlu0 %927
      %vm930 = vcmask 130048
      %v931 = vsel %vm930, %v778, %v876
      %vm932 = vcmask 261120
      %v933 = vsel %vm932, %v931, %v880
      %vm934 = vcmask 392192
      %v935 = vsel %vm934, %v933, %v884
      %vm936 = vcmask 523264
      %v937 = vsel %vm936, %v935, %v888
      %vm938 = vcmask 654336
      %v939 = vsel %vm938, %v937, %v892
      %vm940 = vcmask 785408
      %v941 = vsel %vm940, %v939, %v896
      %vm942 = vcmask 916480
      %v943 = vsel %vm942, %v941, %v900
      %v944 = vsel %vm930, %v846, %v904
      %v945 = vsel %vm932, %v944, %v908
      %v946 = vsel %vm934, %v945, %v912
      %v947 = vsel %vm936, %v946, %v916
      %v948 = vsel %vm938, %v947, %v920
      %v949 = vsel %vm940, %v948, %v924
      %v950 = vsel %vm942, %v949, %v928
      %951 = vst [vmem:[#allocation3] sm:$0xf] %v943
      %952 = vst [vmem:[#allocation3 + $0x8] sm:$0xf] %v950
      %961 = vrot.lane.b32.xlu0 %v726, 127
      %v962 = vpop.permute.xlu0 %961
      %963 = vrot.lane.b32.xlu0 %v727, 127
      %v964 = vpop.permute.xlu0 %963
      %965 = vrot.lane.b32.xlu0 %v729, 127
      %v966 = vpop.permute.xlu0 %965
      %967 = vrot.lane.b32.xlu0 %v730, 127
      %v968 = vpop.permute.xlu0 %967
      %969 = vrot.lane.b32.xlu0 %v732, 127
      %v970 = vpop.permute.xlu0 %969
      %971 = vrot.lane.b32.xlu0 %v733, 127
      %v972 = vpop.permute.xlu0 %971
      %973 = vrot.lane.b32.xlu0 %v735, 127
      %v974 = vpop.permute.xlu0 %973
      %975 = vrot.lane.b32.xlu0 %v736, 127
      %v976 = vpop.permute.xlu0 %975
      %v985 = vcombine.low %v962, %v970
      %v986 = vcombine.high %v962, %v970
      %v988 = vunpack.c.l.s4 1983009808
      %v989 = vunpack.c.0.s8 %v988
      %v990 = vlaneseq
      %v991 = vshrl.u32 %v990, 7
      %v992 = vsub.s32 %v989, %v991
      %v993 = vrot.slane %v985, %v992
      %v995 = vunpack.c.l.s4 1983009808
      %v996 = vunpack.c.0.s8 %v995
      %v997 = vlaneseq
      %v998 = vshrl.u32 %v997, 7
      %v999 = vsub.s32 %v996, %v998
      %v1000 = vrot.slane %v986, %v999
      %v1001 = vcombine.low %v966, %v974
      %v1002 = vcombine.high %v966, %v974
      %v1004 = vunpack.c.l.s4 1983009808
      %v1005 = vunpack.c.0.s8 %v1004
      %v1006 = vlaneseq
      %v1007 = vshrl.u32 %v1006, 7
      %v1008 = vsub.s32 %v1005, %v1007
      %v1009 = vrot.slane %v1001, %v1008
      %v1011 = vunpack.c.l.s4 1983009808
      %v1012 = vunpack.c.0.s8 %v1011
      %v1013 = vlaneseq
      %v1014 = vshrl.u32 %v1013, 7
      %v1015 = vsub.s32 %v1012, %v1014
      %v1016 = vrot.slane %v1002, %v1015
      %v1017 = vcombine.low %v993, %v1009
      %v1018 = vcombine.high %v993, %v1009
      %v1020 = vunpack.c.l.s4 1934713408
      %v1021 = vunpack.c.0.s8 %v1020
      %v1022 = vlaneseq
      %v1023 = vshrl.u32 %v1022, 7
      %v1024 = vsub.s32 %v1021, %v1023
      %v1025 = vrot.slane %v1017, %v1024
      %v1027 = vunpack.c.l.s4 1934713408
      %v1028 = vunpack.c.0.s8 %v1027
      %v1029 = vlaneseq
      %v1030 = vshrl.u32 %v1029, 7
      %v1031 = vsub.s32 %v1028, %v1030
      %v1032 = vrot.slane %v1018, %v1031
      %v1033 = vcombine.low %v1000, %v1016
      %v1034 = vcombine.high %v1000, %v1016
      %v1036 = vunpack.c.l.s4 1934713408
      %v1037 = vunpack.c.0.s8 %v1036
      %v1038 = vlaneseq
      %v1039 = vshrl.u32 %v1038, 7
      %v1040 = vsub.s32 %v1037, %v1039
      %v1041 = vrot.slane %v1033, %v1040
      %v1043 = vunpack.c.l.s4 1934713408
      %v1044 = vunpack.c.0.s8 %v1043
      %v1045 = vlaneseq
      %v1046 = vshrl.u32 %v1045, 7
      %v1047 = vsub.s32 %v1044, %v1046
      %v1048 = vrot.slane %v1034, %v1047
      %v1049 = vcombine.high %v1025, 0.0
      %v1050 = vcombine.high %v1032, 0.0
      %v1051 = vcombine.high %v1041, 0.0
      %v1052 = vcombine.high %v1048, 0.0
      %v1053 = vcombine.low %v964, %v972
      %v1054 = vcombine.high %v964, %v972
      %v1056 = vunpack.c.l.s4 1983009808
      %v1057 = vunpack.c.0.s8 %v1056
      %v1058 = vlaneseq
      %v1059 = vshrl.u32 %v1058, 7
      %v1060 = vsub.s32 %v1057, %v1059
      %v1061 = vrot.slane %v1053, %v1060
      %v1063 = vunpack.c.l.s4 1983009808
      %v1064 = vunpack.c.0.s8 %v1063
      %v1065 = vlaneseq
      %v1066 = vshrl.u32 %v1065, 7
      %v1067 = vsub.s32 %v1064, %v1066
      %v1068 = vrot.slane %v1054, %v1067
      %v1069 = vcombine.low %v968, %v976
      %v1070 = vcombine.high %v968, %v976
      %v1072 = vunpack.c.l.s4 1983009808
      %v1073 = vunpack.c.0.s8 %v1072
      %v1074 = vlaneseq
      %v1075 = vshrl.u32 %v1074, 7
      %v1076 = vsub.s32 %v1073, %v1075
      %v1077 = vrot.slane %v1069, %v1076
      %v1079 = vunpack.c.l.s4 1983009808
      %v1080 = vunpack.c.0.s8 %v1079
      %v1081 = vlaneseq
      %v1082 = vshrl.u32 %v1081, 7
      %v1083 = vsub.s32 %v1080, %v1082
      %v1084 = vrot.slane %v1070, %v1083
      %v1085 = vcombine.low %v1061, %v1077
      %v1086 = vcombine.high %v1061, %v1077
      %v1088 = vunpack.c.l.s4 1934713408
      %v1089 = vunpack.c.0.s8 %v1088
      %v1090 = vlaneseq
      %v1091 = vshrl.u32 %v1090, 7
      %v1092 = vsub.s32 %v1089, %v1091
      %v1093 = vrot.slane %v1085, %v1092
      %v1095 = vunpack.c.l.s4 1934713408
      %v1096 = vunpack.c.0.s8 %v1095
      %v1097 = vlaneseq
      %v1098 = vshrl.u32 %v1097, 7
      %v1099 = vsub.s32 %v1096, %v1098
      %v1100 = vrot.slane %v1086, %v1099
      %v1101 = vcombine.low %v1068, %v1084
      %v1102 = vcombine.high %v1068, %v1084
      %v1104 = vunpack.c.l.s4 1934713408
      %v1105 = vunpack.c.0.s8 %v1104
      %v1106 = vlaneseq
      %v1107 = vshrl.u32 %v1106, 7
      %v1108 = vsub.s32 %v1105, %v1107
      %v1109 = vrot.slane %v1101, %v1108
      %v1111 = vunpack.c.l.s4 1934713408
      %v1112 = vunpack.c.0.s8 %v1111
      %v1113 = vlaneseq
      %v1114 = vshrl.u32 %v1113, 7
      %v1115 = vsub.s32 %v1112, %v1114
      %v1116 = vrot.slane %v1102, %v1115
      %v1117 = vcombine.high %v1093, 0.0
      %v1118 = vcombine.high %v1100, 0.0
      %v1119 = vcombine.high %v1109, 0.0
      %v1120 = vcombine.high %v1116, 0.0
      %1122 = vrot.lane.b32.xlu0 %v1049, 16
      %v1123 = vpop.permute.xlu0 %1122
      %1126 = vrot.lane.b32.xlu0 %v1032, 32
      %v1127 = vpop.permute.xlu0 %1126
      %1130 = vrot.lane.b32.xlu0 %v1050, 48
      %v1131 = vpop.permute.xlu0 %1130
      %1134 = vrot.lane.b32.xlu0 %v1041, 64
      %v1135 = vpop.permute.xlu0 %1134
      %1138 = vrot.lane.b32.xlu0 %v1051, 80
      %v1139 = vpop.permute.xlu0 %1138
      %1142 = vrot.lane.b32.xlu0 %v1048, 96
      %v1143 = vpop.permute.xlu0 %1142
      %1146 = vrot.lane.b32.xlu0 %v1052, 112
      %v1147 = vpop.permute.xlu0 %1146
      %1150 = vrot.lane.b32.xlu0 %v1117, 16
      %v1151 = vpop.permute.xlu0 %1150
      %1154 = vrot.lane.b32.xlu0 %v1100, 32
      %v1155 = vpop.permute.xlu0 %1154
      %1158 = vrot.lane.b32.xlu0 %v1118, 48
      %v1159 = vpop.permute.xlu0 %1158
      %1162 = vrot.lane.b32.xlu0 %v1109, 64
      %v1163 = vpop.permute.xlu0 %1162
      %1166 = vrot.lane.b32.xlu0 %v1119, 80
      %v1167 = vpop.permute.xlu0 %1166
      %1170 = vrot.lane.b32.xlu0 %v1116, 96
      %v1171 = vpop.permute.xlu0 %1170
      %1174 = vrot.lane.b32.xlu0 %v1120, 112
      %v1175 = vpop.permute.xlu0 %1174
      %v1177 = vsel %vm930, %v1025, %v1123
      %v1178 = vsel %vm932, %v1177, %v1127
      %v1179 = vsel %vm934, %v1178, %v1131
      %v1180 = vsel %vm936, %v1179, %v1135
      %v1181 = vsel %vm938, %v1180, %v1139
      %v1182 = vsel %vm940, %v1181, %v1143
      %v1183 = vsel %vm942, %v1182, %v1147
      %v1184 = vsel %vm930, %v1093, %v1151
      %v1185 = vsel %vm932, %v1184, %v1155
      %v1186 = vsel %vm934, %v1185, %v1159
      %v1187 = vsel %vm936, %v1186, %v1163
      %v1188 = vsel %vm938, %v1187, %v1167
      %v1189 = vsel %vm940, %v1188, %v1171
      %v1190 = vsel %vm942, %v1189, %v1175
      %v1193 = vrot.slane %v1183, 4
      %v1194 = vrot.slane %v1190, 4
      %1197 = vst [vmem:[#allocation3] sm:$0xf0] %v1193
      %1198 = vst [vmem:[#allocation3 + $0x8] sm:$0xf0] %v1194
      %1199 = vrot.lane.b32.xlu0 %v726, 126
      %v1200 = vpop.permute.xlu0 %1199
      %1201 = vrot.lane.b32.xlu0 %v727, 126
      %v1202 = vpop.permute.xlu0 %1201
      %1203 = vrot.lane.b32.xlu0 %v729, 126
      %v1204 = vpop.permute.xlu0 %1203
      %1205 = vrot.lane.b32.xlu0 %v730, 126
      %v1206 = vpop.permute.xlu0 %1205
      %1207 = vrot.lane.b32.xlu0 %v732, 126
      %v1208 = vpop.permute.xlu0 %1207
      %1209 = vrot.lane.b32.xlu0 %v733, 126
      %v1210 = vpop.permute.xlu0 %1209
      %1211 = vrot.lane.b32.xlu0 %v735, 126
      %v1212 = vpop.permute.xlu0 %1211
      %1213 = vrot.lane.b32.xlu0 %v736, 126
      %v1214 = vpop.permute.xlu0 %1213
      %v1223 = vcombine.low %v1200, %v1208
      %v1224 = vcombine.high %v1200, %v1208
      %v1226 = vunpack.c.l.s4 1983009808
      %v1227 = vunpack.c.0.s8 %v1226
      %v1228 = vlaneseq
      %v1229 = vshrl.u32 %v1228, 7
      %v1230 = vsub.s32 %v1227, %v1229
      %v1231 = vrot.slane %v1223, %v1230
      %v1233 = vunpack.c.l.s4 1983009808
      %v1234 = vunpack.c.0.s8 %v1233
      %v1235 = vlaneseq
      %v1236 = vshrl.u32 %v1235, 7
      %v1237 = vsub.s32 %v1234, %v1236
      %v1238 = vrot.slane %v1224, %v1237
      %v1239 = vcombine.low %v1204, %v1212
      %v1240 = vcombine.high %v1204, %v1212
      %v1242 = vunpack.c.l.s4 1983009808
      %v1243 = vunpack.c.0.s8 %v1242
      %v1244 = vlaneseq
      %v1245 = vshrl.u32 %v1244, 7
      %v1246 = vsub.s32 %v1243, %v1245
      %v1247 = vrot.slane %v1239, %v1246
      %v1249 = vunpack.c.l.s4 1983009808
      %v1250 = vunpack.c.0.s8 %v1249
      %v1251 = vlaneseq
      %v1252 = vshrl.u32 %v1251, 7
      %v1253 = vsub.s32 %v1250, %v1252
      %v1254 = vrot.slane %v1240, %v1253
      %v1255 = vcombine.low %v1231, %v1247
      %v1256 = vcombine.high %v1231, %v1247
      %v1258 = vunpack.c.l.s4 1934713408
      %v1259 = vunpack.c.0.s8 %v1258
      %v1260 = vlaneseq
      %v1261 = vshrl.u32 %v1260, 7
      %v1262 = vsub.s32 %v1259, %v1261
      %v1263 = vrot.slane %v1255, %v1262
      %v1265 = vunpack.c.l.s4 1934713408
      %v1266 = vunpack.c.0.s8 %v1265
      %v1267 = vlaneseq
      %v1268 = vshrl.u32 %v1267, 7
      %v1269 = vsub.s32 %v1266, %v1268
      %v1270 = vrot.slane %v1256, %v1269
      %v1271 = vcombine.low %v1238, %v1254
      %v1272 = vcombine.high %v1238, %v1254
      %v1274 = vunpack.c.l.s4 1934713408
      %v1275 = vunpack.c.0.s8 %v1274
      %v1276 = vlaneseq
      %v1277 = vshrl.u32 %v1276, 7
      %v1278 = vsub.s32 %v1275, %v1277
      %v1279 = vrot.slane %v1271, %v1278
      %v1281 = vunpack.c.l.s4 1934713408
      %v1282 = vunpack.c.0.s8 %v1281
      %v1283 = vlaneseq
      %v1284 = vshrl.u32 %v1283, 7
      %v1285 = vsub.s32 %v1282, %v1284
      %v1286 = vrot.slane %v1272, %v1285
      %v1287 = vcombine.high %v1263, 0.0
      %v1288 = vcombine.high %v1270, 0.0
      %v1289 = vcombine.high %v1279, 0.0
      %v1290 = vcombine.high %v1286, 0.0
      %v1291 = vcombine.low %v1202, %v1210
      %v1292 = vcombine.high %v1202, %v1210
      %v1294 = vunpack.c.l.s4 1983009808
      %v1295 = vunpack.c.0.s8 %v1294
      %v1296 = vlaneseq
      %v1297 = vshrl.u32 %v1296, 7
      %v1298 = vsub.s32 %v1295, %v1297
      %v1299 = vrot.slane %v1291, %v1298
      %v1301 = vunpack.c.l.s4 1983009808
      %v1302 = vunpack.c.0.s8 %v1301
      %v1303 = vlaneseq
      %v1304 = vshrl.u32 %v1303, 7
      %v1305 = vsub.s32 %v1302, %v1304
      %v1306 = vrot.slane %v1292, %v1305
      %v1307 = vcombine.low %v1206, %v1214
      %v1308 = vcombine.high %v1206, %v1214
      %v1310 = vunpack.c.l.s4 1983009808
      %v1311 = vunpack.c.0.s8 %v1310
      %v1312 = vlaneseq
      %v1313 = vshrl.u32 %v1312, 7
      %v1314 = vsub.s32 %v1311, %v1313
      %v1315 = vrot.slane %v1307, %v1314
      %v1317 = vunpack.c.l.s4 1983009808
      %v1318 = vunpack.c.0.s8 %v1317
      %v1319 = vlaneseq
      %v1320 = vshrl.u32 %v1319, 7
      %v1321 = vsub.s32 %v1318, %v1320
      %v1322 = vrot.slane %v1308, %v1321
      %v1323 = vcombine.low %v1299, %v1315
      %v1324 = vcombine.high %v1299, %v1315
      %v1326 = vunpack.c.l.s4 1934713408
      %v1327 = vunpack.c.0.s8 %v1326
      %v1328 = vlaneseq
      %v1329 = vshrl.u32 %v1328, 7
      %v1330 = vsub.s32 %v1327, %v1329
      %v1331 = vrot.slane %v1323, %v1330
      %v1333 = vunpack.c.l.s4 1934713408
      %v1334 = vunpack.c.0.s8 %v1333
      %v1335 = vlaneseq
      %v1336 = vshrl.u32 %v1335, 7
      %v1337 = vsub.s32 %v1334, %v1336
      %v1338 = vrot.slane %v1324, %v1337
      %v1339 = vcombine.low %v1306, %v1322
      %v1340 = vcombine.high %v1306, %v1322
      %v1342 = vunpack.c.l.s4 1934713408
      %v1343 = vunpack.c.0.s8 %v1342
      %v1344 = vlaneseq
      %v1345 = vshrl.u32 %v1344, 7
      %v1346 = vsub.s32 %v1343, %v1345
      %v1347 = vrot.slane %v1339, %v1346
      %v1349 = vunpack.c.l.s4 1934713408
      %v1350 = vunpack.c.0.s8 %v1349
      %v1351 = vlaneseq
      %v1352 = vshrl.u32 %v1351, 7
      %v1353 = vsub.s32 %v1350, %v1352
      %v1354 = vrot.slane %v1340, %v1353
      %v1355 = vcombine.high %v1331, 0.0
      %v1356 = vcombine.high %v1338, 0.0
      %v1357 = vcombine.high %v1347, 0.0
      %v1358 = vcombine.high %v1354, 0.0
      %1360 = vrot.lane.b32.xlu0 %v1287, 16
      %v1361 = vpop.permute.xlu0 %1360
      %1364 = vrot.lane.b32.xlu0 %v1270, 32
      %v1365 = vpop.permute.xlu0 %1364
      %1368 = vrot.lane.b32.xlu0 %v1288, 48
      %v1369 = vpop.permute.xlu0 %1368
      %1372 = vrot.lane.b32.xlu0 %v1279, 64
      %v1373 = vpop.permute.xlu0 %1372
      %1376 = vrot.lane.b32.xlu0 %v1289, 80
      %v1377 = vpop.permute.xlu0 %1376
      %1380 = vrot.lane.b32.xlu0 %v1286, 96
      %v1381 = vpop.permute.xlu0 %1380
      %1384 = vrot.lane.b32.xlu0 %v1290, 112
      %v1385 = vpop.permute.xlu0 %1384
      %1388 = vrot.lane.b32.xlu0 %v1355, 16
      %v1389 = vpop.permute.xlu0 %1388
      %1392 = vrot.lane.b32.xlu0 %v1338, 32
      %v1393 = vpop.permute.xlu0 %1392
      %1396 = vrot.lane.b32.xlu0 %v1356, 48
      %v1397 = vpop.permute.xlu0 %1396
      %1400 = vrot.lane.b32.xlu0 %v1347, 64
      %v1401 = vpop.permute.xlu0 %1400
      %1404 = vrot.lane.b32.xlu0 %v1357, 80
      %v1405 = vpop.permute.xlu0 %1404
      %1408 = vrot.lane.b32.xlu0 %v1354, 96
      %v1409 = vpop.permute.xlu0 %1408
      %1412 = vrot.lane.b32.xlu0 %v1358, 112
      %v1413 = vpop.permute.xlu0 %1412
      %v1415 = vsel %vm930, %v1263, %v1361
      %v1416 = vsel %vm932, %v1415, %v1365
      %v1417 = vsel %vm934, %v1416, %v1369
      %v1418 = vsel %vm936, %v1417, %v1373
      %v1419 = vsel %vm938, %v1418, %v1377
      %v1420 = vsel %vm940, %v1419, %v1381
      %v1421 = vsel %vm942, %v1420, %v1385
      %v1422 = vsel %vm930, %v1331, %v1389
      %v1423 = vsel %vm932, %v1422, %v1393
      %v1424 = vsel %vm934, %v1423, %v1397
      %v1425 = vsel %vm936, %v1424, %v1401
      %v1426 = vsel %vm938, %v1425, %v1405
      %v1427 = vsel %vm940, %v1426, %v1409
      %v1428 = vsel %vm942, %v1427, %v1413
      %1429 = vst [vmem:[#allocation3 + $0x10] sm:$0xf] %v1421
      %1430 = vst [vmem:[#allocation3 + $0x18] sm:$0xf] %v1428
      %vm1435 = vcmask 1046528
      %v1436 = vrot.slane %v726, 1
      %v1437 = vrot.slane %v727, 1
      %v1438 = vsel %vm1435, %v1436, %v1437
      %v1439 = vrot.slane %v728, 1
      %v1440 = vsel %vm1435, %v1437, %v1439
      %v1441 = vrot.slane %v729, 1
      %v1442 = vrot.slane %v730, 1
      %v1443 = vsel %vm1435, %v1441, %v1442
      %v1444 = vrot.slane %v731, 1
      %v1445 = vsel %vm1435, %v1442, %v1444
      %v1446 = vrot.slane %v732, 1
      %v1447 = vrot.slane %v733, 1
      %v1448 = vsel %vm1435, %v1446, %v1447
      %v1449 = vrot.slane %v734, 1
      %v1450 = vsel %vm1435, %v1447, %v1449
      %v1451 = vrot.slane %v735, 1
      %v1452 = vrot.slane %v736, 1
      %v1453 = vsel %vm1435, %v1451, %v1452
      %v1454 = vrot.slane %v737, 1
      %v1455 = vsel %vm1435, %v1452, %v1454
      %v1464 = vcombine.low %v1438, %v1448
      %v1465 = vcombine.high %v1438, %v1448
      %v1467 = vunpack.c.l.s4 1983009808
      %v1468 = vunpack.c.0.s8 %v1467
      %v1469 = vlaneseq
      %v1470 = vshrl.u32 %v1469, 7
      %v1471 = vsub.s32 %v1468, %v1470
      %v1472 = vrot.slane %v1464, %v1471
      %v1474 = vunpack.c.l.s4 1983009808
      %v1475 = vunpack.c.0.s8 %v1474
      %v1476 = vlaneseq
      %v1477 = vshrl.u32 %v1476, 7
      %v1478 = vsub.s32 %v1475, %v1477
      %v1479 = vrot.slane %v1465, %v1478
      %v1480 = vcombine.low %v1443, %v1453
      %v1481 = vcombine.high %v1443, %v1453
      %v1483 = vunpack.c.l.s4 1983009808
      %v1484 = vunpack.c.0.s8 %v1483
      %v1485 = vlaneseq
      %v1486 = vshrl.u32 %v1485, 7
      %v1487 = vsub.s32 %v1484, %v1486
      %v1488 = vrot.slane %v1480, %v1487
      %v1490 = vunpack.c.l.s4 1983009808
      %v1491 = vunpack.c.0.s8 %v1490
      %v1492 = vlaneseq
      %v1493 = vshrl.u32 %v1492, 7
      %v1494 = vsub.s32 %v1491, %v1493
      %v1495 = vrot.slane %v1481, %v1494
      %v1496 = vcombine.low %v1472, %v1488
      %v1497 = vcombine.high %v1472, %v1488
      %v1499 = vunpack.c.l.s4 1934713408
      %v1500 = vunpack.c.0.s8 %v1499
      %v1501 = vlaneseq
      %v1502 = vshrl.u32 %v1501, 7
      %v1503 = vsub.s32 %v1500, %v1502
      %v1504 = vrot.slane %v1496, %v1503
      %v1506 = vunpack.c.l.s4 1934713408
      %v1507 = vunpack.c.0.s8 %v1506
      %v1508 = vlaneseq
      %v1509 = vshrl.u32 %v1508, 7
      %v1510 = vsub.s32 %v1507, %v1509
      %v1511 = vrot.slane %v1497, %v1510
      %v1512 = vcombine.low %v1479, %v1495
      %v1513 = vcombine.high %v1479, %v1495
      %v1515 = vunpack.c.l.s4 1934713408
      %v1516 = vunpack.c.0.s8 %v1515
      %v1517 = vlaneseq
      %v1518 = vshrl.u32 %v1517, 7
      %v1519 = vsub.s32 %v1516, %v1518
      %v1520 = vrot.slane %v1512, %v1519
      %v1522 = vunpack.c.l.s4 1934713408
      %v1523 = vunpack.c.0.s8 %v1522
      %v1524 = vlaneseq
      %v1525 = vshrl.u32 %v1524, 7
      %v1526 = vsub.s32 %v1523, %v1525
      %v1527 = vrot.slane %v1513, %v1526
      %v1528 = vcombine.high %v1504, 0.0
      %v1529 = vcombine.high %v1511, 0.0
      %v1530 = vcombine.high %v1520, 0.0
      %v1531 = vcombine.high %v1527, 0.0
      %v1532 = vcombine.low %v1440, %v1450
      %v1533 = vcombine.high %v1440, %v1450
      %v1535 = vunpack.c.l.s4 1983009808
      %v1536 = vunpack.c.0.s8 %v1535
      %v1537 = vlaneseq
      %v1538 = vshrl.u32 %v1537, 7
      %v1539 = vsub.s32 %v1536, %v1538
      %v1540 = vrot.slane %v1532, %v1539
      %v1542 = vunpack.c.l.s4 1983009808
      %v1543 = vunpack.c.0.s8 %v1542
      %v1544 = vlaneseq
      %v1545 = vshrl.u32 %v1544, 7
      %v1546 = vsub.s32 %v1543, %v1545
      %v1547 = vrot.slane %v1533, %v1546
      %v1548 = vcombine.low %v1445, %v1455
      %v1549 = vcombine.high %v1445, %v1455
      %v1551 = vunpack.c.l.s4 1983009808
      %v1552 = vunpack.c.0.s8 %v1551
      %v1553 = vlaneseq
      %v1554 = vshrl.u32 %v1553, 7
      %v1555 = vsub.s32 %v1552, %v1554
      %v1556 = vrot.slane %v1548, %v1555
      %v1558 = vunpack.c.l.s4 1983009808
      %v1559 = vunpack.c.0.s8 %v1558
      %v1560 = vlaneseq
      %v1561 = vshrl.u32 %v1560, 7
      %v1562 = vsub.s32 %v1559, %v1561
      %v1563 = vrot.slane %v1549, %v1562
      %v1564 = vcombine.low %v1540, %v1556
      %v1565 = vcombine.high %v1540, %v1556
      %v1567 = vunpack.c.l.s4 1934713408
      %v1568 = vunpack.c.0.s8 %v1567
      %v1569 = vlaneseq
      %v1570 = vshrl.u32 %v1569, 7
      %v1571 = vsub.s32 %v1568, %v1570
      %v1572 = vrot.slane %v1564, %v1571
      %v1574 = vunpack.c.l.s4 1934713408
      %v1575 = vunpack.c.0.s8 %v1574
      %v1576 = vlaneseq
      %v1577 = vshrl.u32 %v1576, 7
      %v1578 = vsub.s32 %v1575, %v1577
      %v1579 = vrot.slane %v1565, %v1578
      %v1580 = vcombine.low %v1547, %v1563
      %v1581 = vcombine.high %v1547, %v1563
      %v1583 = vunpack.c.l.s4 1934713408
      %v1584 = vunpack.c.0.s8 %v1583
      %v1585 = vlaneseq
      %v1586 = vshrl.u32 %v1585, 7
      %v1587 = vsub.s32 %v1584, %v1586
      %v1588 = vrot.slane %v1580, %v1587
      %v1590 = vunpack.c.l.s4 1934713408
      %v1591 = vunpack.c.0.s8 %v1590
      %v1592 = vlaneseq
      %v1593 = vshrl.u32 %v1592, 7
      %v1594 = vsub.s32 %v1591, %v1593
      %v1595 = vrot.slane %v1581, %v1594
      %v1596 = vcombine.high %v1572, 0.0
      %v1597 = vcombine.high %v1579, 0.0
      %v1598 = vcombine.high %v1588, 0.0
      %v1599 = vcombine.high %v1595, 0.0
      %1601 = vrot.lane.b32.xlu0 %v1528, 16
      %v1602 = vpop.permute.xlu0 %1601
      %1605 = vrot.lane.b32.xlu0 %v1511, 32
      %v1606 = vpop.permute.xlu0 %1605
      %1609 = vrot.lane.b32.xlu0 %v1529, 48
      %v1610 = vpop.permute.xlu0 %1609
      %1613 = vrot.lane.b32.xlu0 %v1520, 64
      %v1614 = vpop.permute.xlu0 %1613
      %1617 = vrot.lane.b32.xlu0 %v1530, 80
      %v1618 = vpop.permute.xlu0 %1617
      %1621 = vrot.lane.b32.xlu0 %v1527, 96
      %v1622 = vpop.permute.xlu0 %1621
      %1625 = vrot.lane.b32.xlu0 %v1531, 112
      %v1626 = vpop.permute.xlu0 %1625
      %1629 = vrot.lane.b32.xlu0 %v1596, 16
      %v1630 = vpop.permute.xlu0 %1629
      %1633 = vrot.lane.b32.xlu0 %v1579, 32
      %v1634 = vpop.permute.xlu0 %1633
      %1637 = vrot.lane.b32.xlu0 %v1597, 48
      %v1638 = vpop.permute.xlu0 %1637
      %1641 = vrot.lane.b32.xlu0 %v1588, 64
      %v1642 = vpop.permute.xlu0 %1641
      %1645 = vrot.lane.b32.xlu0 %v1598, 80
      %v1646 = vpop.permute.xlu0 %1645
      %1649 = vrot.lane.b32.xlu0 %v1595, 96
      %v1650 = vpop.permute.xlu0 %1649
      %1653 = vrot.lane.b32.xlu0 %v1599, 112
      %v1654 = vpop.permute.xlu0 %1653
      %v1656 = vsel %vm930, %v1504, %v1602
      %v1657 = vsel %vm932, %v1656, %v1606
      %v1658 = vsel %vm934, %v1657, %v1610
      %v1659 = vsel %vm936, %v1658, %v1614
      %v1660 = vsel %vm938, %v1659, %v1618
      %v1661 = vsel %vm940, %v1660, %v1622
      %v1662 = vsel %vm942, %v1661, %v1626
      %v1663 = vsel %vm930, %v1572, %v1630
      %v1664 = vsel %vm932, %v1663, %v1634
      %v1665 = vsel %vm934, %v1664, %v1638
      %v1666 = vsel %vm936, %v1665, %v1642
      %v1667 = vsel %vm938, %v1666, %v1646
      %v1668 = vsel %vm940, %v1667, %v1650
      %v1669 = vsel %vm942, %v1668, %v1654
      %v1672 = vrot.slane %v1662, 4
      %v1673 = vrot.slane %v1669, 4
      %1676 = vst [vmem:[#allocation3 + $0x10] sm:$0xf0] %v1672
      %1677 = vst [vmem:[#allocation3 + $0x18] sm:$0xf0] %v1673
      %1678 = vrot.lane.b32.xlu0 %v1438, 127
      %v1679 = vpop.permute.xlu0 %1678
      %1680 = vrot.lane.b32.xlu0 %v1440, 127
      %v1681 = vpop.permute.xlu0 %1680
      %1682 = vrot.lane.b32.xlu0 %v1443, 127
      %v1683 = vpop.permute.xlu0 %1682
      %1684 = vrot.lane.b32.xlu0 %v1445, 127
      %v1685 = vpop.permute.xlu0 %1684
      %1686 = vrot.lane.b32.xlu0 %v1448, 127
      %v1687 = vpop.permute.xlu0 %1686
      %1688 = vrot.lane.b32.xlu0 %v1450, 127
      %v1689 = vpop.permute.xlu0 %1688
      %1690 = vrot.lane.b32.xlu0 %v1453, 127
      %v1691 = vpop.permute.xlu0 %1690
      %1692 = vrot.lane.b32.xlu0 %v1455, 127
      %v1693 = vpop.permute.xlu0 %1692
      %v1702 = vcombine.low %v1679, %v1687
      %v1703 = vcombine.high %v1679, %v1687
      %v1705 = vunpack.c.l.s4 1983009808
      %v1706 = vunpack.c.0.s8 %v1705
      %v1707 = vlaneseq
      %v1708 = vshrl.u32 %v1707, 7
      %v1709 = vsub.s32 %v1706, %v1708
      %v1710 = vrot.slane %v1702, %v1709
      %v1712 = vunpack.c.l.s4 1983009808
      %v1713 = vunpack.c.0.s8 %v1712
      %v1714 = vlaneseq
      %v1715 = vshrl.u32 %v1714, 7
      %v1716 = vsub.s32 %v1713, %v1715
      %v1717 = vrot.slane %v1703, %v1716
      %v1718 = vcombine.low %v1683, %v1691
      %v1719 = vcombine.high %v1683, %v1691
      %v1721 = vunpack.c.l.s4 1983009808
      %v1722 = vunpack.c.0.s8 %v1721
      %v1723 = vlaneseq
      %v1724 = vshrl.u32 %v1723, 7
      %v1725 = vsub.s32 %v1722, %v1724
      %v1726 = vrot.slane %v1718, %v1725
      %v1728 = vunpack.c.l.s4 1983009808
      %v1729 = vunpack.c.0.s8 %v1728
      %v1730 = vlaneseq
      %v1731 = vshrl.u32 %v1730, 7
      %v1732 = vsub.s32 %v1729, %v1731
      %v1733 = vrot.slane %v1719, %v1732
      %v1734 = vcombine.low %v1710, %v1726
      %v1735 = vcombine.high %v1710, %v1726
      %v1737 = vunpack.c.l.s4 1934713408
      %v1738 = vunpack.c.0.s8 %v1737
      %v1739 = vlaneseq
      %v1740 = vshrl.u32 %v1739, 7
      %v1741 = vsub.s32 %v1738, %v1740
      %v1742 = vrot.slane %v1734, %v1741
      %v1744 = vunpack.c.l.s4 1934713408
      %v1745 = vunpack.c.0.s8 %v1744
      %v1746 = vlaneseq
      %v1747 = vshrl.u32 %v1746, 7
      %v1748 = vsub.s32 %v1745, %v1747
      %v1749 = vrot.slane %v1735, %v1748
      %v1750 = vcombine.low %v1717, %v1733
      %v1751 = vcombine.high %v1717, %v1733
      %v1753 = vunpack.c.l.s4 1934713408
      %v1754 = vunpack.c.0.s8 %v1753
      %v1755 = vlaneseq
      %v1756 = vshrl.u32 %v1755, 7
      %v1757 = vsub.s32 %v1754, %v1756
      %v1758 = vrot.slane %v1750, %v1757
      %v1760 = vunpack.c.l.s4 1934713408
      %v1761 = vunpack.c.0.s8 %v1760
      %v1762 = vlaneseq
      %v1763 = vshrl.u32 %v1762, 7
      %v1764 = vsub.s32 %v1761, %v1763
      %v1765 = vrot.slane %v1751, %v1764
      %v1766 = vcombine.high %v1742, 0.0
      %v1767 = vcombine.high %v1749, 0.0
      %v1768 = vcombine.high %v1758, 0.0
      %v1769 = vcombine.high %v1765, 0.0
      %v1770 = vcombine.low %v1681, %v1689
      %v1771 = vcombine.high %v1681, %v1689
      %v1773 = vunpack.c.l.s4 1983009808
      %v1774 = vunpack.c.0.s8 %v1773
      %v1775 = vlaneseq
      %v1776 = vshrl.u32 %v1775, 7
      %v1777 = vsub.s32 %v1774, %v1776
      %v1778 = vrot.slane %v1770, %v1777
      %v1780 = vunpack.c.l.s4 1983009808
      %v1781 = vunpack.c.0.s8 %v1780
      %v1782 = vlaneseq
      %v1783 = vshrl.u32 %v1782, 7
      %v1784 = vsub.s32 %v1781, %v1783
      %v1785 = vrot.slane %v1771, %v1784
      %v1786 = vcombine.low %v1685, %v1693
      %v1787 = vcombine.high %v1685, %v1693
      %v1789 = vunpack.c.l.s4 1983009808
      %v1790 = vunpack.c.0.s8 %v1789
      %v1791 = vlaneseq
      %v1792 = vshrl.u32 %v1791, 7
      %v1793 = vsub.s32 %v1790, %v1792
      %v1794 = vrot.slane %v1786, %v1793
      %v1796 = vunpack.c.l.s4 1983009808
      %v1797 = vunpack.c.0.s8 %v1796
      %v1798 = vlaneseq
      %v1799 = vshrl.u32 %v1798, 7
      %v1800 = vsub.s32 %v1797, %v1799
      %v1801 = vrot.slane %v1787, %v1800
      %v1802 = vcombine.low %v1778, %v1794
      %v1803 = vcombine.high %v1778, %v1794
      %v1805 = vunpack.c.l.s4 1934713408
      %v1806 = vunpack.c.0.s8 %v1805
      %v1807 = vlaneseq
      %v1808 = vshrl.u32 %v1807, 7
      %v1809 = vsub.s32 %v1806, %v1808
      %v1810 = vrot.slane %v1802, %v1809
      %v1812 = vunpack.c.l.s4 1934713408
      %v1813 = vunpack.c.0.s8 %v1812
      %v1814 = vlaneseq
      %v1815 = vshrl.u32 %v1814, 7
      %v1816 = vsub.s32 %v1813, %v1815
      %v1817 = vrot.slane %v1803, %v1816
      %v1818 = vcombine.low %v1785, %v1801
      %v1819 = vcombine.high %v1785, %v1801
      %v1821 = vunpack.c.l.s4 1934713408
      %v1822 = vunpack.c.0.s8 %v1821
      %v1823 = vlaneseq
      %v1824 = vshrl.u32 %v1823, 7
      %v1825 = vsub.s32 %v1822, %v1824
      %v1826 = vrot.slane %v1818, %v1825
      %v1828 = vunpack.c.l.s4 1934713408
      %v1829 = vunpack.c.0.s8 %v1828
      %v1830 = vlaneseq
      %v1831 = vshrl.u32 %v1830, 7
      %v1832 = vsub.s32 %v1829, %v1831
      %v1833 = vrot.slane %v1819, %v1832
      %v1834 = vcombine.high %v1810, 0.0
      %v1835 = vcombine.high %v1817, 0.0
      %v1836 = vcombine.high %v1826, 0.0
      %v1837 = vcombine.high %v1833, 0.0
      %1839 = vrot.lane.b32.xlu0 %v1766, 16
      %v1840 = vpop.permute.xlu0 %1839
      %1843 = vrot.lane.b32.xlu0 %v1749, 32
      %v1844 = vpop.permute.xlu0 %1843
      %1847 = vrot.lane.b32.xlu0 %v1767, 48
      %v1848 = vpop.permute.xlu0 %1847
      %1851 = vrot.lane.b32.xlu0 %v1758, 64
      %v1852 = vpop.permute.xlu0 %1851
      %1855 = vrot.lane.b32.xlu0 %v1768, 80
      %v1856 = vpop.permute.xlu0 %1855
      %1859 = vrot.lane.b32.xlu0 %v1765, 96
      %v1860 = vpop.permute.xlu0 %1859
      %1863 = vrot.lane.b32.xlu0 %v1769, 112
      %v1864 = vpop.permute.xlu0 %1863
      %1867 = vrot.lane.b32.xlu0 %v1834, 16
      %v1868 = vpop.permute.xlu0 %1867
      %1871 = vrot.lane.b32.xlu0 %v1817, 32
      %v1872 = vpop.permute.xlu0 %1871
      %1875 = vrot.lane.b32.xlu0 %v1835, 48
      %v1876 = vpop.permute.xlu0 %1875
      %1879 = vrot.lane.b32.xlu0 %v1826, 64
      %v1880 = vpop.permute.xlu0 %1879
      %1883 = vrot.lane.b32.xlu0 %v1836, 80
      %v1884 = vpop.permute.xlu0 %1883
      %1887 = vrot.lane.b32.xlu0 %v1833, 96
      %v1888 = vpop.permute.xlu0 %1887
      %1891 = vrot.lane.b32.xlu0 %v1837, 112
      %v1892 = vpop.permute.xlu0 %1891
      %v1894 = vsel %vm930, %v1742, %v1840
      %v1895 = vsel %vm932, %v1894, %v1844
      %v1896 = vsel %vm934, %v1895, %v1848
      %v1897 = vsel %vm936, %v1896, %v1852
      %v1898 = vsel %vm938, %v1897, %v1856
      %v1899 = vsel %vm940, %v1898, %v1860
      %v1900 = vsel %vm942, %v1899, %v1864
      %v1901 = vsel %vm930, %v1810, %v1868
      %v1902 = vsel %vm932, %v1901, %v1872
      %v1903 = vsel %vm934, %v1902, %v1876
      %v1904 = vsel %vm936, %v1903, %v1880
      %v1905 = vsel %vm938, %v1904, %v1884
      %v1906 = vsel %vm940, %v1905, %v1888
      %v1907 = vsel %vm942, %v1906, %v1892
      %1908 = vst [vmem:[#allocation3 + $0x20] sm:$0xf] %v1900
      %1909 = vst [vmem:[#allocation3 + $0x28] sm:$0xf] %v1907
      %1910 = vrot.lane.b32.xlu0 %v1438, 126
      %v1911 = vpop.permute.xlu0 %1910
      %1912 = vrot.lane.b32.xlu0 %v1440, 126
      %v1913 = vpop.permute.xlu0 %1912
      %1914 = vrot.lane.b32.xlu0 %v1443, 126
      %v1915 = vpop.permute.xlu0 %1914
      %1916 = vrot.lane.b32.xlu0 %v1445, 126
      %v1917 = vpop.permute.xlu0 %1916
      %1918 = vrot.lane.b32.xlu0 %v1448, 126
      %v1919 = vpop.permute.xlu0 %1918
      %1920 = vrot.lane.b32.xlu0 %v1450, 126
      %v1921 = vpop.permute.xlu0 %1920
      %1922 = vrot.lane.b32.xlu0 %v1453, 126
      %v1923 = vpop.permute.xlu0 %1922
      %1924 = vrot.lane.b32.xlu0 %v1455, 126
      %v1925 = vpop.permute.xlu0 %1924
      %v1934 = vcombine.low %v1911, %v1919
      %v1935 = vcombine.high %v1911, %v1919
      %v1937 = vunpack.c.l.s4 1983009808
      %v1938 = vunpack.c.0.s8 %v1937
      %v1939 = vlaneseq
      %v1940 = vshrl.u32 %v1939, 7
      %v1941 = vsub.s32 %v1938, %v1940
      %v1942 = vrot.slane %v1934, %v1941
      %v1944 = vunpack.c.l.s4 1983009808
      %v1945 = vunpack.c.0.s8 %v1944
      %v1946 = vlaneseq
      %v1947 = vshrl.u32 %v1946, 7
      %v1948 = vsub.s32 %v1945, %v1947
      %v1949 = vrot.slane %v1935, %v1948
      %v1950 = vcombine.low %v1915, %v1923
      %v1951 = vcombine.high %v1915, %v1923
      %v1953 = vunpack.c.l.s4 1983009808
      %v1954 = vunpack.c.0.s8 %v1953
      %v1955 = vlaneseq
      %v1956 = vshrl.u32 %v1955, 7
      %v1957 = vsub.s32 %v1954, %v1956
      %v1958 = vrot.slane %v1950, %v1957
      %v1960 = vunpack.c.l.s4 1983009808
      %v1961 = vunpack.c.0.s8 %v1960
      %v1962 = vlaneseq
      %v1963 = vshrl.u32 %v1962, 7
      %v1964 = vsub.s32 %v1961, %v1963
      %v1965 = vrot.slane %v1951, %v1964
      %v1966 = vcombine.low %v1942, %v1958
      %v1967 = vcombine.high %v1942, %v1958
      %v1969 = vunpack.c.l.s4 1934713408
      %v1970 = vunpack.c.0.s8 %v1969
      %v1971 = vlaneseq
      %v1972 = vshrl.u32 %v1971, 7
      %v1973 = vsub.s32 %v1970, %v1972
      %v1974 = vrot.slane %v1966, %v1973
      %v1976 = vunpack.c.l.s4 1934713408
      %v1977 = vunpack.c.0.s8 %v1976
      %v1978 = vlaneseq
      %v1979 = vshrl.u32 %v1978, 7
      %v1980 = vsub.s32 %v1977, %v1979
      %v1981 = vrot.slane %v1967, %v1980
      %v1982 = vcombine.low %v1949, %v1965
      %v1983 = vcombine.high %v1949, %v1965
      %v1985 = vunpack.c.l.s4 1934713408
      %v1986 = vunpack.c.0.s8 %v1985
      %v1987 = vlaneseq
      %v1988 = vshrl.u32 %v1987, 7
      %v1989 = vsub.s32 %v1986, %v1988
      %v1990 = vrot.slane %v1982, %v1989
      %v1992 = vunpack.c.l.s4 1934713408
      %v1993 = vunpack.c.0.s8 %v1992
      %v1994 = vlaneseq
      %v1995 = vshrl.u32 %v1994, 7
      %v1996 = vsub.s32 %v1993, %v1995
      %v1997 = vrot.slane %v1983, %v1996
      %v1998 = vcombine.high %v1974, 0.0
      %v1999 = vcombine.high %v1981, 0.0
      %v2000 = vcombine.high %v1990, 0.0
      %v2001 = vcombine.high %v1997, 0.0
      %v2002 = vcombine.low %v1913, %v1921
      %v2003 = vcombine.high %v1913, %v1921
      %v2005 = vunpack.c.l.s4 1983009808
      %v2006 = vunpack.c.0.s8 %v2005
      %v2007 = vlaneseq
      %v2008 = vshrl.u32 %v2007, 7
      %v2009 = vsub.s32 %v2006, %v2008
      %v2010 = vrot.slane %v2002, %v2009
      %v2012 = vunpack.c.l.s4 1983009808
      %v2013 = vunpack.c.0.s8 %v2012
      %v2014 = vlaneseq
      %v2015 = vshrl.u32 %v2014, 7
      %v2016 = vsub.s32 %v2013, %v2015
      %v2017 = vrot.slane %v2003, %v2016
      %v2018 = vcombine.low %v1917, %v1925
      %v2019 = vcombine.high %v1917, %v1925
      %v2021 = vunpack.c.l.s4 1983009808
      %v2022 = vunpack.c.0.s8 %v2021
      %v2023 = vlaneseq
      %v2024 = vshrl.u32 %v2023, 7
      %v2025 = vsub.s32 %v2022, %v2024
      %v2026 = vrot.slane %v2018, %v2025
      %v2028 = vunpack.c.l.s4 1983009808
      %v2029 = vunpack.c.0.s8 %v2028
      %v2030 = vlaneseq
      %v2031 = vshrl.u32 %v2030, 7
      %v2032 = vsub.s32 %v2029, %v2031
      %v2033 = vrot.slane %v2019, %v2032
      %v2034 = vcombine.low %v2010, %v2026
      %v2035 = vcombine.high %v2010, %v2026
      %v2037 = vunpack.c.l.s4 1934713408
      %v2038 = vunpack.c.0.s8 %v2037
      %v2039 = vlaneseq
      %v2040 = vshrl.u32 %v2039, 7
      %v2041 = vsub.s32 %v2038, %v2040
      %v2042 = vrot.slane %v2034, %v2041
      %v2044 = vunpack.c.l.s4 1934713408
      %v2045 = vunpack.c.0.s8 %v2044
      %v2046 = vlaneseq
      %v2047 = vshrl.u32 %v2046, 7
      %v2048 = vsub.s32 %v2045, %v2047
      %v2049 = vrot.slane %v2035, %v2048
      %v2050 = vcombine.low %v2017, %v2033
      %v2051 = vcombine.high %v2017, %v2033
      %v2053 = vunpack.c.l.s4 1934713408
      %v2054 = vunpack.c.0.s8 %v2053
      %v2055 = vlaneseq
      %v2056 = vshrl.u32 %v2055, 7
      %v2057 = vsub.s32 %v2054, %v2056
      %v2058 = vrot.slane %v2050, %v2057
      %v2060 = vunpack.c.l.s4 1934713408
      %v2061 = vunpack.c.0.s8 %v2060
      %v2062 = vlaneseq
      %v2063 = vshrl.u32 %v2062, 7
      %v2064 = vsub.s32 %v2061, %v2063
      %v2065 = vrot.slane %v2051, %v2064
      %v2066 = vcombine.high %v2042, 0.0
      %v2067 = vcombine.high %v2049, 0.0
      %v2068 = vcombine.high %v2058, 0.0
      %v2069 = vcombine.high %v2065, 0.0
      %2071 = vrot.lane.b32.xlu0 %v1998, 16
      %v2072 = vpop.permute.xlu0 %2071
      %2075 = vrot.lane.b32.xlu0 %v1981, 32
      %v2076 = vpop.permute.xlu0 %2075
      %2079 = vrot.lane.b32.xlu0 %v1999, 48
      %v2080 = vpop.permute.xlu0 %2079
      %2083 = vrot.lane.b32.xlu0 %v1990, 64
      %v2084 = vpop.permute.xlu0 %2083
      %2087 = vrot.lane.b32.xlu0 %v2000, 80
      %v2088 = vpop.permute.xlu0 %2087
      %2091 = vrot.lane.b32.xlu0 %v1997, 96
      %v2092 = vpop.permute.xlu0 %2091
      %2095 = vrot.lane.b32.xlu0 %v2001, 112
      %v2096 = vpop.permute.xlu0 %2095
      %2099 = vrot.lane.b32.xlu0 %v2066, 16
      %v2100 = vpop.permute.xlu0 %2099
      %2103 = vrot.lane.b32.xlu0 %v2049, 32
      %v2104 = vpop.permute.xlu0 %2103
      %2107 = vrot.lane.b32.xlu0 %v2067, 48
      %v2108 = vpop.permute.xlu0 %2107
      %2111 = vrot.lane.b32.xlu0 %v2058, 64
      %v2112 = vpop.permute.xlu0 %2111
      %2115 = vrot.lane.b32.xlu0 %v2068, 80
      %v2116 = vpop.permute.xlu0 %2115
      %2119 = vrot.lane.b32.xlu0 %v2065, 96
      %v2120 = vpop.permute.xlu0 %2119
      %2123 = vrot.lane.b32.xlu0 %v2069, 112
      %v2124 = vpop.permute.xlu0 %2123
      %v2126 = vsel %vm930, %v1974, %v2072
      %v2127 = vsel %vm932, %v2126, %v2076
      %v2128 = vsel %vm934, %v2127, %v2080
      %v2129 = vsel %vm936, %v2128, %v2084
      %v2130 = vsel %vm938, %v2129, %v2088
      %v2131 = vsel %vm940, %v2130, %v2092
      %v2132 = vsel %vm942, %v2131, %v2096
      %v2133 = vsel %vm930, %v2042, %v2100
      %v2134 = vsel %vm932, %v2133, %v2104
      %v2135 = vsel %vm934, %v2134, %v2108
      %v2136 = vsel %vm936, %v2135, %v2112
      %v2137 = vsel %vm938, %v2136, %v2116
      %v2138 = vsel %vm940, %v2137, %v2120
      %v2139 = vsel %vm942, %v2138, %v2124
      %v2142 = vrot.slane %v2132, 4
      %v2143 = vrot.slane %v2139, 4
      %2146 = vst [vmem:[#allocation3 + $0x20] sm:$0xf0] %v2142
      %2147 = vst [vmem:[#allocation3 + $0x28] sm:$0xf0] %v2143
      %vm2148 = vcmask 1045504
      %v2149 = vrot.slane %v726, 2
      %v2150 = vrot.slane %v727, 2
      %v2151 = vsel %vm2148, %v2149, %v2150
      %v2152 = vrot.slane %v728, 2
      %v2153 = vsel %vm2148, %v2150, %v2152
      %v2154 = vrot.slane %v729, 2
      %v2155 = vrot.slane %v730, 2
      %v2156 = vsel %vm2148, %v2154, %v2155
      %v2157 = vrot.slane %v731, 2
      %v2158 = vsel %vm2148, %v2155, %v2157
      %v2159 = vrot.slane %v732, 2
      %v2160 = vrot.slane %v733, 2
      %v2161 = vsel %vm2148, %v2159, %v2160
      %v2162 = vrot.slane %v734, 2
      %v2163 = vsel %vm2148, %v2160, %v2162
      %v2164 = vrot.slane %v735, 2
      %v2165 = vrot.slane %v736, 2
      %v2166 = vsel %vm2148, %v2164, %v2165
      %v2167 = vrot.slane %v737, 2
      %v2168 = vsel %vm2148, %v2165, %v2167
      %v2177 = vcombine.low %v2151, %v2161
      %v2178 = vcombine.high %v2151, %v2161
      %v2180 = vunpack.c.l.s4 1983009808
      %v2181 = vunpack.c.0.s8 %v2180
      %v2182 = vlaneseq
      %v2183 = vshrl.u32 %v2182, 7
      %v2184 = vsub.s32 %v2181, %v2183
      %v2185 = vrot.slane %v2177, %v2184
      %v2187 = vunpack.c.l.s4 1983009808
      %v2188 = vunpack.c.0.s8 %v2187
      %v2189 = vlaneseq
      %v2190 = vshrl.u32 %v2189, 7
      %v2191 = vsub.s32 %v2188, %v2190
      %v2192 = vrot.slane %v2178, %v2191
      %v2193 = vcombine.low %v2156, %v2166
      %v2194 = vcombine.high %v2156, %v2166
      %v2196 = vunpack.c.l.s4 1983009808
      %v2197 = vunpack.c.0.s8 %v2196
      %v2198 = vlaneseq
      %v2199 = vshrl.u32 %v2198, 7
      %v2200 = vsub.s32 %v2197, %v2199
      %v2201 = vrot.slane %v2193, %v2200
      %v2203 = vunpack.c.l.s4 1983009808
      %v2204 = vunpack.c.0.s8 %v2203
      %v2205 = vlaneseq
      %v2206 = vshrl.u32 %v2205, 7
      %v2207 = vsub.s32 %v2204, %v2206
      %v2208 = vrot.slane %v2194, %v2207
      %v2209 = vcombine.low %v2185, %v2201
      %v2210 = vcombine.high %v2185, %v2201
      %v2212 = vunpack.c.l.s4 1934713408
      %v2213 = vunpack.c.0.s8 %v2212
      %v2214 = vlaneseq
      %v2215 = vshrl.u32 %v2214, 7
      %v2216 = vsub.s32 %v2213, %v2215
      %v2217 = vrot.slane %v2209, %v2216
      %v2219 = vunpack.c.l.s4 1934713408
      %v2220 = vunpack.c.0.s8 %v2219
      %v2221 = vlaneseq
      %v2222 = vshrl.u32 %v2221, 7
      %v2223 = vsub.s32 %v2220, %v2222
      %v2224 = vrot.slane %v2210, %v2223
      %v2225 = vcombine.low %v2192, %v2208
      %v2226 = vcombine.high %v2192, %v2208
      %v2228 = vunpack.c.l.s4 1934713408
      %v2229 = vunpack.c.0.s8 %v2228
      %v2230 = vlaneseq
      %v2231 = vshrl.u32 %v2230, 7
      %v2232 = vsub.s32 %v2229, %v2231
      %v2233 = vrot.slane %v2225, %v2232
      %v2235 = vunpack.c.l.s4 1934713408
      %v2236 = vunpack.c.0.s8 %v2235
      %v2237 = vlaneseq
      %v2238 = vshrl.u32 %v2237, 7
      %v2239 = vsub.s32 %v2236, %v2238
      %v2240 = vrot.slane %v2226, %v2239
      %v2241 = vcombine.high %v2217, 0.0
      %v2242 = vcombine.high %v2224, 0.0
      %v2243 = vcombine.high %v2233, 0.0
      %v2244 = vcombine.high %v2240, 0.0
      %v2245 = vcombine.low %v2153, %v2163
      %v2246 = vcombine.high %v2153, %v2163
      %v2248 = vunpack.c.l.s4 1983009808
      %v2249 = vunpack.c.0.s8 %v2248
      %v2250 = vlaneseq
      %v2251 = vshrl.u32 %v2250, 7
      %v2252 = vsub.s32 %v2249, %v2251
      %v2253 = vrot.slane %v2245, %v2252
      %v2255 = vunpack.c.l.s4 1983009808
      %v2256 = vunpack.c.0.s8 %v2255
      %v2257 = vlaneseq
      %v2258 = vshrl.u32 %v2257, 7
      %v2259 = vsub.s32 %v2256, %v2258
      %v2260 = vrot.slane %v2246, %v2259
      %v2261 = vcombine.low %v2158, %v2168
      %v2262 = vcombine.high %v2158, %v2168
      %v2264 = vunpack.c.l.s4 1983009808
      %v2265 = vunpack.c.0.s8 %v2264
      %v2266 = vlaneseq
      %v2267 = vshrl.u32 %v2266, 7
      %v2268 = vsub.s32 %v2265, %v2267
      %v2269 = vrot.slane %v2261, %v2268
      %v2271 = vunpack.c.l.s4 1983009808
      %v2272 = vunpack.c.0.s8 %v2271
      %v2273 = vlaneseq
      %v2274 = vshrl.u32 %v2273, 7
      %v2275 = vsub.s32 %v2272, %v2274
      %v2276 = vrot.slane %v2262, %v2275
      %v2277 = vcombine.low %v2253, %v2269
      %v2278 = vcombine.high %v2253, %v2269
      %v2280 = vunpack.c.l.s4 1934713408
      %v2281 = vunpack.c.0.s8 %v2280
      %v2282 = vlaneseq
      %v2283 = vshrl.u32 %v2282, 7
      %v2284 = vsub.s32 %v2281, %v2283
      %v2285 = vrot.slane %v2277, %v2284
      %v2287 = vunpack.c.l.s4 1934713408
      %v2288 = vunpack.c.0.s8 %v2287
      %v2289 = vlaneseq
      %v2290 = vshrl.u32 %v2289, 7
      %v2291 = vsub.s32 %v2288, %v2290
      %v2292 = vrot.slane %v2278, %v2291
      %v2293 = vcombine.low %v2260, %v2276
      %v2294 = vcombine.high %v2260, %v2276
      %v2296 = vunpack.c.l.s4 1934713408
      %v2297 = vunpack.c.0.s8 %v2296
      %v2298 = vlaneseq
      %v2299 = vshrl.u32 %v2298, 7
      %v2300 = vsub.s32 %v2297, %v2299
      %v2301 = vrot.slane %v2293, %v2300
      %v2303 = vunpack.c.l.s4 1934713408
      %v2304 = vunpack.c.0.s8 %v2303
      %v2305 = vlaneseq
      %v2306 = vshrl.u32 %v2305, 7
      %v2307 = vsub.s32 %v2304, %v2306
      %v2308 = vrot.slane %v2294, %v2307
      %v2309 = vcombine.high %v2285, 0.0
      %v2310 = vcombine.high %v2292, 0.0
      %v2311 = vcombine.high %v2301, 0.0
      %v2312 = vcombine.high %v2308, 0.0
      %2314 = vrot.lane.b32.xlu0 %v2241, 16
      %v2315 = vpop.permute.xlu0 %2314
      %2318 = vrot.lane.b32.xlu0 %v2224, 32
      %v2319 = vpop.permute.xlu0 %2318
      %2322 = vrot.lane.b32.xlu0 %v2242, 48
      %v2323 = vpop.permute.xlu0 %2322
      %2326 = vrot.lane.b32.xlu0 %v2233, 64
      %v2327 = vpop.permute.xlu0 %2326
      %2330 = vrot.lane.b32.xlu0 %v2243, 80
      %v2331 = vpop.permute.xlu0 %2330
      %2334 = vrot.lane.b32.xlu0 %v2240, 96
      %v2335 = vpop.permute.xlu0 %2334
      %2338 = vrot.lane.b32.xlu0 %v2244, 112
      %v2339 = vpop.permute.xlu0 %2338
      %2342 = vrot.lane.b32.xlu0 %v2309, 16
      %v2343 = vpop.permute.xlu0 %2342
      %2346 = vrot.lane.b32.xlu0 %v2292, 32
      %v2347 = vpop.permute.xlu0 %2346
      %2350 = vrot.lane.b32.xlu0 %v2310, 48
      %v2351 = vpop.permute.xlu0 %2350
      %2354 = vrot.lane.b32.xlu0 %v2301, 64
      %v2355 = vpop.permute.xlu0 %2354
      %2358 = vrot.lane.b32.xlu0 %v2311, 80
      %v2359 = vpop.permute.xlu0 %2358
      %2362 = vrot.lane.b32.xlu0 %v2308, 96
      %v2363 = vpop.permute.xlu0 %2362
      %2366 = vrot.lane.b32.xlu0 %v2312, 112
      %v2367 = vpop.permute.xlu0 %2366
      %v2369 = vsel %vm930, %v2217, %v2315
      %v2370 = vsel %vm932, %v2369, %v2319
      %v2371 = vsel %vm934, %v2370, %v2323
      %v2372 = vsel %vm936, %v2371, %v2327
      %v2373 = vsel %vm938, %v2372, %v2331
      %v2374 = vsel %vm940, %v2373, %v2335
      %v2375 = vsel %vm942, %v2374, %v2339
      %v2376 = vsel %vm930, %v2285, %v2343
      %v2377 = vsel %vm932, %v2376, %v2347
      %v2378 = vsel %vm934, %v2377, %v2351
      %v2379 = vsel %vm936, %v2378, %v2355
      %v2380 = vsel %vm938, %v2379, %v2359
      %v2381 = vsel %vm940, %v2380, %v2363
      %v2382 = vsel %vm942, %v2381, %v2367
      %2383 = vst [vmem:[#allocation3 + $0x30] sm:$0xf] %v2375
      %2384 = vst [vmem:[#allocation3 + $0x38] sm:$0xf] %v2382
      %2385 = vrot.lane.b32.xlu0 %v2151, 127
      %v2386 = vpop.permute.xlu0 %2385
      %2387 = vrot.lane.b32.xlu0 %v2153, 127
      %v2388 = vpop.permute.xlu0 %2387
      %2389 = vrot.lane.b32.xlu0 %v2156, 127
      %v2390 = vpop.permute.xlu0 %2389
      %2391 = vrot.lane.b32.xlu0 %v2158, 127
      %v2392 = vpop.permute.xlu0 %2391
      %2393 = vrot.lane.b32.xlu0 %v2161, 127
      %v2394 = vpop.permute.xlu0 %2393
      %2395 = vrot.lane.b32.xlu0 %v2163, 127
      %v2396 = vpop.permute.xlu0 %2395
      %2397 = vrot.lane.b32.xlu0 %v2166, 127
      %v2398 = vpop.permute.xlu0 %2397
      %2399 = vrot.lane.b32.xlu0 %v2168, 127
      %v2400 = vpop.permute.xlu0 %2399
      %v2409 = vcombine.low %v2386, %v2394
      %v2410 = vcombine.high %v2386, %v2394
      %v2412 = vunpack.c.l.s4 1983009808
      %v2413 = vunpack.c.0.s8 %v2412
      %v2414 = vlaneseq
      %v2415 = vshrl.u32 %v2414, 7
      %v2416 = vsub.s32 %v2413, %v2415
      %v2417 = vrot.slane %v2409, %v2416
      %v2419 = vunpack.c.l.s4 1983009808
      %v2420 = vunpack.c.0.s8 %v2419
      %v2421 = vlaneseq
      %v2422 = vshrl.u32 %v2421, 7
      %v2423 = vsub.s32 %v2420, %v2422
      %v2424 = vrot.slane %v2410, %v2423
      %v2425 = vcombine.low %v2390, %v2398
      %v2426 = vcombine.high %v2390, %v2398
      %v2428 = vunpack.c.l.s4 1983009808
      %v2429 = vunpack.c.0.s8 %v2428
      %v2430 = vlaneseq
      %v2431 = vshrl.u32 %v2430, 7
      %v2432 = vsub.s32 %v2429, %v2431
      %v2433 = vrot.slane %v2425, %v2432
      %v2435 = vunpack.c.l.s4 1983009808
      %v2436 = vunpack.c.0.s8 %v2435
      %v2437 = vlaneseq
      %v2438 = vshrl.u32 %v2437, 7
      %v2439 = vsub.s32 %v2436, %v2438
      %v2440 = vrot.slane %v2426, %v2439
      %v2441 = vcombine.low %v2417, %v2433
      %v2442 = vcombine.high %v2417, %v2433
      %v2444 = vunpack.c.l.s4 1934713408
      %v2445 = vunpack.c.0.s8 %v2444
      %v2446 = vlaneseq
      %v2447 = vshrl.u32 %v2446, 7
      %v2448 = vsub.s32 %v2445, %v2447
      %v2449 = vrot.slane %v2441, %v2448
      %v2451 = vunpack.c.l.s4 1934713408
      %v2452 = vunpack.c.0.s8 %v2451
      %v2453 = vlaneseq
      %v2454 = vshrl.u32 %v2453, 7
      %v2455 = vsub.s32 %v2452, %v2454
      %v2456 = vrot.slane %v2442, %v2455
      %v2457 = vcombine.low %v2424, %v2440
      %v2458 = vcombine.high %v2424, %v2440
      %v2460 = vunpack.c.l.s4 1934713408
      %v2461 = vunpack.c.0.s8 %v2460
      %v2462 = vlaneseq
      %v2463 = vshrl.u32 %v2462, 7
      %v2464 = vsub.s32 %v2461, %v2463
      %v2465 = vrot.slane %v2457, %v2464
      %v2467 = vunpack.c.l.s4 1934713408
      %v2468 = vunpack.c.0.s8 %v2467
      %v2469 = vlaneseq
      %v2470 = vshrl.u32 %v2469, 7
      %v2471 = vsub.s32 %v2468, %v2470
      %v2472 = vrot.slane %v2458, %v2471
      %v2473 = vcombine.high %v2449, 0.0
      %v2474 = vcombine.high %v2456, 0.0
      %v2475 = vcombine.high %v2465, 0.0
      %v2476 = vcombine.high %v2472, 0.0
      %v2477 = vcombine.low %v2388, %v2396
      %v2478 = vcombine.high %v2388, %v2396
      %v2480 = vunpack.c.l.s4 1983009808
      %v2481 = vunpack.c.0.s8 %v2480
      %v2482 = vlaneseq
      %v2483 = vshrl.u32 %v2482, 7
      %v2484 = vsub.s32 %v2481, %v2483
      %v2485 = vrot.slane %v2477, %v2484
      %v2487 = vunpack.c.l.s4 1983009808
      %v2488 = vunpack.c.0.s8 %v2487
      %v2489 = vlaneseq
      %v2490 = vshrl.u32 %v2489, 7
      %v2491 = vsub.s32 %v2488, %v2490
      %v2492 = vrot.slane %v2478, %v2491
      %v2493 = vcombine.low %v2392, %v2400
      %v2494 = vcombine.high %v2392, %v2400
      %v2496 = vunpack.c.l.s4 1983009808
      %v2497 = vunpack.c.0.s8 %v2496
      %v2498 = vlaneseq
      %v2499 = vshrl.u32 %v2498, 7
      %v2500 = vsub.s32 %v2497, %v2499
      %v2501 = vrot.slane %v2493, %v2500
      %v2503 = vunpack.c.l.s4 1983009808
      %v2504 = vunpack.c.0.s8 %v2503
      %v2505 = vlaneseq
      %v2506 = vshrl.u32 %v2505, 7
      %v2507 = vsub.s32 %v2504, %v2506
      %v2508 = vrot.slane %v2494, %v2507
      %v2509 = vcombine.low %v2485, %v2501
      %v2510 = vcombine.high %v2485, %v2501
      %v2512 = vunpack.c.l.s4 1934713408
      %v2513 = vunpack.c.0.s8 %v2512
      %v2514 = vlaneseq
      %v2515 = vshrl.u32 %v2514, 7
      %v2516 = vsub.s32 %v2513, %v2515
      %v2517 = vrot.slane %v2509, %v2516
      %v2519 = vunpack.c.l.s4 1934713408
      %v2520 = vunpack.c.0.s8 %v2519
      %v2521 = vlaneseq
      %v2522 = vshrl.u32 %v2521, 7
      %v2523 = vsub.s32 %v2520, %v2522
      %v2524 = vrot.slane %v2510, %v2523
      %v2525 = vcombine.low %v2492, %v2508
      %v2526 = vcombine.high %v2492, %v2508
      %v2528 = vunpack.c.l.s4 1934713408
      %v2529 = vunpack.c.0.s8 %v2528
      %v2530 = vlaneseq
      %v2531 = vshrl.u32 %v2530, 7
      %v2532 = vsub.s32 %v2529, %v2531
      %v2533 = vrot.slane %v2525, %v2532
      %v2535 = vunpack.c.l.s4 1934713408
      %v2536 = vunpack.c.0.s8 %v2535
      %v2537 = vlaneseq
      %v2538 = vshrl.u32 %v2537, 7
      %v2539 = vsub.s32 %v2536, %v2538
      %v2540 = vrot.slane %v2526, %v2539
      %v2541 = vcombine.high %v2517, 0.0
      %v2542 = vcombine.high %v2524, 0.0
      %v2543 = vcombine.high %v2533, 0.0
      %v2544 = vcombine.high %v2540, 0.0
      %2546 = vrot.lane.b32.xlu0 %v2473, 16
      %v2547 = vpop.permute.xlu0 %2546
      %2550 = vrot.lane.b32.xlu0 %v2456, 32
      %v2551 = vpop.permute.xlu0 %2550
      %2554 = vrot.lane.b32.xlu0 %v2474, 48
      %v2555 = vpop.permute.xlu0 %2554
      %2558 = vrot.lane.b32.xlu0 %v2465, 64
      %v2559 = vpop.permute.xlu0 %2558
      %2562 = vrot.lane.b32.xlu0 %v2475, 80
      %v2563 = vpop.permute.xlu0 %2562
      %2566 = vrot.lane.b32.xlu0 %v2472, 96
      %v2567 = vpop.permute.xlu0 %2566
      %2570 = vrot.lane.b32.xlu0 %v2476, 112
      %v2571 = vpop.permute.xlu0 %2570
      %2574 = vrot.lane.b32.xlu0 %v2541, 16
      %v2575 = vpop.permute.xlu0 %2574
      %2578 = vrot.lane.b32.xlu0 %v2524, 32
      %v2579 = vpop.permute.xlu0 %2578
      %2582 = vrot.lane.b32.xlu0 %v2542, 48
      %v2583 = vpop.permute.xlu0 %2582
      %2586 = vrot.lane.b32.xlu0 %v2533, 64
      %v2587 = vpop.permute.xlu0 %2586
      %2590 = vrot.lane.b32.xlu0 %v2543, 80
      %v2591 = vpop.permute.xlu0 %2590
      %2594 = vrot.lane.b32.xlu0 %v2540, 96
      %v2595 = vpop.permute.xlu0 %2594
      %2598 = vrot.lane.b32.xlu0 %v2544, 112
      %v2599 = vpop.permute.xlu0 %2598
      %v2601 = vsel %vm930, %v2449, %v2547
      %v2602 = vsel %vm932, %v2601, %v2551
      %v2603 = vsel %vm934, %v2602, %v2555
      %v2604 = vsel %vm936, %v2603, %v2559
      %v2605 = vsel %vm938, %v2604, %v2563
      %v2606 = vsel %vm940, %v2605, %v2567
      %v2607 = vsel %vm942, %v2606, %v2571
      %v2608 = vsel %vm930, %v2517, %v2575
      %v2609 = vsel %vm932, %v2608, %v2579
      %v2610 = vsel %vm934, %v2609, %v2583
      %v2611 = vsel %vm936, %v2610, %v2587
      %v2612 = vsel %vm938, %v2611, %v2591
      %v2613 = vsel %vm940, %v2612, %v2595
      %v2614 = vsel %vm942, %v2613, %v2599
      %v2617 = vrot.slane %v2607, 4
      %v2618 = vrot.slane %v2614, 4
      %2621 = vst [vmem:[#allocation3 + $0x30] sm:$0xf0] %v2617
      %2622 = vst [vmem:[#allocation3 + $0x38] sm:$0xf0] %v2618
      %2623 = vrot.lane.b32.xlu0 %v2151, 126
      %v2624 = vpop.permute.xlu0 %2623
      %2625 = vrot.lane.b32.xlu0 %v2153, 126
      %v2626 = vpop.permute.xlu0 %2625
      %2627 = vrot.lane.b32.xlu0 %v2156, 126
      %v2628 = vpop.permute.xlu0 %2627
      %2629 = vrot.lane.b32.xlu0 %v2158, 126
      %v2630 = vpop.permute.xlu0 %2629
      %2631 = vrot.lane.b32.xlu0 %v2161, 126
      %v2632 = vpop.permute.xlu0 %2631
      %2633 = vrot.lane.b32.xlu0 %v2163, 126
      %v2634 = vpop.permute.xlu0 %2633
      %2635 = vrot.lane.b32.xlu0 %v2166, 126
      %v2636 = vpop.permute.xlu0 %2635
      %2637 = vrot.lane.b32.xlu0 %v2168, 126
      %v2638 = vpop.permute.xlu0 %2637
      %v2647 = vcombine.low %v2624, %v2632
      %v2648 = vcombine.high %v2624, %v2632
      %v2650 = vunpack.c.l.s4 1983009808
      %v2651 = vunpack.c.0.s8 %v2650
      %v2652 = vlaneseq
      %v2653 = vshrl.u32 %v2652, 7
      %v2654 = vsub.s32 %v2651, %v2653
      %v2655 = vrot.slane %v2647, %v2654
      %v2657 = vunpack.c.l.s4 1983009808
      %v2658 = vunpack.c.0.s8 %v2657
      %v2659 = vlaneseq
      %v2660 = vshrl.u32 %v2659, 7
      %v2661 = vsub.s32 %v2658, %v2660
      %v2662 = vrot.slane %v2648, %v2661
      %v2663 = vcombine.low %v2628, %v2636
      %v2664 = vcombine.high %v2628, %v2636
      %v2666 = vunpack.c.l.s4 1983009808
      %v2667 = vunpack.c.0.s8 %v2666
      %v2668 = vlaneseq
      %v2669 = vshrl.u32 %v2668, 7
      %v2670 = vsub.s32 %v2667, %v2669
      %v2671 = vrot.slane %v2663, %v2670
      %v2673 = vunpack.c.l.s4 1983009808
      %v2674 = vunpack.c.0.s8 %v2673
      %v2675 = vlaneseq
      %v2676 = vshrl.u32 %v2675, 7
      %v2677 = vsub.s32 %v2674, %v2676
      %v2678 = vrot.slane %v2664, %v2677
      %v2679 = vcombine.low %v2655, %v2671
      %v2680 = vcombine.high %v2655, %v2671
      %v2682 = vunpack.c.l.s4 1934713408
      %v2683 = vunpack.c.0.s8 %v2682
      %v2684 = vlaneseq
      %v2685 = vshrl.u32 %v2684, 7
      %v2686 = vsub.s32 %v2683, %v2685
      %v2687 = vrot.slane %v2679, %v2686
      %v2689 = vunpack.c.l.s4 1934713408
      %v2690 = vunpack.c.0.s8 %v2689
      %v2691 = vlaneseq
      %v2692 = vshrl.u32 %v2691, 7
      %v2693 = vsub.s32 %v2690, %v2692
      %v2694 = vrot.slane %v2680, %v2693
      %v2695 = vcombine.low %v2662, %v2678
      %v2696 = vcombine.high %v2662, %v2678
      %v2698 = vunpack.c.l.s4 1934713408
      %v2699 = vunpack.c.0.s8 %v2698
      %v2700 = vlaneseq
      %v2701 = vshrl.u32 %v2700, 7
      %v2702 = vsub.s32 %v2699, %v2701
      %v2703 = vrot.slane %v2695, %v2702
      %v2705 = vunpack.c.l.s4 1934713408
      %v2706 = vunpack.c.0.s8 %v2705
      %v2707 = vlaneseq
      %v2708 = vshrl.u32 %v2707, 7
      %v2709 = vsub.s32 %v2706, %v2708
      %v2710 = vrot.slane %v2696, %v2709
      %v2711 = vcombine.high %v2687, 0.0
      %v2712 = vcombine.high %v2694, 0.0
      %v2713 = vcombine.high %v2703, 0.0
      %v2714 = vcombine.high %v2710, 0.0
      %v2715 = vcombine.low %v2626, %v2634
      %v2716 = vcombine.high %v2626, %v2634
      %v2718 = vunpack.c.l.s4 1983009808
      %v2719 = vunpack.c.0.s8 %v2718
      %v2720 = vlaneseq
      %v2721 = vshrl.u32 %v2720, 7
      %v2722 = vsub.s32 %v2719, %v2721
      %v2723 = vrot.slane %v2715, %v2722
      %v2725 = vunpack.c.l.s4 1983009808
      %v2726 = vunpack.c.0.s8 %v2725
      %v2727 = vlaneseq
      %v2728 = vshrl.u32 %v2727, 7
      %v2729 = vsub.s32 %v2726, %v2728
      %v2730 = vrot.slane %v2716, %v2729
      %v2731 = vcombine.low %v2630, %v2638
      %v2732 = vcombine.high %v2630, %v2638
      %v2734 = vunpack.c.l.s4 1983009808
      %v2735 = vunpack.c.0.s8 %v2734
      %v2736 = vlaneseq
      %v2737 = vshrl.u32 %v2736, 7
      %v2738 = vsub.s32 %v2735, %v2737
      %v2739 = vrot.slane %v2731, %v2738
      %v2741 = vunpack.c.l.s4 1983009808
      %v2742 = vunpack.c.0.s8 %v2741
      %v2743 = vlaneseq
      %v2744 = vshrl.u32 %v2743, 7
      %v2745 = vsub.s32 %v2742, %v2744
      %v2746 = vrot.slane %v2732, %v2745
      %v2747 = vcombine.low %v2723, %v2739
      %v2748 = vcombine.high %v2723, %v2739
      %v2750 = vunpack.c.l.s4 1934713408
      %v2751 = vunpack.c.0.s8 %v2750
      %v2752 = vlaneseq
      %v2753 = vshrl.u32 %v2752, 7
      %v2754 = vsub.s32 %v2751, %v2753
      %v2755 = vrot.slane %v2747, %v2754
      %v2757 = vunpack.c.l.s4 1934713408
      %v2758 = vunpack.c.0.s8 %v2757
      %v2759 = vlaneseq
      %v2760 = vshrl.u32 %v2759, 7
      %v2761 = vsub.s32 %v2758, %v2760
      %v2762 = vrot.slane %v2748, %v2761
      %v2763 = vcombine.low %v2730, %v2746
      %v2764 = vcombine.high %v2730, %v2746
      %v2766 = vunpack.c.l.s4 1934713408
      %v2767 = vunpack.c.0.s8 %v2766
      %v2768 = vlaneseq
      %v2769 = vshrl.u32 %v2768, 7
      %v2770 = vsub.s32 %v2767, %v2769
      %v2771 = vrot.slane %v2763, %v2770
      %v2773 = vunpack.c.l.s4 1934713408
      %v2774 = vunpack.c.0.s8 %v2773
      %v2775 = vlaneseq
      %v2776 = vshrl.u32 %v2775, 7
      %v2777 = vsub.s32 %v2774, %v2776
      %v2778 = vrot.slane %v2764, %v2777
      %v2779 = vcombine.high %v2755, 0.0
      %v2780 = vcombine.high %v2762, 0.0
      %v2781 = vcombine.high %v2771, 0.0
      %v2782 = vcombine.high %v2778, 0.0
      %2784 = vrot.lane.b32.xlu0 %v2711, 16
      %v2785 = vpop.permute.xlu0 %2784
      %2788 = vrot.lane.b32.xlu0 %v2694, 32
      %v2789 = vpop.permute.xlu0 %2788
      %2792 = vrot.lane.b32.xlu0 %v2712, 48
      %v2793 = vpop.permute.xlu0 %2792
      %2796 = vrot.lane.b32.xlu0 %v2703, 64
      %v2797 = vpop.permute.xlu0 %2796
      %2800 = vrot.lane.b32.xlu0 %v2713, 80
      %v2801 = vpop.permute.xlu0 %2800
      %2804 = vrot.lane.b32.xlu0 %v2710, 96
      %v2805 = vpop.permute.xlu0 %2804
      %2808 = vrot.lane.b32.xlu0 %v2714, 112
      %v2809 = vpop.permute.xlu0 %2808
      %2812 = vrot.lane.b32.xlu0 %v2779, 16
      %v2813 = vpop.permute.xlu0 %2812
      %2816 = vrot.lane.b32.xlu0 %v2762, 32
      %v2817 = vpop.permute.xlu0 %2816
      %2820 = vrot.lane.b32.xlu0 %v2780, 48
      %v2821 = vpop.permute.xlu0 %2820
      %2824 = vrot.lane.b32.xlu0 %v2771, 64
      %v2825 = vpop.permute.xlu0 %2824
      %2828 = vrot.lane.b32.xlu0 %v2781, 80
      %v2829 = vpop.permute.xlu0 %2828
      %2832 = vrot.lane.b32.xlu0 %v2778, 96
      %v2833 = vpop.permute.xlu0 %2832
      %2836 = vrot.lane.b32.xlu0 %v2782, 112
      %v2837 = vpop.permute.xlu0 %2836
      %v2839 = vsel %vm930, %v2687, %v2785
      %v2840 = vsel %vm932, %v2839, %v2789
      %v2841 = vsel %vm934, %v2840, %v2793
      %v2842 = vsel %vm936, %v2841, %v2797
      %v2843 = vsel %vm938, %v2842, %v2801
      %v2844 = vsel %vm940, %v2843, %v2805
      %v2845 = vsel %vm942, %v2844, %v2809
      %v2846 = vsel %vm930, %v2755, %v2813
      %v2847 = vsel %vm932, %v2846, %v2817
      %v2848 = vsel %vm934, %v2847, %v2821
      %v2849 = vsel %vm936, %v2848, %v2825
      %v2850 = vsel %vm938, %v2849, %v2829
      %v2851 = vsel %vm940, %v2850, %v2833
      %v2852 = vsel %vm942, %v2851, %v2837
      %2853 = vst [vmem:[#allocation3 + $0x40] sm:$0xf] %v2845
      %2854 = vst [vmem:[#allocation3 + $0x48] sm:$0xf] %v2852
      %v2855 = vld [vmem:[%s1] sm:$0x3]
      %v2856 = vld [vmem:[#allocation3] sm:$0xff]
      %v2857 = vld [vmem:[#allocation3 + $0x8] sm:$0xff]
      %v2858 = vld [vmem:[#allocation3 + $0x10] sm:$0xff]
      %v2859 = vld [vmem:[#allocation3 + $0x18] sm:$0xff]
      %v2860 = vld [vmem:[#allocation3 + $0x20] sm:$0xff]
      %v2861 = vld [vmem:[#allocation3 + $0x28] sm:$0xff]
      %v2862 = vld [vmem:[#allocation3 + $0x30] sm:$0xff]
      %v2863 = vld [vmem:[#allocation3 + $0x38] sm:$0xff]
      %v2864 = vld [vmem:[#allocation3 + $0x40] sm:$0xf]
      %v2865 = vld [vmem:[#allocation3 + $0x48] sm:$0xf]
      %v2866 = vpack.c.bf16 %v2858, %v2856
      %v2867 = vpack.c.bf16 %v2859, %v2857
      %v2868 = vpack.c.bf16 %v2862, %v2860
      %v2869 = vpack.c.bf16 %v2863, %v2861
      %v2870 = vpack.c.bf16 %v2864, %v2864
      %v2871 = vpack.c.bf16 %v2865, %v2865
      %vm2872 = vcmask 293888
      %v2874 = vsel %vm2872, %v2855, 0
      %vm2876 = vcmask 1041408
      %v2878 = vsel %vm2876, %v2870, 0
      %v2881 = vsel %vm2876, %v2871, 0
      %2883 = vmatprep.subr.bf16.mxu0 %v2867
      %2884 = vmatpush1.bf16.msra.mxu0 %v2866
      %2885 = vmatprep.subr.bf16.mxu0 %v2869
      %2886 = vmatpush1.bf16.msra.mxu0 %v2868
      %2887 = vmatprep.subr.bf16.mxu0 %v2881
      %2888 = vmatpush1.bf16.msra.mxu0 %v2878
      %2889 = vmatprep.subr.bf16.mxu0 0
      %2890 = vmatpush1.bf16.msra.mxu0 0
      %2891 = vmatprep.subr.bf16.mxu0 0
      %2892 = vmatpush1.bf16.msra.mxu0 0
      %2893 = vmatprep.subr.bf16.mxu0 0
      %2894 = vmatpush1.bf16.msra.mxu0 0
      %2895 = vmatprep.subr.bf16.mxu0 0
      %2896 = vmatpush1.bf16.msra.mxu0 0
      %2897 = vmatprep.subr.bf16.mxu0 0
      %2898 = vmatpush1.bf16.msra.mxu0 0
      %2899 = vmatprep.subr.bf16.mxu0 0
      %2900 = vmatpush1.bf16.msra.mxu0 0
      %2901 = vmatprep.subr.bf16.mxu0 0
      %2902 = vmatpush1.bf16.msra.mxu0 0
      %2903 = vmatprep.subr.bf16.mxu0 0
      %2904 = vmatpush1.bf16.msra.mxu0 0
      %2905 = vmatprep.subr.bf16.mxu0 0
      %2906 = vmatpush1.bf16.msra.mxu0 0
      %2907 = vmatprep.subr.bf16.mxu0 0
      %2908 = vmatpush1.bf16.msra.mxu0 0
      %2909 = vmatprep.subr.bf16.mxu0 0
      %2910 = vmatpush1.bf16.msra.mxu0 0
      %2911 = vmatprep.subr.bf16.mxu0 0
      %2912 = vmatpush1.bf16.msra.mxu0 0
      %2913 = vmatprep.subr.bf16.mxu0 0
      %2914 = vmatpush1.bf16.msra.mxu0 0
      %2915 = vmatprep.mubr.bf16.mxu0 0
      %2916 = vmatmul.mubr.bf16.gmra.mrb[0].mxu0 %v2874
      %v2917 = vpop.f32.mrb[0].mxu0
      %v2918 = vadd.f32 0.0, %v2917
      %v2919 = vpop.f32.mrb[0].mxu0
      %v2920 = vadd.f32 0.0, %v2919
      %v2921 = vpop.f32.mrb[0].mxu0
      %v2922 = vpop.f32.mrb[0].mxu0
      %2923 = vdwg.mxu0
      %v2924 = vld [vmem:[%s2] sm:$0xf]
      %v2925 = vld [vmem:[%s3] sm:$0xf]
      %vm2926 = vcmask 1043456
      %v2927 = vsel %vm2926, %v2918, 0.0
      %v2928 = vsel %vm2926, %v2920, 0.0
      %v2929 = vadd.f32 %v2927, %v2928
      %2930 = vadd.xlane.f32.xlu0 %v2929
      %v2931 = vpop.xlane.xlu0 %2930
      %v2932 = vmul.f32 %v2931, 0.00390625
      %v2933 = vmul.f32 %v2918, %v2918
      %v2934 = vmul.f32 %v2920, %v2920
      %v2935 = vsel %vm2926, %v2933, 0.0
      %v2936 = vsel %vm2926, %v2934, 0.0
      %v2937 = vadd.f32 %v2935, %v2936
      %2938 = vadd.xlane.f32.xlu0 %v2937
      %v2939 = vpop.xlane.xlu0 %2938
      %v2940 = vmul.f32 %v2939, 0.00390625
      %v2941 = vmul.f32 %v2932, %v2932
      %v2942 = vsub.f32 %v2940, %v2941
      %v2943 = vadd.f32 %v2942, 1e-05
      %v2944 = vrsqrt.pop %v2943
      %v2945 = vmul.f32 %v2924, %v2944
      %2947 = vset.pattern.permute.xlu0 0
      %2948 = vperm.xlu0 %2947, %v2945
      %v2949 = vpop.permute.xlu0 %2948
      %v2951 = vmul.f32 %v2918, %v2949
      %v2952 = vmul.f32 %v2920, %v2949
      %v2953 = vmul.f32 %v2932, %v2945
      %v2954 = vsub.f32 %v2925, %v2953
      %2956 = vset.pattern.permute.xlu0 0
      %2957 = vperm.xlu0 %2956, %v2954
      %v2958 = vpop.permute.xlu0 %2957
      %v2960 = vadd.f32 %v2951, %v2958
      %v2961 = vadd.f32 %v2952, %v2958
      %v2962 = vmax.f32 %v2960, 0.0
      %v2963 = vmax.f32 %v2961, 0.0
      %2965 = vrot.lane.b32.xlu0 %v2962, 112
      %v2966 = vpop.permute.xlu0 %2965
      %2968 = vrot.lane.b32.xlu0 %v2962, 96
      %v2969 = vpop.permute.xlu0 %2968
      %2971 = vrot.lane.b32.xlu0 %v2962, 80
      %v2972 = vpop.permute.xlu0 %2971
      %2974 = vrot.lane.b32.xlu0 %v2962, 64
      %v2975 = vpop.permute.xlu0 %2974
      %2977 = vrot.lane.b32.xlu0 %v2962, 48
      %v2978 = vpop.permute.xlu0 %2977
      %2980 = vrot.lane.b32.xlu0 %v2962, 32
      %v2981 = vpop.permute.xlu0 %2980
      %2983 = vrot.lane.b32.xlu0 %v2962, 16
      %v2984 = vpop.permute.xlu0 %2983
      %2987 = vrot.lane.b32.xlu0 %v2963, 112
      %v2988 = vpop.permute.xlu0 %2987
      %2990 = vrot.lane.b32.xlu0 %v2963, 96
      %v2991 = vpop.permute.xlu0 %2990
      %2993 = vrot.lane.b32.xlu0 %v2963, 80
      %v2994 = vpop.permute.xlu0 %2993
      %2996 = vrot.lane.b32.xlu0 %v2963, 64
      %v2997 = vpop.permute.xlu0 %2996
      %2999 = vrot.lane.b32.xlu0 %v2963, 48
      %v3000 = vpop.permute.xlu0 %2999
      %3002 = vrot.lane.b32.xlu0 %v2963, 32
      %v3003 = vpop.permute.xlu0 %3002
      %3005 = vrot.lane.b32.xlu0 %v2963, 16
      %v3006 = vpop.permute.xlu0 %3005
      %v3008 = vcombine.low %v2962, %v2969
      %v3010 = vunpack.c.l.s4 1983009808
      %v3011 = vunpack.c.0.s8 %v3010
      %v3012 = vlaneseq
      %v3013 = vshrl.u32 %v3012, 7
      %v3014 = vsub.s32 %v3011, %v3013
      %v3015 = vrot.slane %v3008, %v3014
      %v3016 = vcombine.low %v2966, %v2972
      %v3018 = vunpack.c.l.s4 1983009808
      %v3019 = vunpack.c.0.s8 %v3018
      %v3020 = vlaneseq
      %v3021 = vshrl.u32 %v3020, 7
      %v3022 = vsub.s32 %v3019, %v3021
      %v3023 = vrot.slane %v3016, %v3022
      %v3024 = vcombine.low %v2975, %v2981
      %v3026 = vunpack.c.l.s4 1983009808
      %v3027 = vunpack.c.0.s8 %v3026
      %v3028 = vlaneseq
      %v3029 = vshrl.u32 %v3028, 7
      %v3030 = vsub.s32 %v3027, %v3029
      %v3031 = vrot.slane %v3024, %v3030
      %v3032 = vcombine.low %v2978, %v2984
      %v3034 = vunpack.c.l.s4 1983009808
      %v3035 = vunpack.c.0.s8 %v3034
      %v3036 = vlaneseq
      %v3037 = vshrl.u32 %v3036, 7
      %v3038 = vsub.s32 %v3035, %v3037
      %v3039 = vrot.slane %v3032, %v3038
      %v3040 = vcombine.low %v3015, %v3023
      %v3041 = vcombine.high %v3015, %v3023
      %v3043 = vunpack.c.l.s4 1934713408
      %v3044 = vunpack.c.0.s8 %v3043
      %v3045 = vlaneseq
      %v3046 = vshrl.u32 %v3045, 7
      %v3047 = vsub.s32 %v3044, %v3046
      %v3048 = vrot.slane %v3040, %v3047
      %v3050 = vunpack.c.l.s4 1934713408
      %v3051 = vunpack.c.0.s8 %v3050
      %v3052 = vlaneseq
      %v3053 = vshrl.u32 %v3052, 7
      %v3054 = vsub.s32 %v3051, %v3053
      %v3055 = vrot.slane %v3041, %v3054
      %v3056 = vcombine.low %v3031, %v3039
      %v3057 = vcombine.high %v3031, %v3039
      %v3059 = vunpack.c.l.s4 1934713408
      %v3060 = vunpack.c.0.s8 %v3059
      %v3061 = vlaneseq
      %v3062 = vshrl.u32 %v3061, 7
      %v3063 = vsub.s32 %v3060, %v3062
      %v3064 = vrot.slane %v3056, %v3063
      %v3066 = vunpack.c.l.s4 1934713408
      %v3067 = vunpack.c.0.s8 %v3066
      %v3068 = vlaneseq
      %v3069 = vshrl.u32 %v3068, 7
      %v3070 = vsub.s32 %v3067, %v3069
      %v3071 = vrot.slane %v3057, %v3070
      %v3072 = vcombine.low %v3048, %v3064
      %v3073 = vcombine.high %v3048, %v3064
      %v3074 = vcombine.low %v3055, %v3071
      %v3075 = vcombine.high %v3055, %v3071
      %v3076 = vcombine.low %v2963, %v2991
      %v3078 = vunpack.c.l.s4 1983009808
      %v3079 = vunpack.c.0.s8 %v3078
      %v3080 = vlaneseq
      %v3081 = vshrl.u32 %v3080, 7
      %v3082 = vsub.s32 %v3079, %v3081
      %v3083 = vrot.slane %v3076, %v3082
      %v3084 = vcombine.low %v2988, %v2994
      %v3086 = vunpack.c.l.s4 1983009808
      %v3087 = vunpack.c.0.s8 %v3086
      %v3088 = vlaneseq
      %v3089 = vshrl.u32 %v3088, 7
      %v3090 = vsub.s32 %v3087, %v3089
      %v3091 = vrot.slane %v3084, %v3090
      %v3092 = vcombine.low %v2997, %v3003
      %v3094 = vunpack.c.l.s4 1983009808
      %v3095 = vunpack.c.0.s8 %v3094
      %v3096 = vlaneseq
      %v3097 = vshrl.u32 %v3096, 7
      %v3098 = vsub.s32 %v3095, %v3097
      %v3099 = vrot.slane %v3092, %v3098
      %v3100 = vcombine.low %v3000, %v3006
      %v3102 = vunpack.c.l.s4 1983009808
      %v3103 = vunpack.c.0.s8 %v3102
      %v3104 = vlaneseq
      %v3105 = vshrl.u32 %v3104, 7
      %v3106 = vsub.s32 %v3103, %v3105
      %v3107 = vrot.slane %v3100, %v3106
      %v3108 = vcombine.low %v3083, %v3091
      %v3109 = vcombine.high %v3083, %v3091
      %v3111 = vunpack.c.l.s4 1934713408
      %v3112 = vunpack.c.0.s8 %v3111
      %v3113 = vlaneseq
      %v3114 = vshrl.u32 %v3113, 7
      %v3115 = vsub.s32 %v3112, %v3114
      %v3116 = vrot.slane %v3108, %v3115
      %v3118 = vunpack.c.l.s4 1934713408
      %v3119 = vunpack.c.0.s8 %v3118
      %v3120 = vlaneseq
      %v3121 = vshrl.u32 %v3120, 7
      %v3122 = vsub.s32 %v3119, %v3121
      %v3123 = vrot.slane %v3109, %v3122
      %v3124 = vcombine.low %v3099, %v3107
      %v3125 = vcombine.high %v3099, %v3107
      %v3127 = vunpack.c.l.s4 1934713408
      %v3128 = vunpack.c.0.s8 %v3127
      %v3129 = vlaneseq
      %v3130 = vshrl.u32 %v3129, 7
      %v3131 = vsub.s32 %v3128, %v3130
      %v3132 = vrot.slane %v3124, %v3131
      %v3134 = vunpack.c.l.s4 1934713408
      %v3135 = vunpack.c.0.s8 %v3134
      %v3136 = vlaneseq
      %v3137 = vshrl.u32 %v3136, 7
      %v3138 = vsub.s32 %v3135, %v3137
      %v3139 = vrot.slane %v3125, %v3138
      %v3140 = vcombine.low %v3116, %v3132
      %v3141 = vcombine.high %v3116, %v3132
      %v3142 = vcombine.low %v3123, %v3139
      %v3143 = vcombine.high %v3123, %v3139
      %3152 = vrot.lane.b32.xlu0 %v3072, 1
      %v3153 = vpop.permute.xlu0 %3152
      %3154 = vrot.lane.b32.xlu0 %v3140, 1
      %v3155 = vpop.permute.xlu0 %3154
      %3156 = vrot.lane.b32.xlu0 %v3073, 1
      %v3157 = vpop.permute.xlu0 %3156
      %3158 = vrot.lane.b32.xlu0 %v3141, 1
      %v3159 = vpop.permute.xlu0 %3158
      %3160 = vrot.lane.b32.xlu0 %v3074, 1
      %v3161 = vpop.permute.xlu0 %3160
      %3162 = vrot.lane.b32.xlu0 %v3142, 1
      %v3163 = vpop.permute.xlu0 %3162
      %3164 = vrot.lane.b32.xlu0 %v3075, 1
      %v3165 = vpop.permute.xlu0 %3164
      %3166 = vrot.lane.b32.xlu0 %v3143, 1
      %v3167 = vpop.permute.xlu0 %3166
      %3176 = vst.msk [vmem:[#allocation2 + $0x1] sm:$0xff] %vm503, %v3153
      %3177 = vst.msk [vmem:[#allocation2 + $0x9] sm:$0xff] %vm503, %v3155
      %3178 = vst.msk [vmem:[#allocation2 + $0x19] sm:$0xff] %vm503, %v3157
      %3179 = vst.msk [vmem:[#allocation2 + $0x21] sm:$0xff] %vm503, %v3159
      %3180 = vst.msk [vmem:[#allocation2 + $0x31] sm:$0xff] %vm503, %v3161
      %3181 = vst.msk [vmem:[#allocation2 + $0x39] sm:$0xff] %vm503, %v3163
      %3182 = vst.msk [vmem:[#allocation2 + $0x49] sm:$0xff] %vm503, %v3165
      %3183 = vst.msk [vmem:[#allocation2 + $0x51] sm:$0xff] %vm503, %v3167
      %3184 = vst.msk [vmem:[#allocation2 - $0x1] sm:$0x2] %vm540, %v3153
      %3185 = vst.msk [vmem:[#allocation2 + $0x17] sm:$0x2] %vm540, %v3157
      %3186 = vst.msk [vmem:[#allocation2 + $0x2f] sm:$0x2] %vm540, %v3161
      %3187 = vst.msk [vmem:[#allocation2 + $0x47] sm:$0x2] %vm540, %v3165
      %vm3188 = vcmask 137230
      %3189 = vst.msk [vmem:[#allocation2 + $0xb] sm:$0x40] %vm3188, %v3155
      %3190 = vst.msk [vmem:[#allocation2 + $0x23] sm:$0x40] %vm3188, %v3159
      %3191 = vst.msk [vmem:[#allocation2 + $0x3b] sm:$0x40] %vm3188, %v3163
      %3192 = vst.msk [vmem:[#allocation2 + $0x53] sm:$0x40] %vm3188, %v3167
      %v3193 = vld [vmem:[#allocation2] sm:$0xff]
      %v3194 = vld [vmem:[#allocation2 + $0x8] sm:$0xff]
      %v3195 = vld [vmem:[#allocation2 + $0x10] sm:$0x3]
      %v3196 = vld [vmem:[#allocation2 + $0x18] sm:$0xff]
      %v3197 = vld [vmem:[#allocation2 + $0x20] sm:$0xff]
      %v3198 = vld [vmem:[#allocation2 + $0x28] sm:$0x3]
      %v3199 = vld [vmem:[#allocation2 + $0x30] sm:$0xff]
      %v3200 = vld [vmem:[#allocation2 + $0x38] sm:$0xff]
      %v3201 = vld [vmem:[#allocation2 + $0x40] sm:$0x3]
      %v3202 = vld [vmem:[#allocation2 + $0x48] sm:$0xff]
      %v3203 = vld [vmem:[#allocation2 + $0x50] sm:$0xff]
      %v3204 = vld [vmem:[#allocation2 + $0x58] sm:$0x3]
      %3217 = vrot.lane.b32.xlu0 %v3193, 126
      %v3218 = vpop.permute.xlu0 %3217
      %3219 = vrot.lane.b32.xlu0 %v3194, 126
      %v3220 = vpop.permute.xlu0 %3219
      %3221 = vrot.lane.b32.xlu0 %v3195, 126
      %v3222 = vpop.permute.xlu0 %3221
      %3223 = vrot.lane.b32.xlu0 %v3196, 126
      %v3224 = vpop.permute.xlu0 %3223
      %3225 = vrot.lane.b32.xlu0 %v3197, 126
      %v3226 = vpop.permute.xlu0 %3225
      %3227 = vrot.lane.b32.xlu0 %v3198, 126
      %v3228 = vpop.permute.xlu0 %3227
      %3229 = vrot.lane.b32.xlu0 %v3199, 126
      %v3230 = vpop.permute.xlu0 %3229
      %3231 = vrot.lane.b32.xlu0 %v3200, 126
      %v3232 = vpop.permute.xlu0 %3231
      %3233 = vrot.lane.b32.xlu0 %v3201, 126
      %v3234 = vpop.permute.xlu0 %3233
      %3235 = vrot.lane.b32.xlu0 %v3202, 126
      %v3236 = vpop.permute.xlu0 %3235
      %3237 = vrot.lane.b32.xlu0 %v3203, 126
      %v3238 = vpop.permute.xlu0 %3237
      %3239 = vrot.lane.b32.xlu0 %v3204, 126
      %v3240 = vpop.permute.xlu0 %3239
      %3253 = vst.msk [vmem:[#allocation2] sm:$0xff] %vm638, %v3218
      %3254 = vst.msk [vmem:[#allocation2 + $0x8] sm:$0xff] %vm638, %v3220
      %3255 = vst.msk [vmem:[#allocation2 + $0x10] sm:$0x3] %vm641, %v3222
      %3256 = vst.msk [vmem:[#allocation2 + $0x18] sm:$0xff] %vm638, %v3224
      %3257 = vst.msk [vmem:[#allocation2 + $0x20] sm:$0xff] %vm638, %v3226
      %3258 = vst.msk [vmem:[#allocation2 + $0x28] sm:$0x3] %vm641, %v3228
      %3259 = vst.msk [vmem:[#allocation2 + $0x30] sm:$0xff] %vm638, %v3230
      %3260 = vst.msk [vmem:[#allocation2 + $0x38] sm:$0xff] %vm638, %v3232
      %3261 = vst.msk [vmem:[#allocation2 + $0x40] sm:$0x3] %vm641, %v3234
      %3262 = vst.msk [vmem:[#allocation2 + $0x48] sm:$0xff] %vm638, %v3236
      %3263 = vst.msk [vmem:[#allocation2 + $0x50] sm:$0xff] %vm638, %v3238
      %3264 = vst.msk [vmem:[#allocation2 + $0x58] sm:$0x3] %vm641, %v3240
      %v3265 = vld [vmem:[#allocation2] sm:$0xff]
      %v3266 = vld [vmem:[#allocation2 + $0x8] sm:$0xff]
      %v3267 = vld [vmem:[#allocation2 + $0x10] sm:$0x3]
      %v3268 = vld [vmem:[#allocation2 + $0x18] sm:$0xff]
      %v3269 = vld [vmem:[#allocation2 + $0x20] sm:$0xff]
      %v3270 = vld [vmem:[#allocation2 + $0x28] sm:$0x3]
      %v3271 = vld [vmem:[#allocation2 + $0x30] sm:$0xff]
      %v3272 = vld [vmem:[#allocation2 + $0x38] sm:$0xff]
      %v3273 = vld [vmem:[#allocation2 + $0x40] sm:$0x3]
      %v3274 = vld [vmem:[#allocation2 + $0x48] sm:$0xff]
      %v3275 = vld [vmem:[#allocation2 + $0x50] sm:$0xff]
      %v3276 = vld [vmem:[#allocation2 + $0x58] sm:$0x3]
      %3289 = vrot.lane.b32.xlu0 %v3265, 2
      %v3290 = vpop.permute.xlu0 %3289
      %3291 = vrot.lane.b32.xlu0 %v3266, 2
      %v3292 = vpop.permute.xlu0 %3291
      %3293 = vrot.lane.b32.xlu0 %v3267, 2
      %v3294 = vpop.permute.xlu0 %3293
      %3295 = vrot.lane.b32.xlu0 %v3268, 2
      %v3296 = vpop.permute.xlu0 %3295
      %3297 = vrot.lane.b32.xlu0 %v3269, 2
      %v3298 = vpop.permute.xlu0 %3297
      %3299 = vrot.lane.b32.xlu0 %v3270, 2
      %v3300 = vpop.permute.xlu0 %3299
      %3301 = vrot.lane.b32.xlu0 %v3271, 2
      %v3302 = vpop.permute.xlu0 %3301
      %3303 = vrot.lane.b32.xlu0 %v3272, 2
      %v3304 = vpop.permute.xlu0 %3303
      %3305 = vrot.lane.b32.xlu0 %v3273, 2
      %v3306 = vpop.permute.xlu0 %3305
      %3307 = vrot.lane.b32.xlu0 %v3274, 2
      %v3308 = vpop.permute.xlu0 %3307
      %3309 = vrot.lane.b32.xlu0 %v3275, 2
      %v3310 = vpop.permute.xlu0 %3309
      %3311 = vrot.lane.b32.xlu0 %v3276, 2
      %v3312 = vpop.permute.xlu0 %3311
      %3325 = vst.msk [vmem:[#allocation2] sm:$0xff] %vm712, %v3290
      %3326 = vst.msk [vmem:[#allocation2 + $0x8] sm:$0xff] %vm712, %v3292
      %3327 = vst.msk [vmem:[#allocation2 + $0x10] sm:$0x3] %vm715, %v3294
      %3328 = vst.msk [vmem:[#allocation2 + $0x18] sm:$0xff] %vm712, %v3296
      %3329 = vst.msk [vmem:[#allocation2 + $0x20] sm:$0xff] %vm712, %v3298
      %3330 = vst.msk [vmem:[#allocation2 + $0x28] sm:$0x3] %vm715, %v3300
      %3331 = vst.msk [vmem:[#allocation2 + $0x30] sm:$0xff] %vm712, %v3302
      %3332 = vst.msk [vmem:[#allocation2 + $0x38] sm:$0xff] %vm712, %v3304
      %3333 = vst.msk [vmem:[#allocation2 + $0x40] sm:$0x3] %vm715, %v3306
      %3334 = vst.msk [vmem:[#allocation2 + $0x48] sm:$0xff] %vm712, %v3308
      %3335 = vst.msk [vmem:[#allocation2 + $0x50] sm:$0xff] %vm712, %v3310
      %3336 = vst.msk [vmem:[#allocation2 + $0x58] sm:$0x3] %vm715, %v3312
      %v3337 = vld [vmem:[#allocation2] sm:$0xff]
      %v3338 = vld [vmem:[#allocation2 + $0x8] sm:$0xff]
      %v3339 = vld [vmem:[#allocation2 + $0x10] sm:$0x3]
      %v3340 = vld [vmem:[#allocation2 + $0x18] sm:$0xff]
      %v3341 = vld [vmem:[#allocation2 + $0x20] sm:$0xff]
      %v3342 = vld [vmem:[#allocation2 + $0x28] sm:$0x3]
      %v3343 = vld [vmem:[#allocation2 + $0x30] sm:$0xff]
      %v3344 = vld [vmem:[#allocation2 + $0x38] sm:$0xff]
      %v3345 = vld [vmem:[#allocation2 + $0x40] sm:$0x3]
      %v3346 = vld [vmem:[#allocation2 + $0x48] sm:$0xff]
      %v3347 = vld [vmem:[#allocation2 + $0x50] sm:$0xff]
      %v3348 = vld [vmem:[#allocation2 + $0x58] sm:$0x3]
      %v3349 = vcombine.low %v3337, %v3343
      %v3350 = vcombine.high %v3337, %v3343
      %v3352 = vunpack.c.l.s4 1983009808
      %v3353 = vunpack.c.0.s8 %v3352
      %v3354 = vlaneseq
      %v3355 = vshrl.u32 %v3354, 7
      %v3356 = vsub.s32 %v3353, %v3355
      %v3357 = vrot.slane %v3349, %v3356
      %v3359 = vunpack.c.l.s4 1983009808
      %v3360 = vunpack.c.0.s8 %v3359
      %v3361 = vlaneseq
      %v3362 = vshrl.u32 %v3361, 7
      %v3363 = vsub.s32 %v3360, %v3362
      %v3364 = vrot.slane %v3350, %v3363
      %v3365 = vcombine.low %v3340, %v3346
      %v3366 = vcombine.high %v3340, %v3346
      %v3368 = vunpack.c.l.s4 1983009808
      %v3369 = vunpack.c.0.s8 %v3368
      %v3370 = vlaneseq
      %v3371 = vshrl.u32 %v3370, 7
      %v3372 = vsub.s32 %v3369, %v3371
      %v3373 = vrot.slane %v3365, %v3372
      %v3375 = vunpack.c.l.s4 1983009808
      %v3376 = vunpack.c.0.s8 %v3375
      %v3377 = vlaneseq
      %v3378 = vshrl.u32 %v3377, 7
      %v3379 = vsub.s32 %v3376, %v3378
      %v3380 = vrot.slane %v3366, %v3379
      %v3381 = vcombine.low %v3357, %v3373
      %v3382 = vcombine.high %v3357, %v3373
      %v3384 = vunpack.c.l.s4 1934713408
      %v3385 = vunpack.c.0.s8 %v3384
      %v3386 = vlaneseq
      %v3387 = vshrl.u32 %v3386, 7
      %v3388 = vsub.s32 %v3385, %v3387
      %v3389 = vrot.slane %v3381, %v3388
      %v3391 = vunpack.c.l.s4 1934713408
      %v3392 = vunpack.c.0.s8 %v3391
      %v3393 = vlaneseq
      %v3394 = vshrl.u32 %v3393, 7
      %v3395 = vsub.s32 %v3392, %v3394
      %v3396 = vrot.slane %v3382, %v3395
      %v3397 = vcombine.low %v3364, %v3380
      %v3398 = vcombine.high %v3364, %v3380
      %v3400 = vunpack.c.l.s4 1934713408
      %v3401 = vunpack.c.0.s8 %v3400
      %v3402 = vlaneseq
      %v3403 = vshrl.u32 %v3402, 7
      %v3404 = vsub.s32 %v3401, %v3403
      %v3405 = vrot.slane %v3397, %v3404
      %v3407 = vunpack.c.l.s4 1934713408
      %v3408 = vunpack.c.0.s8 %v3407
      %v3409 = vlaneseq
      %v3410 = vshrl.u32 %v3409, 7
      %v3411 = vsub.s32 %v3408, %v3410
      %v3412 = vrot.slane %v3398, %v3411
      %v3413 = vcombine.high %v3389, 0.0
      %v3414 = vcombine.high %v3396, 0.0
      %v3415 = vcombine.high %v3405, 0.0
      %v3416 = vcombine.high %v3412, 0.0
      %v3417 = vcombine.low %v3338, %v3344
      %v3418 = vcombine.high %v3338, %v3344
      %v3420 = vunpack.c.l.s4 1983009808
      %v3421 = vunpack.c.0.s8 %v3420
      %v3422 = vlaneseq
      %v3423 = vshrl.u32 %v3422, 7
      %v3424 = vsub.s32 %v3421, %v3423
      %v3425 = vrot.slane %v3417, %v3424
      %v3427 = vunpack.c.l.s4 1983009808
      %v3428 = vunpack.c.0.s8 %v3427
      %v3429 = vlaneseq
      %v3430 = vshrl.u32 %v3429, 7
      %v3431 = vsub.s32 %v3428, %v3430
      %v3432 = vrot.slane %v3418, %v3431
      %v3433 = vcombine.low %v3341, %v3347
      %v3434 = vcombine.high %v3341, %v3347
      %v3436 = vunpack.c.l.s4 1983009808
      %v3437 = vunpack.c.0.s8 %v3436
      %v3438 = vlaneseq
      %v3439 = vshrl.u32 %v3438, 7
      %v3440 = vsub.s32 %v3437, %v3439
      %v3441 = vrot.slane %v3433, %v3440
      %v3443 = vunpack.c.l.s4 1983009808
      %v3444 = vunpack.c.0.s8 %v3443
      %v3445 = vlaneseq
      %v3446 = vshrl.u32 %v3445, 7
      %v3447 = vsub.s32 %v3444, %v3446
      %v3448 = vrot.slane %v3434, %v3447
      %v3449 = vcombine.low %v3425, %v3441
      %v3450 = vcombine.high %v3425, %v3441
      %v3452 = vunpack.c.l.s4 1934713408
      %v3453 = vunpack.c.0.s8 %v3452
      %v3454 = vlaneseq
      %v3455 = vshrl.u32 %v3454, 7
      %v3456 = vsub.s32 %v3453, %v3455
      %v3457 = vrot.slane %v3449, %v3456
      %v3459 = vunpack.c.l.s4 1934713408
      %v3460 = vunpack.c.0.s8 %v3459
      %v3461 = vlaneseq
      %v3462 = vshrl.u32 %v3461, 7
      %v3463 = vsub.s32 %v3460, %v3462
      %v3464 = vrot.slane %v3450, %v3463
      %v3465 = vcombine.low %v3432, %v3448
      %v3466 = vcombine.high %v3432, %v3448
      %v3468 = vunpack.c.l.s4 1934713408
      %v3469 = vunpack.c.0.s8 %v3468
      %v3470 = vlaneseq
      %v3471 = vshrl.u32 %v3470, 7
      %v3472 = vsub.s32 %v3469, %v3471
      %v3473 = vrot.slane %v3465, %v3472
      %v3475 = vunpack.c.l.s4 1934713408
      %v3476 = vunpack.c.0.s8 %v3475
      %v3477 = vlaneseq
      %v3478 = vshrl.u32 %v3477, 7
      %v3479 = vsub.s32 %v3476, %v3478
      %v3480 = vrot.slane %v3466, %v3479
      %v3481 = vcombine.high %v3457, 0.0
      %v3482 = vcombine.high %v3464, 0.0
      %v3483 = vcombine.high %v3473, 0.0
      %v3484 = vcombine.high %v3480, 0.0
      %3486 = vrot.lane.b32.xlu0 %v3413, 16
      %v3487 = vpop.permute.xlu0 %3486
      %3490 = vrot.lane.b32.xlu0 %v3396, 32
      %v3491 = vpop.permute.xlu0 %3490
      %3494 = vrot.lane.b32.xlu0 %v3414, 48
      %v3495 = vpop.permute.xlu0 %3494
      %3498 = vrot.lane.b32.xlu0 %v3405, 64
      %v3499 = vpop.permute.xlu0 %3498
      %3502 = vrot.lane.b32.xlu0 %v3415, 80
      %v3503 = vpop.permute.xlu0 %3502
      %3506 = vrot.lane.b32.xlu0 %v3412, 96
      %v3507 = vpop.permute.xlu0 %3506
      %3510 = vrot.lane.b32.xlu0 %v3416, 112
      %v3511 = vpop.permute.xlu0 %3510
      %3514 = vrot.lane.b32.xlu0 %v3481, 16
      %v3515 = vpop.permute.xlu0 %3514
      %3518 = vrot.lane.b32.xlu0 %v3464, 32
      %v3519 = vpop.permute.xlu0 %3518
      %3522 = vrot.lane.b32.xlu0 %v3482, 48
      %v3523 = vpop.permute.xlu0 %3522
      %3526 = vrot.lane.b32.xlu0 %v3473, 64
      %v3527 = vpop.permute.xlu0 %3526
      %3530 = vrot.lane.b32.xlu0 %v3483, 80
      %v3531 = vpop.permute.xlu0 %3530
      %3534 = vrot.lane.b32.xlu0 %v3480, 96
      %v3535 = vpop.permute.xlu0 %3534
      %3538 = vrot.lane.b32.xlu0 %v3484, 112
      %v3539 = vpop.permute.xlu0 %3538
      %v3541 = vsel %vm930, %v3389, %v3487
      %v3542 = vsel %vm932, %v3541, %v3491
      %v3543 = vsel %vm934, %v3542, %v3495
      %v3544 = vsel %vm936, %v3543, %v3499
      %v3545 = vsel %vm938, %v3544, %v3503
      %v3546 = vsel %vm940, %v3545, %v3507
      %v3547 = vsel %vm942, %v3546, %v3511
      %v3548 = vsel %vm930, %v3457, %v3515
      %v3549 = vsel %vm932, %v3548, %v3519
      %v3550 = vsel %vm934, %v3549, %v3523
      %v3551 = vsel %vm936, %v3550, %v3527
      %v3552 = vsel %vm938, %v3551, %v3531
      %v3553 = vsel %vm940, %v3552, %v3535
      %v3554 = vsel %vm942, %v3553, %v3539
      %3555 = vst [vmem:[#allocation3] sm:$0xf] %v3547
      %3556 = vst [vmem:[#allocation3 + $0x8] sm:$0xf] %v3554
      %3565 = vrot.lane.b32.xlu0 %v3337, 127
      %v3566 = vpop.permute.xlu0 %3565
      %3567 = vrot.lane.b32.xlu0 %v3338, 127
      %v3568 = vpop.permute.xlu0 %3567
      %3569 = vrot.lane.b32.xlu0 %v3340, 127
      %v3570 = vpop.permute.xlu0 %3569
      %3571 = vrot.lane.b32.xlu0 %v3341, 127
      %v3572 = vpop.permute.xlu0 %3571
      %3573 = vrot.lane.b32.xlu0 %v3343, 127
      %v3574 = vpop.permute.xlu0 %3573
      %3575 = vrot.lane.b32.xlu0 %v3344, 127
      %v3576 = vpop.permute.xlu0 %3575
      %3577 = vrot.lane.b32.xlu0 %v3346, 127
      %v3578 = vpop.permute.xlu0 %3577
      %3579 = vrot.lane.b32.xlu0 %v3347, 127
      %v3580 = vpop.permute.xlu0 %3579
      %v3589 = vcombine.low %v3566, %v3574
      %v3590 = vcombine.high %v3566, %v3574
      %v3592 = vunpack.c.l.s4 1983009808
      %v3593 = vunpack.c.0.s8 %v3592
      %v3594 = vlaneseq
      %v3595 = vshrl.u32 %v3594, 7
      %v3596 = vsub.s32 %v3593, %v3595
      %v3597 = vrot.slane %v3589, %v3596
      %v3599 = vunpack.c.l.s4 1983009808
      %v3600 = vunpack.c.0.s8 %v3599
      %v3601 = vlaneseq
      %v3602 = vshrl.u32 %v3601, 7
      %v3603 = vsub.s32 %v3600, %v3602
      %v3604 = vrot.slane %v3590, %v3603
      %v3605 = vcombine.low %v3570, %v3578
      %v3606 = vcombine.high %v3570, %v3578
      %v3608 = vunpack.c.l.s4 1983009808
      %v3609 = vunpack.c.0.s8 %v3608
      %v3610 = vlaneseq
      %v3611 = vshrl.u32 %v3610, 7
      %v3612 = vsub.s32 %v3609, %v3611
      %v3613 = vrot.slane %v3605, %v3612
      %v3615 = vunpack.c.l.s4 1983009808
      %v3616 = vunpack.c.0.s8 %v3615
      %v3617 = vlaneseq
      %v3618 = vshrl.u32 %v3617, 7
      %v3619 = vsub.s32 %v3616, %v3618
      %v3620 = vrot.slane %v3606, %v3619
      %v3621 = vcombine.low %v3597, %v3613
      %v3622 = vcombine.high %v3597, %v3613
      %v3624 = vunpack.c.l.s4 1934713408
      %v3625 = vunpack.c.0.s8 %v3624
      %v3626 = vlaneseq
      %v3627 = vshrl.u32 %v3626, 7
      %v3628 = vsub.s32 %v3625, %v3627
      %v3629 = vrot.slane %v3621, %v3628
      %v3631 = vunpack.c.l.s4 1934713408
      %v3632 = vunpack.c.0.s8 %v3631
      %v3633 = vlaneseq
      %v3634 = vshrl.u32 %v3633, 7
      %v3635 = vsub.s32 %v3632, %v3634
      %v3636 = vrot.slane %v3622, %v3635
      %v3637 = vcombine.low %v3604, %v3620
      %v3638 = vcombine.high %v3604, %v3620
      %v3640 = vunpack.c.l.s4 1934713408
      %v3641 = vunpack.c.0.s8 %v3640
      %v3642 = vlaneseq
      %v3643 = vshrl.u32 %v3642, 7
      %v3644 = vsub.s32 %v3641, %v3643
      %v3645 = vrot.slane %v3637, %v3644
      %v3647 = vunpack.c.l.s4 1934713408
      %v3648 = vunpack.c.0.s8 %v3647
      %v3649 = vlaneseq
      %v3650 = vshrl.u32 %v3649, 7
      %v3651 = vsub.s32 %v3648, %v3650
      %v3652 = vrot.slane %v3638, %v3651
      %v3653 = vcombine.high %v3629, 0.0
      %v3654 = vcombine.high %v3636, 0.0
      %v3655 = vcombine.high %v3645, 0.0
      %v3656 = vcombine.high %v3652, 0.0
      %v3657 = vcombine.low %v3568, %v3576
      %v3658 = vcombine.high %v3568, %v3576
      %v3660 = vunpack.c.l.s4 1983009808
      %v3661 = vunpack.c.0.s8 %v3660
      %v3662 = vlaneseq
      %v3663 = vshrl.u32 %v3662, 7
      %v3664 = vsub.s32 %v3661, %v3663
      %v3665 = vrot.slane %v3657, %v3664
      %v3667 = vunpack.c.l.s4 1983009808
      %v3668 = vunpack.c.0.s8 %v3667
      %v3669 = vlaneseq
      %v3670 = vshrl.u32 %v3669, 7
      %v3671 = vsub.s32 %v3668, %v3670
      %v3672 = vrot.slane %v3658, %v3671
      %v3673 = vcombine.low %v3572, %v3580
      %v3674 = vcombine.high %v3572, %v3580
      %v3676 = vunpack.c.l.s4 1983009808
      %v3677 = vunpack.c.0.s8 %v3676
      %v3678 = vlaneseq
      %v3679 = vshrl.u32 %v3678, 7
      %v3680 = vsub.s32 %v3677, %v3679
      %v3681 = vrot.slane %v3673, %v3680
      %v3683 = vunpack.c.l.s4 1983009808
      %v3684 = vunpack.c.0.s8 %v3683
      %v3685 = vlaneseq
      %v3686 = vshrl.u32 %v3685, 7
      %v3687 = vsub.s32 %v3684, %v3686
      %v3688 = vrot.slane %v3674, %v3687
      %v3689 = vcombine.low %v3665, %v3681
      %v3690 = vcombine.high %v3665, %v3681
      %v3692 = vunpack.c.l.s4 1934713408
      %v3693 = vunpack.c.0.s8 %v3692
      %v3694 = vlaneseq
      %v3695 = vshrl.u32 %v3694, 7
      %v3696 = vsub.s32 %v3693, %v3695
      %v3697 = vrot.slane %v3689, %v3696
      %v3699 = vunpack.c.l.s4 1934713408
      %v3700 = vunpack.c.0.s8 %v3699
      %v3701 = vlaneseq
      %v3702 = vshrl.u32 %v3701, 7
      %v3703 = vsub.s32 %v3700, %v3702
      %v3704 = vrot.slane %v3690, %v3703
      %v3705 = vcombine.low %v3672, %v3688
      %v3706 = vcombine.high %v3672, %v3688
      %v3708 = vunpack.c.l.s4 1934713408
      %v3709 = vunpack.c.0.s8 %v3708
      %v3710 = vlaneseq
      %v3711 = vshrl.u32 %v3710, 7
      %v3712 = vsub.s32 %v3709, %v3711
      %v3713 = vrot.slane %v3705, %v3712
      %v3715 = vunpack.c.l.s4 1934713408
      %v3716 = vunpack.c.0.s8 %v3715
      %v3717 = vlaneseq
      %v3718 = vshrl.u32 %v3717, 7
      %v3719 = vsub.s32 %v3716, %v3718
      %v3720 = vrot.slane %v3706, %v3719
      %v3721 = vcombine.high %v3697, 0.0
      %v3722 = vcombine.high %v3704, 0.0
      %v3723 = vcombine.high %v3713, 0.0
      %v3724 = vcombine.high %v3720, 0.0
      %3726 = vrot.lane.b32.xlu0 %v3653, 16
      %v3727 = vpop.permute.xlu0 %3726
      %3730 = vrot.lane.b32.xlu0 %v3636, 32
      %v3731 = vpop.permute.xlu0 %3730
      %3734 = vrot.lane.b32.xlu0 %v3654, 48
      %v3735 = vpop.permute.xlu0 %3734
      %3738 = vrot.lane.b32.xlu0 %v3645, 64
      %v3739 = vpop.permute.xlu0 %3738
      %3742 = vrot.lane.b32.xlu0 %v3655, 80
      %v3743 = vpop.permute.xlu0 %3742
      %3746 = vrot.lane.b32.xlu0 %v3652, 96
      %v3747 = vpop.permute.xlu0 %3746
      %3750 = vrot.lane.b32.xlu0 %v3656, 112
      %v3751 = vpop.permute.xlu0 %3750
      %3754 = vrot.lane.b32.xlu0 %v3721, 16
      %v3755 = vpop.permute.xlu0 %3754
      %3758 = vrot.lane.b32.xlu0 %v3704, 32
      %v3759 = vpop.permute.xlu0 %3758
      %3762 = vrot.lane.b32.xlu0 %v3722, 48
      %v3763 = vpop.permute.xlu0 %3762
      %3766 = vrot.lane.b32.xlu0 %v3713, 64
      %v3767 = vpop.permute.xlu0 %3766
      %3770 = vrot.lane.b32.xlu0 %v3723, 80
      %v3771 = vpop.permute.xlu0 %3770
      %3774 = vrot.lane.b32.xlu0 %v3720, 96
      %v3775 = vpop.permute.xlu0 %3774
      %3778 = vrot.lane.b32.xlu0 %v3724, 112
      %v3779 = vpop.permute.xlu0 %3778
      %v3781 = vsel %vm930, %v3629, %v3727
      %v3782 = vsel %vm932, %v3781, %v3731
      %v3783 = vsel %vm934, %v3782, %v3735
      %v3784 = vsel %vm936, %v3783, %v3739
      %v3785 = vsel %vm938, %v3784, %v3743
      %v3786 = vsel %vm940, %v3785, %v3747
      %v3787 = vsel %vm942, %v3786, %v3751
      %v3788 = vsel %vm930, %v3697, %v3755
      %v3789 = vsel %vm932, %v3788, %v3759
      %v3790 = vsel %vm934, %v3789, %v3763
      %v3791 = vsel %vm936, %v3790, %v3767
      %v3792 = vsel %vm938, %v3791, %v3771
      %v3793 = vsel %vm940, %v3792, %v3775
      %v3794 = vsel %vm942, %v3793, %v3779
      %v3797 = vrot.slane %v3787, 4
      %v3798 = vrot.slane %v3794, 4
      %3801 = vst [vmem:[#allocation3] sm:$0xf0] %v3797
      %3802 = vst [vmem:[#allocation3 + $0x8] sm:$0xf0] %v3798
      %3803 = vrot.lane.b32.xlu0 %v3337, 126
      %v3804 = vpop.permute.xlu0 %3803
      %3805 = vrot.lane.b32.xlu0 %v3338, 126
      %v3806 = vpop.permute.xlu0 %3805
      %3807 = vrot.lane.b32.xlu0 %v3340, 126
      %v3808 = vpop.permute.xlu0 %3807
      %3809 = vrot.lane.b32.xlu0 %v3341, 126
      %v3810 = vpop.permute.xlu0 %3809
      %3811 = vrot.lane.b32.xlu0 %v3343, 126
      %v3812 = vpop.permute.xlu0 %3811
      %3813 = vrot.lane.b32.xlu0 %v3344, 126
      %v3814 = vpop.permute.xlu0 %3813
      %3815 = vrot.lane.b32.xlu0 %v3346, 126
      %v3816 = vpop.permute.xlu0 %3815
      %3817 = vrot.lane.b32.xlu0 %v3347, 126
      %v3818 = vpop.permute.xlu0 %3817
      %v3827 = vcombine.low %v3804, %v3812
      %v3828 = vcombine.high %v3804, %v3812
      %v3830 = vunpack.c.l.s4 1983009808
      %v3831 = vunpack.c.0.s8 %v3830
      %v3832 = vlaneseq
      %v3833 = vshrl.u32 %v3832, 7
      %v3834 = vsub.s32 %v3831, %v3833
      %v3835 = vrot.slane %v3827, %v3834
      %v3837 = vunpack.c.l.s4 1983009808
      %v3838 = vunpack.c.0.s8 %v3837
      %v3839 = vlaneseq
      %v3840 = vshrl.u32 %v3839, 7
      %v3841 = vsub.s32 %v3838, %v3840
      %v3842 = vrot.slane %v3828, %v3841
      %v3843 = vcombine.low %v3808, %v3816
      %v3844 = vcombine.high %v3808, %v3816
      %v3846 = vunpack.c.l.s4 1983009808
      %v3847 = vunpack.c.0.s8 %v3846
      %v3848 = vlaneseq
      %v3849 = vshrl.u32 %v3848, 7
      %v3850 = vsub.s32 %v3847, %v3849
      %v3851 = vrot.slane %v3843, %v3850
      %v3853 = vunpack.c.l.s4 1983009808
      %v3854 = vunpack.c.0.s8 %v3853
      %v3855 = vlaneseq
      %v3856 = vshrl.u32 %v3855, 7
      %v3857 = vsub.s32 %v3854, %v3856
      %v3858 = vrot.slane %v3844, %v3857
      %v3859 = vcombine.low %v3835, %v3851
      %v3860 = vcombine.high %v3835, %v3851
      %v3862 = vunpack.c.l.s4 1934713408
      %v3863 = vunpack.c.0.s8 %v3862
      %v3864 = vlaneseq
      %v3865 = vshrl.u32 %v3864, 7
      %v3866 = vsub.s32 %v3863, %v3865
      %v3867 = vrot.slane %v3859, %v3866
      %v3869 = vunpack.c.l.s4 1934713408
      %v3870 = vunpack.c.0.s8 %v3869
      %v3871 = vlaneseq
      %v3872 = vshrl.u32 %v3871, 7
      %v3873 = vsub.s32 %v3870, %v3872
      %v3874 = vrot.slane %v3860, %v3873
      %v3875 = vcombine.low %v3842, %v3858
      %v3876 = vcombine.high %v3842, %v3858
      %v3878 = vunpack.c.l.s4 1934713408
      %v3879 = vunpack.c.0.s8 %v3878
      %v3880 = vlaneseq
      %v3881 = vshrl.u32 %v3880, 7
      %v3882 = vsub.s32 %v3879, %v3881
      %v3883 = vrot.slane %v3875, %v3882
      %v3885 = vunpack.c.l.s4 1934713408
      %v3886 = vunpack.c.0.s8 %v3885
      %v3887 = vlaneseq
      %v3888 = vshrl.u32 %v3887, 7
      %v3889 = vsub.s32 %v3886, %v3888
      %v3890 = vrot.slane %v3876, %v3889
      %v3891 = vcombine.high %v3867, 0.0
      %v3892 = vcombine.high %v3874, 0.0
      %v3893 = vcombine.high %v3883, 0.0
      %v3894 = vcombine.high %v3890, 0.0
      %v3895 = vcombine.low %v3806, %v3814
      %v3896 = vcombine.high %v3806, %v3814
      %v3898 = vunpack.c.l.s4 1983009808
      %v3899 = vunpack.c.0.s8 %v3898
      %v3900 = vlaneseq
      %v3901 = vshrl.u32 %v3900, 7
      %v3902 = vsub.s32 %v3899, %v3901
      %v3903 = vrot.slane %v3895, %v3902
      %v3905 = vunpack.c.l.s4 1983009808
      %v3906 = vunpack.c.0.s8 %v3905
      %v3907 = vlaneseq
      %v3908 = vshrl.u32 %v3907, 7
      %v3909 = vsub.s32 %v3906, %v3908
      %v3910 = vrot.slane %v3896, %v3909
      %v3911 = vcombine.low %v3810, %v3818
      %v3912 = vcombine.high %v3810, %v3818
      %v3914 = vunpack.c.l.s4 1983009808
      %v3915 = vunpack.c.0.s8 %v3914
      %v3916 = vlaneseq
      %v3917 = vshrl.u32 %v3916, 7
      %v3918 = vsub.s32 %v3915, %v3917
      %v3919 = vrot.slane %v3911, %v3918
      %v3921 = vunpack.c.l.s4 1983009808
      %v3922 = vunpack.c.0.s8 %v3921
      %v3923 = vlaneseq
      %v3924 = vshrl.u32 %v3923, 7
      %v3925 = vsub.s32 %v3922, %v3924
      %v3926 = vrot.slane %v3912, %v3925
      %v3927 = vcombine.low %v3903, %v3919
      %v3928 = vcombine.high %v3903, %v3919
      %v3930 = vunpack.c.l.s4 1934713408
      %v3931 = vunpack.c.0.s8 %v3930
      %v3932 = vlaneseq
      %v3933 = vshrl.u32 %v3932, 7
      %v3934 = vsub.s32 %v3931, %v3933
      %v3935 = vrot.slane %v3927, %v3934
      %v3937 = vunpack.c.l.s4 1934713408
      %v3938 = vunpack.c.0.s8 %v3937
      %v3939 = vlaneseq
      %v3940 = vshrl.u32 %v3939, 7
      %v3941 = vsub.s32 %v3938, %v3940
      %v3942 = vrot.slane %v3928, %v3941
      %v3943 = vcombine.low %v3910, %v3926
      %v3944 = vcombine.high %v3910, %v3926
      %v3946 = vunpack.c.l.s4 1934713408
      %v3947 = vunpack.c.0.s8 %v3946
      %v3948 = vlaneseq
      %v3949 = vshrl.u32 %v3948, 7
      %v3950 = vsub.s32 %v3947, %v3949
      %v3951 = vrot.slane %v3943, %v3950
      %v3953 = vunpack.c.l.s4 1934713408
      %v3954 = vunpack.c.0.s8 %v3953
      %v3955 = vlaneseq
      %v3956 = vshrl.u32 %v3955, 7
      %v3957 = vsub.s32 %v3954, %v3956
      %v3958 = vrot.slane %v3944, %v3957
      %v3959 = vcombine.high %v3935, 0.0
      %v3960 = vcombine.high %v3942, 0.0
      %v3961 = vcombine.high %v3951, 0.0
      %v3962 = vcombine.high %v3958, 0.0
      %3964 = vrot.lane.b32.xlu0 %v3891, 16
      %v3965 = vpop.permute.xlu0 %3964
      %3968 = vrot.lane.b32.xlu0 %v3874, 32
      %v3969 = vpop.permute.xlu0 %3968
      %3972 = vrot.lane.b32.xlu0 %v3892, 48
      %v3973 = vpop.permute.xlu0 %3972
      %3976 = vrot.lane.b32.xlu0 %v3883, 64
      %v3977 = vpop.permute.xlu0 %3976
      %3980 = vrot.lane.b32.xlu0 %v3893, 80
      %v3981 = vpop.permute.xlu0 %3980
      %3984 = vrot.lane.b32.xlu0 %v3890, 96
      %v3985 = vpop.permute.xlu0 %3984
      %3988 = vrot.lane.b32.xlu0 %v3894, 112
      %v3989 = vpop.permute.xlu0 %3988
      %3992 = vrot.lane.b32.xlu0 %v3959, 16
      %v3993 = vpop.permute.xlu0 %3992
      %3996 = vrot.lane.b32.xlu0 %v3942, 32
      %v3997 = vpop.permute.xlu0 %3996
      %4000 = vrot.lane.b32.xlu0 %v3960, 48
      %v4001 = vpop.permute.xlu0 %4000
      %4004 = vrot.lane.b32.xlu0 %v3951, 64
      %v4005 = vpop.permute.xlu0 %4004
      %4008 = vrot.lane.b32.xlu0 %v3961, 80
      %v4009 = vpop.permute.xlu0 %4008
      %4012 = vrot.lane.b32.xlu0 %v3958, 96
      %v4013 = vpop.permute.xlu0 %4012
      %4016 = vrot.lane.b32.xlu0 %v3962, 112
      %v4017 = vpop.permute.xlu0 %4016
      %v4019 = vsel %vm930, %v3867, %v3965
      %v4020 = vsel %vm932, %v4019, %v3969
      %v4021 = vsel %vm934, %v4020, %v3973
      %v4022 = vsel %vm936, %v4021, %v3977
      %v4023 = vsel %vm938, %v4022, %v3981
      %v4024 = vsel %vm940, %v4023, %v3985
      %v4025 = vsel %vm942, %v4024, %v3989
      %v4026 = vsel %vm930, %v3935, %v3993
      %v4027 = vsel %vm932, %v4026, %v3997
      %v4028 = vsel %vm934, %v4027, %v4001
      %v4029 = vsel %vm936, %v4028, %v4005
      %v4030 = vsel %vm938, %v4029, %v4009
      %v4031 = vsel %vm940, %v4030, %v4013
      %v4032 = vsel %vm942, %v4031, %v4017
      %4033 = vst [vmem:[#allocation3 + $0x10] sm:$0xf] %v4025
      %4034 = vst [vmem:[#allocation3 + $0x18] sm:$0xf] %v4032
      %v4039 = vrot.slane %v3337, 1
      %v4040 = vrot.slane %v3338, 1
      %v4041 = vsel %vm1435, %v4039, %v4040
      %v4042 = vrot.slane %v3339, 1
      %v4043 = vsel %vm1435, %v4040, %v4042
      %v4044 = vrot.slane %v3340, 1
      %v4045 = vrot.slane %v3341, 1
      %v4046 = vsel %vm1435, %v4044, %v4045
      %v4047 = vrot.slane %v3342, 1
      %v4048 = vsel %vm1435, %v4045, %v4047
      %v4049 = vrot.slane %v3343, 1
      %v4050 = vrot.slane %v3344, 1
      %v4051 = vsel %vm1435, %v4049, %v4050
      %v4052 = vrot.slane %v3345, 1
      %v4053 = vsel %vm1435, %v4050, %v4052
      %v4054 = vrot.slane %v3346, 1
      %v4055 = vrot.slane %v3347, 1
      %v4056 = vsel %vm1435, %v4054, %v4055
      %v4057 = vrot.slane %v3348, 1
      %v4058 = vsel %vm1435, %v4055, %v4057
      %v4067 = vcombine.low %v4041, %v4051
      %v4068 = vcombine.high %v4041, %v4051
      %v4070 = vunpack.c.l.s4 1983009808
      %v4071 = vunpack.c.0.s8 %v4070
      %v4072 = vlaneseq
      %v4073 = vshrl.u32 %v4072, 7
      %v4074 = vsub.s32 %v4071, %v4073
      %v4075 = vrot.slane %v4067, %v4074
      %v4077 = vunpack.c.l.s4 1983009808
      %v4078 = vunpack.c.0.s8 %v4077
      %v4079 = vlaneseq
      %v4080 = vshrl.u32 %v4079, 7
      %v4081 = vsub.s32 %v4078, %v4080
      %v4082 = vrot.slane %v4068, %v4081
      %v4083 = vcombine.low %v4046, %v4056
      %v4084 = vcombine.high %v4046, %v4056
      %v4086 = vunpack.c.l.s4 1983009808
      %v4087 = vunpack.c.0.s8 %v4086
      %v4088 = vlaneseq
      %v4089 = vshrl.u32 %v4088, 7
      %v4090 = vsub.s32 %v4087, %v4089
      %v4091 = vrot.slane %v4083, %v4090
      %v4093 = vunpack.c.l.s4 1983009808
      %v4094 = vunpack.c.0.s8 %v4093
      %v4095 = vlaneseq
      %v4096 = vshrl.u32 %v4095, 7
      %v4097 = vsub.s32 %v4094, %v4096
      %v4098 = vrot.slane %v4084, %v4097
      %v4099 = vcombine.low %v4075, %v4091
      %v4100 = vcombine.high %v4075, %v4091
      %v4102 = vunpack.c.l.s4 1934713408
      %v4103 = vunpack.c.0.s8 %v4102
      %v4104 = vlaneseq
      %v4105 = vshrl.u32 %v4104, 7
      %v4106 = vsub.s32 %v4103, %v4105
      %v4107 = vrot.slane %v4099, %v4106
      %v4109 = vunpack.c.l.s4 1934713408
      %v4110 = vunpack.c.0.s8 %v4109
      %v4111 = vlaneseq
      %v4112 = vshrl.u32 %v4111, 7
      %v4113 = vsub.s32 %v4110, %v4112
      %v4114 = vrot.slane %v4100, %v4113
      %v4115 = vcombine.low %v4082, %v4098
      %v4116 = vcombine.high %v4082, %v4098
      %v4118 = vunpack.c.l.s4 1934713408
      %v4119 = vunpack.c.0.s8 %v4118
      %v4120 = vlaneseq
      %v4121 = vshrl.u32 %v4120, 7
      %v4122 = vsub.s32 %v4119, %v4121
      %v4123 = vrot.slane %v4115, %v4122
      %v4125 = vunpack.c.l.s4 1934713408
      %v4126 = vunpack.c.0.s8 %v4125
      %v4127 = vlaneseq
      %v4128 = vshrl.u32 %v4127, 7
      %v4129 = vsub.s32 %v4126, %v4128
      %v4130 = vrot.slane %v4116, %v4129
      %v4131 = vcombine.high %v4107, 0.0
      %v4132 = vcombine.high %v4114, 0.0
      %v4133 = vcombine.high %v4123, 0.0
      %v4134 = vcombine.high %v4130, 0.0
      %v4135 = vcombine.low %v4043, %v4053
      %v4136 = vcombine.high %v4043, %v4053
      %v4138 = vunpack.c.l.s4 1983009808
      %v4139 = vunpack.c.0.s8 %v4138
      %v4140 = vlaneseq
      %v4141 = vshrl.u32 %v4140, 7
      %v4142 = vsub.s32 %v4139, %v4141
      %v4143 = vrot.slane %v4135, %v4142
      %v4145 = vunpack.c.l.s4 1983009808
      %v4146 = vunpack.c.0.s8 %v4145
      %v4147 = vlaneseq
      %v4148 = vshrl.u32 %v4147, 7
      %v4149 = vsub.s32 %v4146, %v4148
      %v4150 = vrot.slane %v4136, %v4149
      %v4151 = vcombine.low %v4048, %v4058
      %v4152 = vcombine.high %v4048, %v4058
      %v4154 = vunpack.c.l.s4 1983009808
      %v4155 = vunpack.c.0.s8 %v4154
      %v4156 = vlaneseq
      %v4157 = vshrl.u32 %v4156, 7
      %v4158 = vsub.s32 %v4155, %v4157
      %v4159 = vrot.slane %v4151, %v4158
      %v4161 = vunpack.c.l.s4 1983009808
      %v4162 = vunpack.c.0.s8 %v4161
      %v4163 = vlaneseq
      %v4164 = vshrl.u32 %v4163, 7
      %v4165 = vsub.s32 %v4162, %v4164
      %v4166 = vrot.slane %v4152, %v4165
      %v4167 = vcombine.low %v4143, %v4159
      %v4168 = vcombine.high %v4143, %v4159
      %v4170 = vunpack.c.l.s4 1934713408
      %v4171 = vunpack.c.0.s8 %v4170
      %v4172 = vlaneseq
      %v4173 = vshrl.u32 %v4172, 7
      %v4174 = vsub.s32 %v4171, %v4173
      %v4175 = vrot.slane %v4167, %v4174
      %v4177 = vunpack.c.l.s4 1934713408
      %v4178 = vunpack.c.0.s8 %v4177
      %v4179 = vlaneseq
      %v4180 = vshrl.u32 %v4179, 7
      %v4181 = vsub.s32 %v4178, %v4180
      %v4182 = vrot.slane %v4168, %v4181
      %v4183 = vcombine.low %v4150, %v4166
      %v4184 = vcombine.high %v4150, %v4166
      %v4186 = vunpack.c.l.s4 1934713408
      %v4187 = vunpack.c.0.s8 %v4186
      %v4188 = vlaneseq
      %v4189 = vshrl.u32 %v4188, 7
      %v4190 = vsub.s32 %v4187, %v4189
      %v4191 = vrot.slane %v4183, %v4190
      %v4193 = vunpack.c.l.s4 1934713408
      %v4194 = vunpack.c.0.s8 %v4193
      %v4195 = vlaneseq
      %v4196 = vshrl.u32 %v4195, 7
      %v4197 = vsub.s32 %v4194, %v4196
      %v4198 = vrot.slane %v4184, %v4197
      %v4199 = vcombine.high %v4175, 0.0
      %v4200 = vcombine.high %v4182, 0.0
      %v4201 = vcombine.high %v4191, 0.0
      %v4202 = vcombine.high %v4198, 0.0
      %4204 = vrot.lane.b32.xlu0 %v4131, 16
      %v4205 = vpop.permute.xlu0 %4204
      %4208 = vrot.lane.b32.xlu0 %v4114, 32
      %v4209 = vpop.permute.xlu0 %4208
      %4212 = vrot.lane.b32.xlu0 %v4132, 48
      %v4213 = vpop.permute.xlu0 %4212
      %4216 = vrot.lane.b32.xlu0 %v4123, 64
      %v4217 = vpop.permute.xlu0 %4216
      %4220 = vrot.lane.b32.xlu0 %v4133, 80
      %v4221 = vpop.permute.xlu0 %4220
      %4224 = vrot.lane.b32.xlu0 %v4130, 96
      %v4225 = vpop.permute.xlu0 %4224
      %4228 = vrot.lane.b32.xlu0 %v4134, 112
      %v4229 = vpop.permute.xlu0 %4228
      %4232 = vrot.lane.b32.xlu0 %v4199, 16
      %v4233 = vpop.permute.xlu0 %4232
      %4236 = vrot.lane.b32.xlu0 %v4182, 32
      %v4237 = vpop.permute.xlu0 %4236
      %4240 = vrot.lane.b32.xlu0 %v4200, 48
      %v4241 = vpop.permute.xlu0 %4240
      %4244 = vrot.lane.b32.xlu0 %v4191, 64
      %v4245 = vpop.permute.xlu0 %4244
      %4248 = vrot.lane.b32.xlu0 %v4201, 80
      %v4249 = vpop.permute.xlu0 %4248
      %4252 = vrot.lane.b32.xlu0 %v4198, 96
      %v4253 = vpop.permute.xlu0 %4252
      %4256 = vrot.lane.b32.xlu0 %v4202, 112
      %v4257 = vpop.permute.xlu0 %4256
      %v4259 = vsel %vm930, %v4107, %v4205
      %v4260 = vsel %vm932, %v4259, %v4209
      %v4261 = vsel %vm934, %v4260, %v4213
      %v4262 = vsel %vm936, %v4261, %v4217
      %v4263 = vsel %vm938, %v4262, %v4221
      %v4264 = vsel %vm940, %v4263, %v4225
      %v4265 = vsel %vm942, %v4264, %v4229
      %v4266 = vsel %vm930, %v4175, %v4233
      %v4267 = vsel %vm932, %v4266, %v4237
      %v4268 = vsel %vm934, %v4267, %v4241
      %v4269 = vsel %vm936, %v4268, %v4245
      %v4270 = vsel %vm938, %v4269, %v4249
      %v4271 = vsel %vm940, %v4270, %v4253
      %v4272 = vsel %vm942, %v4271, %v4257
      %v4275 = vrot.slane %v4265, 4
      %v4276 = vrot.slane %v4272, 4
      %4279 = vst [vmem:[#allocation3 + $0x10] sm:$0xf0] %v4275
      %4280 = vst [vmem:[#allocation3 + $0x18] sm:$0xf0] %v4276
      %4281 = vrot.lane.b32.xlu0 %v4041, 127
      %v4282 = vpop.permute.xlu0 %4281
      %4283 = vrot.lane.b32.xlu0 %v4043, 127
      %v4284 = vpop.permute.xlu0 %4283
      %4285 = vrot.lane.b32.xlu0 %v4046, 127
      %v4286 = vpop.permute.xlu0 %4285
      %4287 = vrot.lane.b32.xlu0 %v4048, 127
      %v4288 = vpop.permute.xlu0 %4287
      %4289 = vrot.lane.b32.xlu0 %v4051, 127
      %v4290 = vpop.permute.xlu0 %4289
      %4291 = vrot.lane.b32.xlu0 %v4053, 127
      %v4292 = vpop.permute.xlu0 %4291
      %4293 = vrot.lane.b32.xlu0 %v4056, 127
      %v4294 = vpop.permute.xlu0 %4293
      %4295 = vrot.lane.b32.xlu0 %v4058, 127
      %v4296 = vpop.permute.xlu0 %4295
      %v4305 = vcombine.low %v4282, %v4290
      %v4306 = vcombine.high %v4282, %v4290
      %v4308 = vunpack.c.l.s4 1983009808
      %v4309 = vunpack.c.0.s8 %v4308
      %v4310 = vlaneseq
      %v4311 = vshrl.u32 %v4310, 7
      %v4312 = vsub.s32 %v4309, %v4311
      %v4313 = vrot.slane %v4305, %v4312
      %v4315 = vunpack.c.l.s4 1983009808
      %v4316 = vunpack.c.0.s8 %v4315
      %v4317 = vlaneseq
      %v4318 = vshrl.u32 %v4317, 7
      %v4319 = vsub.s32 %v4316, %v4318
      %v4320 = vrot.slane %v4306, %v4319
      %v4321 = vcombine.low %v4286, %v4294
      %v4322 = vcombine.high %v4286, %v4294
      %v4324 = vunpack.c.l.s4 1983009808
      %v4325 = vunpack.c.0.s8 %v4324
      %v4326 = vlaneseq
      %v4327 = vshrl.u32 %v4326, 7
      %v4328 = vsub.s32 %v4325, %v4327
      %v4329 = vrot.slane %v4321, %v4328
      %v4331 = vunpack.c.l.s4 1983009808
      %v4332 = vunpack.c.0.s8 %v4331
      %v4333 = vlaneseq
      %v4334 = vshrl.u32 %v4333, 7
      %v4335 = vsub.s32 %v4332, %v4334
      %v4336 = vrot.slane %v4322, %v4335
      %v4337 = vcombine.low %v4313, %v4329
      %v4338 = vcombine.high %v4313, %v4329
      %v4340 = vunpack.c.l.s4 1934713408
      %v4341 = vunpack.c.0.s8 %v4340
      %v4342 = vlaneseq
      %v4343 = vshrl.u32 %v4342, 7
      %v4344 = vsub.s32 %v4341, %v4343
      %v4345 = vrot.slane %v4337, %v4344
      %v4347 = vunpack.c.l.s4 1934713408
      %v4348 = vunpack.c.0.s8 %v4347
      %v4349 = vlaneseq
      %v4350 = vshrl.u32 %v4349, 7
      %v4351 = vsub.s32 %v4348, %v4350
      %v4352 = vrot.slane %v4338, %v4351
      %v4353 = vcombine.low %v4320, %v4336
      %v4354 = vcombine.high %v4320, %v4336
      %v4356 = vunpack.c.l.s4 1934713408
      %v4357 = vunpack.c.0.s8 %v4356
      %v4358 = vlaneseq
      %v4359 = vshrl.u32 %v4358, 7
      %v4360 = vsub.s32 %v4357, %v4359
      %v4361 = vrot.slane %v4353, %v4360
      %v4363 = vunpack.c.l.s4 1934713408
      %v4364 = vunpack.c.0.s8 %v4363
      %v4365 = vlaneseq
      %v4366 = vshrl.u32 %v4365, 7
      %v4367 = vsub.s32 %v4364, %v4366
      %v4368 = vrot.slane %v4354, %v4367
      %v4369 = vcombine.high %v4345, 0.0
      %v4370 = vcombine.high %v4352, 0.0
      %v4371 = vcombine.high %v4361, 0.0
      %v4372 = vcombine.high %v4368, 0.0
      %v4373 = vcombine.low %v4284, %v4292
      %v4374 = vcombine.high %v4284, %v4292
      %v4376 = vunpack.c.l.s4 1983009808
      %v4377 = vunpack.c.0.s8 %v4376
      %v4378 = vlaneseq
      %v4379 = vshrl.u32 %v4378, 7
      %v4380 = vsub.s32 %v4377, %v4379
      %v4381 = vrot.slane %v4373, %v4380
      %v4383 = vunpack.c.l.s4 1983009808
      %v4384 = vunpack.c.0.s8 %v4383
      %v4385 = vlaneseq
      %v4386 = vshrl.u32 %v4385, 7
      %v4387 = vsub.s32 %v4384, %v4386
      %v4388 = vrot.slane %v4374, %v4387
      %v4389 = vcombine.low %v4288, %v4296
      %v4390 = vcombine.high %v4288, %v4296
      %v4392 = vunpack.c.l.s4 1983009808
      %v4393 = vunpack.c.0.s8 %v4392
      %v4394 = vlaneseq
      %v4395 = vshrl.u32 %v4394, 7
      %v4396 = vsub.s32 %v4393, %v4395
      %v4397 = vrot.slane %v4389, %v4396
      %v4399 = vunpack.c.l.s4 1983009808
      %v4400 = vunpack.c.0.s8 %v4399
      %v4401 = vlaneseq
      %v4402 = vshrl.u32 %v4401, 7
      %v4403 = vsub.s32 %v4400, %v4402
      %v4404 = vrot.slane %v4390, %v4403
      %v4405 = vcombine.low %v4381, %v4397
      %v4406 = vcombine.high %v4381, %v4397
      %v4408 = vunpack.c.l.s4 1934713408
      %v4409 = vunpack.c.0.s8 %v4408
      %v4410 = vlaneseq
      %v4411 = vshrl.u32 %v4410, 7
      %v4412 = vsub.s32 %v4409, %v4411
      %v4413 = vrot.slane %v4405, %v4412
      %v4415 = vunpack.c.l.s4 1934713408
      %v4416 = vunpack.c.0.s8 %v4415
      %v4417 = vlaneseq
      %v4418 = vshrl.u32 %v4417, 7
      %v4419 = vsub.s32 %v4416, %v4418
      %v4420 = vrot.slane %v4406, %v4419
      %v4421 = vcombine.low %v4388, %v4404
      %v4422 = vcombine.high %v4388, %v4404
      %v4424 = vunpack.c.l.s4 1934713408
      %v4425 = vunpack.c.0.s8 %v4424
      %v4426 = vlaneseq
      %v4427 = vshrl.u32 %v4426, 7
      %v4428 = vsub.s32 %v4425, %v4427
      %v4429 = vrot.slane %v4421, %v4428
      %v4431 = vunpack.c.l.s4 1934713408
      %v4432 = vunpack.c.0.s8 %v4431
      %v4433 = vlaneseq
      %v4434 = vshrl.u32 %v4433, 7
      %v4435 = vsub.s32 %v4432, %v4434
      %v4436 = vrot.slane %v4422, %v4435
      %v4437 = vcombine.high %v4413, 0.0
      %v4438 = vcombine.high %v4420, 0.0
      %v4439 = vcombine.high %v4429, 0.0
      %v4440 = vcombine.high %v4436, 0.0
      %4442 = vrot.lane.b32.xlu0 %v4369, 16
      %v4443 = vpop.permute.xlu0 %4442
      %4446 = vrot.lane.b32.xlu0 %v4352, 32
      %v4447 = vpop.permute.xlu0 %4446
      %4450 = vrot.lane.b32.xlu0 %v4370, 48
      %v4451 = vpop.permute.xlu0 %4450
      %4454 = vrot.lane.b32.xlu0 %v4361, 64
      %v4455 = vpop.permute.xlu0 %4454
      %4458 = vrot.lane.b32.xlu0 %v4371, 80
      %v4459 = vpop.permute.xlu0 %4458
      %4462 = vrot.lane.b32.xlu0 %v4368, 96
      %v4463 = vpop.permute.xlu0 %4462
      %4466 = vrot.lane.b32.xlu0 %v4372, 112
      %v4467 = vpop.permute.xlu0 %4466
      %4470 = vrot.lane.b32.xlu0 %v4437, 16
      %v4471 = vpop.permute.xlu0 %4470
      %4474 = vrot.lane.b32.xlu0 %v4420, 32
      %v4475 = vpop.permute.xlu0 %4474
      %4478 = vrot.lane.b32.xlu0 %v4438, 48
      %v4479 = vpop.permute.xlu0 %4478
      %4482 = vrot.lane.b32.xlu0 %v4429, 64
      %v4483 = vpop.permute.xlu0 %4482
      %4486 = vrot.lane.b32.xlu0 %v4439, 80
      %v4487 = vpop.permute.xlu0 %4486
      %4490 = vrot.lane.b32.xlu0 %v4436, 96
      %v4491 = vpop.permute.xlu0 %4490
      %4494 = vrot.lane.b32.xlu0 %v4440, 112
      %v4495 = vpop.permute.xlu0 %4494
      %v4497 = vsel %vm930, %v4345, %v4443
      %v4498 = vsel %vm932, %v4497, %v4447
      %v4499 = vsel %vm934, %v4498, %v4451
      %v4500 = vsel %vm936, %v4499, %v4455
      %v4501 = vsel %vm938, %v4500, %v4459
      %v4502 = vsel %vm940, %v4501, %v4463
      %v4503 = vsel %vm942, %v4502, %v4467
      %v4504 = vsel %vm930, %v4413, %v4471
      %v4505 = vsel %vm932, %v4504, %v4475
      %v4506 = vsel %vm934, %v4505, %v4479
      %v4507 = vsel %vm936, %v4506, %v4483
      %v4508 = vsel %vm938, %v4507, %v4487
      %v4509 = vsel %vm940, %v4508, %v4491
      %v4510 = vsel %vm942, %v4509, %v4495
      %4511 = vst [vmem:[#allocation3 + $0x20] sm:$0xf] %v4503
      %4512 = vst [vmem:[#allocation3 + $0x28] sm:$0xf] %v4510
      %4513 = vrot.lane.b32.xlu0 %v4041, 126
      %v4514 = vpop.permute.xlu0 %4513
      %4515 = vrot.lane.b32.xlu0 %v4043, 126
      %v4516 = vpop.permute.xlu0 %4515
      %4517 = vrot.lane.b32.xlu0 %v4046, 126
      %v4518 = vpop.permute.xlu0 %4517
      %4519 = vrot.lane.b32.xlu0 %v4048, 126
      %v4520 = vpop.permute.xlu0 %4519
      %4521 = vrot.lane.b32.xlu0 %v4051, 126
      %v4522 = vpop.permute.xlu0 %4521
      %4523 = vrot.lane.b32.xlu0 %v4053, 126
      %v4524 = vpop.permute.xlu0 %4523
      %4525 = vrot.lane.b32.xlu0 %v4056, 126
      %v4526 = vpop.permute.xlu0 %4525
      %4527 = vrot.lane.b32.xlu0 %v4058, 126
      %v4528 = vpop.permute.xlu0 %4527
      %v4537 = vcombine.low %v4514, %v4522
      %v4538 = vcombine.high %v4514, %v4522
      %v4540 = vunpack.c.l.s4 1983009808
      %v4541 = vunpack.c.0.s8 %v4540
      %v4542 = vlaneseq
      %v4543 = vshrl.u32 %v4542, 7
      %v4544 = vsub.s32 %v4541, %v4543
      %v4545 = vrot.slane %v4537, %v4544
      %v4547 = vunpack.c.l.s4 1983009808
      %v4548 = vunpack.c.0.s8 %v4547
      %v4549 = vlaneseq
      %v4550 = vshrl.u32 %v4549, 7
      %v4551 = vsub.s32 %v4548, %v4550
      %v4552 = vrot.slane %v4538, %v4551
      %v4553 = vcombine.low %v4518, %v4526
      %v4554 = vcombine.high %v4518, %v4526
      %v4556 = vunpack.c.l.s4 1983009808
      %v4557 = vunpack.c.0.s8 %v4556
      %v4558 = vlaneseq
      %v4559 = vshrl.u32 %v4558, 7
      %v4560 = vsub.s32 %v4557, %v4559
      %v4561 = vrot.slane %v4553, %v4560
      %v4563 = vunpack.c.l.s4 1983009808
      %v4564 = vunpack.c.0.s8 %v4563
      %v4565 = vlaneseq
      %v4566 = vshrl.u32 %v4565, 7
      %v4567 = vsub.s32 %v4564, %v4566
      %v4568 = vrot.slane %v4554, %v4567
      %v4569 = vcombine.low %v4545, %v4561
      %v4570 = vcombine.high %v4545, %v4561
      %v4572 = vunpack.c.l.s4 1934713408
      %v4573 = vunpack.c.0.s8 %v4572
      %v4574 = vlaneseq
      %v4575 = vshrl.u32 %v4574, 7
      %v4576 = vsub.s32 %v4573, %v4575
      %v4577 = vrot.slane %v4569, %v4576
      %v4579 = vunpack.c.l.s4 1934713408
      %v4580 = vunpack.c.0.s8 %v4579
      %v4581 = vlaneseq
      %v4582 = vshrl.u32 %v4581, 7
      %v4583 = vsub.s32 %v4580, %v4582
      %v4584 = vrot.slane %v4570, %v4583
      %v4585 = vcombine.low %v4552, %v4568
      %v4586 = vcombine.high %v4552, %v4568
      %v4588 = vunpack.c.l.s4 1934713408
      %v4589 = vunpack.c.0.s8 %v4588
      %v4590 = vlaneseq
      %v4591 = vshrl.u32 %v4590, 7
      %v4592 = vsub.s32 %v4589, %v4591
      %v4593 = vrot.slane %v4585, %v4592
      %v4595 = vunpack.c.l.s4 1934713408
      %v4596 = vunpack.c.0.s8 %v4595
      %v4597 = vlaneseq
      %v4598 = vshrl.u32 %v4597, 7
      %v4599 = vsub.s32 %v4596, %v4598
      %v4600 = vrot.slane %v4586, %v4599
      %v4601 = vcombine.high %v4577, 0.0
      %v4602 = vcombine.high %v4584, 0.0
      %v4603 = vcombine.high %v4593, 0.0
      %v4604 = vcombine.high %v4600, 0.0
      %v4605 = vcombine.low %v4516, %v4524
      %v4606 = vcombine.high %v4516, %v4524
      %v4608 = vunpack.c.l.s4 1983009808
      %v4609 = vunpack.c.0.s8 %v4608
      %v4610 = vlaneseq
      %v4611 = vshrl.u32 %v4610, 7
      %v4612 = vsub.s32 %v4609, %v4611
      %v4613 = vrot.slane %v4605, %v4612
      %v4615 = vunpack.c.l.s4 1983009808
      %v4616 = vunpack.c.0.s8 %v4615
      %v4617 = vlaneseq
      %v4618 = vshrl.u32 %v4617, 7
      %v4619 = vsub.s32 %v4616, %v4618
      %v4620 = vrot.slane %v4606, %v4619
      %v4621 = vcombine.low %v4520, %v4528
      %v4622 = vcombine.high %v4520, %v4528
      %v4624 = vunpack.c.l.s4 1983009808
      %v4625 = vunpack.c.0.s8 %v4624
      %v4626 = vlaneseq
      %v4627 = vshrl.u32 %v4626, 7
      %v4628 = vsub.s32 %v4625, %v4627
      %v4629 = vrot.slane %v4621, %v4628
      %v4631 = vunpack.c.l.s4 1983009808
      %v4632 = vunpack.c.0.s8 %v4631
      %v4633 = vlaneseq
      %v4634 = vshrl.u32 %v4633, 7
      %v4635 = vsub.s32 %v4632, %v4634
      %v4636 = vrot.slane %v4622, %v4635
      %v4637 = vcombine.low %v4613, %v4629
      %v4638 = vcombine.high %v4613, %v4629
      %v4640 = vunpack.c.l.s4 1934713408
      %v4641 = vunpack.c.0.s8 %v4640
      %v4642 = vlaneseq
      %v4643 = vshrl.u32 %v4642, 7
      %v4644 = vsub.s32 %v4641, %v4643
      %v4645 = vrot.slane %v4637, %v4644
      %v4647 = vunpack.c.l.s4 1934713408
      %v4648 = vunpack.c.0.s8 %v4647
      %v4649 = vlaneseq
      %v4650 = vshrl.u32 %v4649, 7
      %v4651 = vsub.s32 %v4648, %v4650
      %v4652 = vrot.slane %v4638, %v4651
      %v4653 = vcombine.low %v4620, %v4636
      %v4654 = vcombine.high %v4620, %v4636
      %v4656 = vunpack.c.l.s4 1934713408
      %v4657 = vunpack.c.0.s8 %v4656
      %v4658 = vlaneseq
      %v4659 = vshrl.u32 %v4658, 7
      %v4660 = vsub.s32 %v4657, %v4659
      %v4661 = vrot.slane %v4653, %v4660
      %v4663 = vunpack.c.l.s4 1934713408
      %v4664 = vunpack.c.0.s8 %v4663
      %v4665 = vlaneseq
      %v4666 = vshrl.u32 %v4665, 7
      %v4667 = vsub.s32 %v4664, %v4666
      %v4668 = vrot.slane %v4654, %v4667
      %v4669 = vcombine.high %v4645, 0.0
      %v4670 = vcombine.high %v4652, 0.0
      %v4671 = vcombine.high %v4661, 0.0
      %v4672 = vcombine.high %v4668, 0.0
      %4674 = vrot.lane.b32.xlu0 %v4601, 16
      %v4675 = vpop.permute.xlu0 %4674
      %4678 = vrot.lane.b32.xlu0 %v4584, 32
      %v4679 = vpop.permute.xlu0 %4678
      %4682 = vrot.lane.b32.xlu0 %v4602, 48
      %v4683 = vpop.permute.xlu0 %4682
      %4686 = vrot.lane.b32.xlu0 %v4593, 64
      %v4687 = vpop.permute.xlu0 %4686
      %4690 = vrot.lane.b32.xlu0 %v4603, 80
      %v4691 = vpop.permute.xlu0 %4690
      %4694 = vrot.lane.b32.xlu0 %v4600, 96
      %v4695 = vpop.permute.xlu0 %4694
      %4698 = vrot.lane.b32.xlu0 %v4604, 112
      %v4699 = vpop.permute.xlu0 %4698
      %4702 = vrot.lane.b32.xlu0 %v4669, 16
      %v4703 = vpop.permute.xlu0 %4702
      %4706 = vrot.lane.b32.xlu0 %v4652, 32
      %v4707 = vpop.permute.xlu0 %4706
      %4710 = vrot.lane.b32.xlu0 %v4670, 48
      %v4711 = vpop.permute.xlu0 %4710
      %4714 = vrot.lane.b32.xlu0 %v4661, 64
      %v4715 = vpop.permute.xlu0 %4714
      %4718 = vrot.lane.b32.xlu0 %v4671, 80
      %v4719 = vpop.permute.xlu0 %4718
      %4722 = vrot.lane.b32.xlu0 %v4668, 96
      %v4723 = vpop.permute.xlu0 %4722
      %4726 = vrot.lane.b32.xlu0 %v4672, 112
      %v4727 = vpop.permute.xlu0 %4726
      %v4729 = vsel %vm930, %v4577, %v4675
      %v4730 = vsel %vm932, %v4729, %v4679
      %v4731 = vsel %vm934, %v4730, %v4683
      %v4732 = vsel %vm936, %v4731, %v4687
      %v4733 = vsel %vm938, %v4732, %v4691
      %v4734 = vsel %vm940, %v4733, %v4695
      %v4735 = vsel %vm942, %v4734, %v4699
      %v4736 = vsel %vm930, %v4645, %v4703
      %v4737 = vsel %vm932, %v4736, %v4707
      %v4738 = vsel %vm934, %v4737, %v4711
      %v4739 = vsel %vm936, %v4738, %v4715
      %v4740 = vsel %vm938, %v4739, %v4719
      %v4741 = vsel %vm940, %v4740, %v4723
      %v4742 = vsel %vm942, %v4741, %v4727
      %v4745 = vrot.slane %v4735, 4
      %v4746 = vrot.slane %v4742, 4
      %4749 = vst [vmem:[#allocation3 + $0x20] sm:$0xf0] %v4745
      %4750 = vst [vmem:[#allocation3 + $0x28] sm:$0xf0] %v4746
      %v4751 = vrot.slane %v3337, 2
      %v4752 = vrot.slane %v3338, 2
      %v4753 = vsel %vm2148, %v4751, %v4752
      %v4754 = vrot.slane %v3339, 2
      %v4755 = vsel %vm2148, %v4752, %v4754
      %v4756 = vrot.slane %v3340, 2
      %v4757 = vrot.slane %v3341, 2
      %v4758 = vsel %vm2148, %v4756, %v4757
      %v4759 = vrot.slane %v3342, 2
      %v4760 = vsel %vm2148, %v4757, %v4759
      %v4761 = vrot.slane %v3343, 2
      %v4762 = vrot.slane %v3344, 2
      %v4763 = vsel %vm2148, %v4761, %v4762
      %v4764 = vrot.slane %v3345, 2
      %v4765 = vsel %vm2148, %v4762, %v4764
      %v4766 = vrot.slane %v3346, 2
      %v4767 = vrot.slane %v3347, 2
      %v4768 = vsel %vm2148, %v4766, %v4767
      %v4769 = vrot.slane %v3348, 2
      %v4770 = vsel %vm2148, %v4767, %v4769
      %v4779 = vcombine.low %v4753, %v4763
      %v4780 = vcombine.high %v4753, %v4763
      %v4782 = vunpack.c.l.s4 1983009808
      %v4783 = vunpack.c.0.s8 %v4782
      %v4784 = vlaneseq
      %v4785 = vshrl.u32 %v4784, 7
      %v4786 = vsub.s32 %v4783, %v4785
      %v4787 = vrot.slane %v4779, %v4786
      %v4789 = vunpack.c.l.s4 1983009808
      %v4790 = vunpack.c.0.s8 %v4789
      %v4791 = vlaneseq
      %v4792 = vshrl.u32 %v4791, 7
      %v4793 = vsub.s32 %v4790, %v4792
      %v4794 = vrot.slane %v4780, %v4793
      %v4795 = vcombine.low %v4758, %v4768
      %v4796 = vcombine.high %v4758, %v4768
      %v4798 = vunpack.c.l.s4 1983009808
      %v4799 = vunpack.c.0.s8 %v4798
      %v4800 = vlaneseq
      %v4801 = vshrl.u32 %v4800, 7
      %v4802 = vsub.s32 %v4799, %v4801
      %v4803 = vrot.slane %v4795, %v4802
      %v4805 = vunpack.c.l.s4 1983009808
      %v4806 = vunpack.c.0.s8 %v4805
      %v4807 = vlaneseq
      %v4808 = vshrl.u32 %v4807, 7
      %v4809 = vsub.s32 %v4806, %v4808
      %v4810 = vrot.slane %v4796, %v4809
      %v4811 = vcombine.low %v4787, %v4803
      %v4812 = vcombine.high %v4787, %v4803
      %v4814 = vunpack.c.l.s4 1934713408
      %v4815 = vunpack.c.0.s8 %v4814
      %v4816 = vlaneseq
      %v4817 = vshrl.u32 %v4816, 7
      %v4818 = vsub.s32 %v4815, %v4817
      %v4819 = vrot.slane %v4811, %v4818
      %v4821 = vunpack.c.l.s4 1934713408
      %v4822 = vunpack.c.0.s8 %v4821
      %v4823 = vlaneseq
      %v4824 = vshrl.u32 %v4823, 7
      %v4825 = vsub.s32 %v4822, %v4824
      %v4826 = vrot.slane %v4812, %v4825
      %v4827 = vcombine.low %v4794, %v4810
      %v4828 = vcombine.high %v4794, %v4810
      %v4830 = vunpack.c.l.s4 1934713408
      %v4831 = vunpack.c.0.s8 %v4830
      %v4832 = vlaneseq
      %v4833 = vshrl.u32 %v4832, 7
      %v4834 = vsub.s32 %v4831, %v4833
      %v4835 = vrot.slane %v4827, %v4834
      %v4837 = vunpack.c.l.s4 1934713408
      %v4838 = vunpack.c.0.s8 %v4837
      %v4839 = vlaneseq
      %v4840 = vshrl.u32 %v4839, 7
      %v4841 = vsub.s32 %v4838, %v4840
      %v4842 = vrot.slane %v4828, %v4841
      %v4843 = vcombine.high %v4819, 0.0
      %v4844 = vcombine.high %v4826, 0.0
      %v4845 = vcombine.high %v4835, 0.0
      %v4846 = vcombine.high %v4842, 0.0
      %v4847 = vcombine.low %v4755, %v4765
      %v4848 = vcombine.high %v4755, %v4765
      %v4850 = vunpack.c.l.s4 1983009808
      %v4851 = vunpack.c.0.s8 %v4850
      %v4852 = vlaneseq
      %v4853 = vshrl.u32 %v4852, 7
      %v4854 = vsub.s32 %v4851, %v4853
      %v4855 = vrot.slane %v4847, %v4854
      %v4857 = vunpack.c.l.s4 1983009808
      %v4858 = vunpack.c.0.s8 %v4857
      %v4859 = vlaneseq
      %v4860 = vshrl.u32 %v4859, 7
      %v4861 = vsub.s32 %v4858, %v4860
      %v4862 = vrot.slane %v4848, %v4861
      %v4863 = vcombine.low %v4760, %v4770
      %v4864 = vcombine.high %v4760, %v4770
      %v4866 = vunpack.c.l.s4 1983009808
      %v4867 = vunpack.c.0.s8 %v4866
      %v4868 = vlaneseq
      %v4869 = vshrl.u32 %v4868, 7
      %v4870 = vsub.s32 %v4867, %v4869
      %v4871 = vrot.slane %v4863, %v4870
      %v4873 = vunpack.c.l.s4 1983009808
      %v4874 = vunpack.c.0.s8 %v4873
      %v4875 = vlaneseq
      %v4876 = vshrl.u32 %v4875, 7
      %v4877 = vsub.s32 %v4874, %v4876
      %v4878 = vrot.slane %v4864, %v4877
      %v4879 = vcombine.low %v4855, %v4871
      %v4880 = vcombine.high %v4855, %v4871
      %v4882 = vunpack.c.l.s4 1934713408
      %v4883 = vunpack.c.0.s8 %v4882
      %v4884 = vlaneseq
      %v4885 = vshrl.u32 %v4884, 7
      %v4886 = vsub.s32 %v4883, %v4885
      %v4887 = vrot.slane %v4879, %v4886
      %v4889 = vunpack.c.l.s4 1934713408
      %v4890 = vunpack.c.0.s8 %v4889
      %v4891 = vlaneseq
      %v4892 = vshrl.u32 %v4891, 7
      %v4893 = vsub.s32 %v4890, %v4892
      %v4894 = vrot.slane %v4880, %v4893
      %v4895 = vcombine.low %v4862, %v4878
      %v4896 = vcombine.high %v4862, %v4878
      %v4898 = vunpack.c.l.s4 1934713408
      %v4899 = vunpack.c.0.s8 %v4898
      %v4900 = vlaneseq
      %v4901 = vshrl.u32 %v4900, 7
      %v4902 = vsub.s32 %v4899, %v4901
      %v4903 = vrot.slane %v4895, %v4902
      %v4905 = vunpack.c.l.s4 1934713408
      %v4906 = vunpack.c.0.s8 %v4905
      %v4907 = vlaneseq
      %v4908 = vshrl.u32 %v4907, 7
      %v4909 = vsub.s32 %v4906, %v4908
      %v4910 = vrot.slane %v4896, %v4909
      %v4911 = vcombine.high %v4887, 0.0
      %v4912 = vcombine.high %v4894, 0.0
      %v4913 = vcombine.high %v4903, 0.0
      %v4914 = vcombine.high %v4910, 0.0
      %4916 = vrot.lane.b32.xlu0 %v4843, 16
      %v4917 = vpop.permute.xlu0 %4916
      %4920 = vrot.lane.b32.xlu0 %v4826, 32
      %v4921 = vpop.permute.xlu0 %4920
      %4924 = vrot.lane.b32.xlu0 %v4844, 48
      %v4925 = vpop.permute.xlu0 %4924
      %4928 = vrot.lane.b32.xlu0 %v4835, 64
      %v4929 = vpop.permute.xlu0 %4928
      %4932 = vrot.lane.b32.xlu0 %v4845, 80
      %v4933 = vpop.permute.xlu0 %4932
      %4936 = vrot.lane.b32.xlu0 %v4842, 96
      %v4937 = vpop.permute.xlu0 %4936
      %4940 = vrot.lane.b32.xlu0 %v4846, 112
      %v4941 = vpop.permute.xlu0 %4940
      %4944 = vrot.lane.b32.xlu0 %v4911, 16
      %v4945 = vpop.permute.xlu0 %4944
      %4948 = vrot.lane.b32.xlu0 %v4894, 32
      %v4949 = vpop.permute.xlu0 %4948
      %4952 = vrot.lane.b32.xlu0 %v4912, 48
      %v4953 = vpop.permute.xlu0 %4952
      %4956 = vrot.lane.b32.xlu0 %v4903, 64
      %v4957 = vpop.permute.xlu0 %4956
      %4960 = vrot.lane.b32.xlu0 %v4913, 80
      %v4961 = vpop.permute.xlu0 %4960
      %4964 = vrot.lane.b32.xlu0 %v4910, 96
      %v4965 = vpop.permute.xlu0 %4964
      %4968 = vrot.lane.b32.xlu0 %v4914, 112
      %v4969 = vpop.permute.xlu0 %4968
      %v4971 = vsel %vm930, %v4819, %v4917
      %v4972 = vsel %vm932, %v4971, %v4921
      %v4973 = vsel %vm934, %v4972, %v4925
      %v4974 = vsel %vm936, %v4973, %v4929
      %v4975 = vsel %vm938, %v4974, %v4933
      %v4976 = vsel %vm940, %v4975, %v4937
      %v4977 = vsel %vm942, %v4976, %v4941
      %v4978 = vsel %vm930, %v4887, %v4945
      %v4979 = vsel %vm932, %v4978, %v4949
      %v4980 = vsel %vm934, %v4979, %v4953
      %v4981 = vsel %vm936, %v4980, %v4957
      %v4982 = vsel %vm938, %v4981, %v4961
      %v4983 = vsel %vm940, %v4982, %v4965
      %v4984 = vsel %vm942, %v4983, %v4969
      %4985 = vst [vmem:[#allocation3 + $0x30] sm:$0xf] %v4977
      %4986 = vst [vmem:[#allocation3 + $0x38] sm:$0xf] %v4984
      %4987 = vrot.lane.b32.xlu0 %v4753, 127
      %v4988 = vpop.permute.xlu0 %4987
      %4989 = vrot.lane.b32.xlu0 %v4755, 127
      %v4990 = vpop.permute.xlu0 %4989
      %4991 = vrot.lane.b32.xlu0 %v4758, 127
      %v4992 = vpop.permute.xlu0 %4991
      %4993 = vrot.lane.b32.xlu0 %v4760, 127
      %v4994 = vpop.permute.xlu0 %4993
      %4995 = vrot.lane.b32.xlu0 %v4763, 127
      %v4996 = vpop.permute.xlu0 %4995
      %4997 = vrot.lane.b32.xlu0 %v4765, 127
      %v4998 = vpop.permute.xlu0 %4997
      %4999 = vrot.lane.b32.xlu0 %v4768, 127
      %v5000 = vpop.permute.xlu0 %4999
      %5001 = vrot.lane.b32.xlu0 %v4770, 127
      %v5002 = vpop.permute.xlu0 %5001
      %v5011 = vcombine.low %v4988, %v4996
      %v5012 = vcombine.high %v4988, %v4996
      %v5014 = vunpack.c.l.s4 1983009808
      %v5015 = vunpack.c.0.s8 %v5014
      %v5016 = vlaneseq
      %v5017 = vshrl.u32 %v5016, 7
      %v5018 = vsub.s32 %v5015, %v5017
      %v5019 = vrot.slane %v5011, %v5018
      %v5021 = vunpack.c.l.s4 1983009808
      %v5022 = vunpack.c.0.s8 %v5021
      %v5023 = vlaneseq
      %v5024 = vshrl.u32 %v5023, 7
      %v5025 = vsub.s32 %v5022, %v5024
      %v5026 = vrot.slane %v5012, %v5025
      %v5027 = vcombine.low %v4992, %v5000
      %v5028 = vcombine.high %v4992, %v5000
      %v5030 = vunpack.c.l.s4 1983009808
      %v5031 = vunpack.c.0.s8 %v5030
      %v5032 = vlaneseq
      %v5033 = vshrl.u32 %v5032, 7
      %v5034 = vsub.s32 %v5031, %v5033
      %v5035 = vrot.slane %v5027, %v5034
      %v5037 = vunpack.c.l.s4 1983009808
      %v5038 = vunpack.c.0.s8 %v5037
      %v5039 = vlaneseq
      %v5040 = vshrl.u32 %v5039, 7
      %v5041 = vsub.s32 %v5038, %v5040
      %v5042 = vrot.slane %v5028, %v5041
      %v5043 = vcombine.low %v5019, %v5035
      %v5044 = vcombine.high %v5019, %v5035
      %v5046 = vunpack.c.l.s4 1934713408
      %v5047 = vunpack.c.0.s8 %v5046
      %v5048 = vlaneseq
      %v5049 = vshrl.u32 %v5048, 7
      %v5050 = vsub.s32 %v5047, %v5049
      %v5051 = vrot.slane %v5043, %v5050
      %v5053 = vunpack.c.l.s4 1934713408
      %v5054 = vunpack.c.0.s8 %v5053
      %v5055 = vlaneseq
      %v5056 = vshrl.u32 %v5055, 7
      %v5057 = vsub.s32 %v5054, %v5056
      %v5058 = vrot.slane %v5044, %v5057
      %v5059 = vcombine.low %v5026, %v5042
      %v5060 = vcombine.high %v5026, %v5042
      %v5062 = vunpack.c.l.s4 1934713408
      %v5063 = vunpack.c.0.s8 %v5062
      %v5064 = vlaneseq
      %v5065 = vshrl.u32 %v5064, 7
      %v5066 = vsub.s32 %v5063, %v5065
      %v5067 = vrot.slane %v5059, %v5066
      %v5069 = vunpack.c.l.s4 1934713408
      %v5070 = vunpack.c.0.s8 %v5069
      %v5071 = vlaneseq
      %v5072 = vshrl.u32 %v5071, 7
      %v5073 = vsub.s32 %v5070, %v5072
      %v5074 = vrot.slane %v5060, %v5073
      %v5075 = vcombine.high %v5051, 0.0
      %v5076 = vcombine.high %v5058, 0.0
      %v5077 = vcombine.high %v5067, 0.0
      %v5078 = vcombine.high %v5074, 0.0
      %v5079 = vcombine.low %v4990, %v4998
      %v5080 = vcombine.high %v4990, %v4998
      %v5082 = vunpack.c.l.s4 1983009808
      %v5083 = vunpack.c.0.s8 %v5082
      %v5084 = vlaneseq
      %v5085 = vshrl.u32 %v5084, 7
      %v5086 = vsub.s32 %v5083, %v5085
      %v5087 = vrot.slane %v5079, %v5086
      %v5089 = vunpack.c.l.s4 1983009808
      %v5090 = vunpack.c.0.s8 %v5089
      %v5091 = vlaneseq
      %v5092 = vshrl.u32 %v5091, 7
      %v5093 = vsub.s32 %v5090, %v5092
      %v5094 = vrot.slane %v5080, %v5093
      %v5095 = vcombine.low %v4994, %v5002
      %v5096 = vcombine.high %v4994, %v5002
      %v5098 = vunpack.c.l.s4 1983009808
      %v5099 = vunpack.c.0.s8 %v5098
      %v5100 = vlaneseq
      %v5101 = vshrl.u32 %v5100, 7
      %v5102 = vsub.s32 %v5099, %v5101
      %v5103 = vrot.slane %v5095, %v5102
      %v5105 = vunpack.c.l.s4 1983009808
      %v5106 = vunpack.c.0.s8 %v5105
      %v5107 = vlaneseq
      %v5108 = vshrl.u32 %v5107, 7
      %v5109 = vsub.s32 %v5106, %v5108
      %v5110 = vrot.slane %v5096, %v5109
      %v5111 = vcombine.low %v5087, %v5103
      %v5112 = vcombine.high %v5087, %v5103
      %v5114 = vunpack.c.l.s4 1934713408
      %v5115 = vunpack.c.0.s8 %v5114
      %v5116 = vlaneseq
      %v5117 = vshrl.u32 %v5116, 7
      %v5118 = vsub.s32 %v5115, %v5117
      %v5119 = vrot.slane %v5111, %v5118
      %v5121 = vunpack.c.l.s4 1934713408
      %v5122 = vunpack.c.0.s8 %v5121
      %v5123 = vlaneseq
      %v5124 = vshrl.u32 %v5123, 7
      %v5125 = vsub.s32 %v5122, %v5124
      %v5126 = vrot.slane %v5112, %v5125
      %v5127 = vcombine.low %v5094, %v5110
      %v5128 = vcombine.high %v5094, %v5110
      %v5130 = vunpack.c.l.s4 1934713408
      %v5131 = vunpack.c.0.s8 %v5130
      %v5132 = vlaneseq
      %v5133 = vshrl.u32 %v5132, 7
      %v5134 = vsub.s32 %v5131, %v5133
      %v5135 = vrot.slane %v5127, %v5134
      %v5137 = vunpack.c.l.s4 1934713408
      %v5138 = vunpack.c.0.s8 %v5137
      %v5139 = vlaneseq
      %v5140 = vshrl.u32 %v5139, 7
      %v5141 = vsub.s32 %v5138, %v5140
      %v5142 = vrot.slane %v5128, %v5141
      %v5143 = vcombine.high %v5119, 0.0
      %v5144 = vcombine.high %v5126, 0.0
      %v5145 = vcombine.high %v5135, 0.0
      %v5146 = vcombine.high %v5142, 0.0
      %5148 = vrot.lane.b32.xlu0 %v5075, 16
      %v5149 = vpop.permute.xlu0 %5148
      %5152 = vrot.lane.b32.xlu0 %v5058, 32
      %v5153 = vpop.permute.xlu0 %5152
      %5156 = vrot.lane.b32.xlu0 %v5076, 48
      %v5157 = vpop.permute.xlu0 %5156
      %5160 = vrot.lane.b32.xlu0 %v5067, 64
      %v5161 = vpop.permute.xlu0 %5160
      %5164 = vrot.lane.b32.xlu0 %v5077, 80
      %v5165 = vpop.permute.xlu0 %5164
      %5168 = vrot.lane.b32.xlu0 %v5074, 96
      %v5169 = vpop.permute.xlu0 %5168
      %5172 = vrot.lane.b32.xlu0 %v5078, 112
      %v5173 = vpop.permute.xlu0 %5172
      %5176 = vrot.lane.b32.xlu0 %v5143, 16
      %v5177 = vpop.permute.xlu0 %5176
      %5180 = vrot.lane.b32.xlu0 %v5126, 32
      %v5181 = vpop.permute.xlu0 %5180
      %5184 = vrot.lane.b32.xlu0 %v5144, 48
      %v5185 = vpop.permute.xlu0 %5184
      %5188 = vrot.lane.b32.xlu0 %v5135, 64
      %v5189 = vpop.permute.xlu0 %5188
      %5192 = vrot.lane.b32.xlu0 %v5145, 80
      %v5193 = vpop.permute.xlu0 %5192
      %5196 = vrot.lane.b32.xlu0 %v5142, 96
      %v5197 = vpop.permute.xlu0 %5196
      %5200 = vrot.lane.b32.xlu0 %v5146, 112
      %v5201 = vpop.permute.xlu0 %5200
      %v5203 = vsel %vm930, %v5051, %v5149
      %v5204 = vsel %vm932, %v5203, %v5153
      %v5205 = vsel %vm934, %v5204, %v5157
      %v5206 = vsel %vm936, %v5205, %v5161
      %v5207 = vsel %vm938, %v5206, %v5165
      %v5208 = vsel %vm940, %v5207, %v5169
      %v5209 = vsel %vm942, %v5208, %v5173
      %v5210 = vsel %vm930, %v5119, %v5177
      %v5211 = vsel %vm932, %v5210, %v5181
      %v5212 = vsel %vm934, %v5211, %v5185
      %v5213 = vsel %vm936, %v5212, %v5189
      %v5214 = vsel %vm938, %v5213, %v5193
      %v5215 = vsel %vm940, %v5214, %v5197
      %v5216 = vsel %vm942, %v5215, %v5201
      %v5219 = vrot.slane %v5209, 4
      %v5220 = vrot.slane %v5216, 4
      %5223 = vst [vmem:[#allocation3 + $0x30] sm:$0xf0] %v5219
      %5224 = vst [vmem:[#allocation3 + $0x38] sm:$0xf0] %v5220
      %5225 = vrot.lane.b32.xlu0 %v4753, 126
      %v5226 = vpop.permute.xlu0 %5225
      %5227 = vrot.lane.b32.xlu0 %v4755, 126
      %v5228 = vpop.permute.xlu0 %5227
      %5229 = vrot.lane.b32.xlu0 %v4758, 126
      %v5230 = vpop.permute.xlu0 %5229
      %5231 = vrot.lane.b32.xlu0 %v4760, 126
      %v5232 = vpop.permute.xlu0 %5231
      %5233 = vrot.lane.b32.xlu0 %v4763, 126
      %v5234 = vpop.permute.xlu0 %5233
      %5235 = vrot.lane.b32.xlu0 %v4765, 126
      %v5236 = vpop.permute.xlu0 %5235
      %5237 = vrot.lane.b32.xlu0 %v4768, 126
      %v5238 = vpop.permute.xlu0 %5237
      %5239 = vrot.lane.b32.xlu0 %v4770, 126
      %v5240 = vpop.permute.xlu0 %5239
      %v5249 = vcombine.low %v5226, %v5234
      %v5250 = vcombine.high %v5226, %v5234
      %v5252 = vunpack.c.l.s4 1983009808
      %v5253 = vunpack.c.0.s8 %v5252
      %v5254 = vlaneseq
      %v5255 = vshrl.u32 %v5254, 7
      %v5256 = vsub.s32 %v5253, %v5255
      %v5257 = vrot.slane %v5249, %v5256
      %v5259 = vunpack.c.l.s4 1983009808
      %v5260 = vunpack.c.0.s8 %v5259
      %v5261 = vlaneseq
      %v5262 = vshrl.u32 %v5261, 7
      %v5263 = vsub.s32 %v5260, %v5262
      %v5264 = vrot.slane %v5250, %v5263
      %v5265 = vcombine.low %v5230, %v5238
      %v5266 = vcombine.high %v5230, %v5238
      %v5268 = vunpack.c.l.s4 1983009808
      %v5269 = vunpack.c.0.s8 %v5268
      %v5270 = vlaneseq
      %v5271 = vshrl.u32 %v5270, 7
      %v5272 = vsub.s32 %v5269, %v5271
      %v5273 = vrot.slane %v5265, %v5272
      %v5275 = vunpack.c.l.s4 1983009808
      %v5276 = vunpack.c.0.s8 %v5275
      %v5277 = vlaneseq
      %v5278 = vshrl.u32 %v5277, 7
      %v5279 = vsub.s32 %v5276, %v5278
      %v5280 = vrot.slane %v5266, %v5279
      %v5281 = vcombine.low %v5257, %v5273
      %v5282 = vcombine.high %v5257, %v5273
      %v5284 = vunpack.c.l.s4 1934713408
      %v5285 = vunpack.c.0.s8 %v5284
      %v5286 = vlaneseq
      %v5287 = vshrl.u32 %v5286, 7
      %v5288 = vsub.s32 %v5285, %v5287
      %v5289 = vrot.slane %v5281, %v5288
      %v5291 = vunpack.c.l.s4 1934713408
      %v5292 = vunpack.c.0.s8 %v5291
      %v5293 = vlaneseq
      %v5294 = vshrl.u32 %v5293, 7
      %v5295 = vsub.s32 %v5292, %v5294
      %v5296 = vrot.slane %v5282, %v5295
      %v5297 = vcombine.low %v5264, %v5280
      %v5298 = vcombine.high %v5264, %v5280
      %v5300 = vunpack.c.l.s4 1934713408
      %v5301 = vunpack.c.0.s8 %v5300
      %v5302 = vlaneseq
      %v5303 = vshrl.u32 %v5302, 7
      %v5304 = vsub.s32 %v5301, %v5303
      %v5305 = vrot.slane %v5297, %v5304
      %v5307 = vunpack.c.l.s4 1934713408
      %v5308 = vunpack.c.0.s8 %v5307
      %v5309 = vlaneseq
      %v5310 = vshrl.u32 %v5309, 7
      %v5311 = vsub.s32 %v5308, %v5310
      %v5312 = vrot.slane %v5298, %v5311
      %v5313 = vcombine.high %v5289, 0.0
      %v5314 = vcombine.high %v5296, 0.0
      %v5315 = vcombine.high %v5305, 0.0
      %v5316 = vcombine.high %v5312, 0.0
      %v5317 = vcombine.low %v5228, %v5236
      %v5318 = vcombine.high %v5228, %v5236
      %v5320 = vunpack.c.l.s4 1983009808
      %v5321 = vunpack.c.0.s8 %v5320
      %v5322 = vlaneseq
      %v5323 = vshrl.u32 %v5322, 7
      %v5324 = vsub.s32 %v5321, %v5323
      %v5325 = vrot.slane %v5317, %v5324
      %v5327 = vunpack.c.l.s4 1983009808
      %v5328 = vunpack.c.0.s8 %v5327
      %v5329 = vlaneseq
      %v5330 = vshrl.u32 %v5329, 7
      %v5331 = vsub.s32 %v5328, %v5330
      %v5332 = vrot.slane %v5318, %v5331
      %v5333 = vcombine.low %v5232, %v5240
      %v5334 = vcombine.high %v5232, %v5240
      %v5336 = vunpack.c.l.s4 1983009808
      %v5337 = vunpack.c.0.s8 %v5336
      %v5338 = vlaneseq
      %v5339 = vshrl.u32 %v5338, 7
      %v5340 = vsub.s32 %v5337, %v5339
      %v5341 = vrot.slane %v5333, %v5340
      %v5343 = vunpack.c.l.s4 1983009808
      %v5344 = vunpack.c.0.s8 %v5343
      %v5345 = vlaneseq
      %v5346 = vshrl.u32 %v5345, 7
      %v5347 = vsub.s32 %v5344, %v5346
      %v5348 = vrot.slane %v5334, %v5347
      %v5349 = vcombine.low %v5325, %v5341
      %v5350 = vcombine.high %v5325, %v5341
      %v5352 = vunpack.c.l.s4 1934713408
      %v5353 = vunpack.c.0.s8 %v5352
      %v5354 = vlaneseq
      %v5355 = vshrl.u32 %v5354, 7
      %v5356 = vsub.s32 %v5353, %v5355
      %v5357 = vrot.slane %v5349, %v5356
      %v5359 = vunpack.c.l.s4 1934713408
      %v5360 = vunpack.c.0.s8 %v5359
      %v5361 = vlaneseq
      %v5362 = vshrl.u32 %v5361, 7
      %v5363 = vsub.s32 %v5360, %v5362
      %v5364 = vrot.slane %v5350, %v5363
      %v5365 = vcombine.low %v5332, %v5348
      %v5366 = vcombine.high %v5332, %v5348
      %v5368 = vunpack.c.l.s4 1934713408
      %v5369 = vunpack.c.0.s8 %v5368
      %v5370 = vlaneseq
      %v5371 = vshrl.u32 %v5370, 7
      %v5372 = vsub.s32 %v5369, %v5371
      %v5373 = vrot.slane %v5365, %v5372
      %v5375 = vunpack.c.l.s4 1934713408
      %v5376 = vunpack.c.0.s8 %v5375
      %v5377 = vlaneseq
      %v5378 = vshrl.u32 %v5377, 7
      %v5379 = vsub.s32 %v5376, %v5378
      %v5380 = vrot.slane %v5366, %v5379
      %v5381 = vcombine.high %v5357, 0.0
      %v5382 = vcombine.high %v5364, 0.0
      %v5383 = vcombine.high %v5373, 0.0
      %v5384 = vcombine.high %v5380, 0.0
      %5386 = vrot.lane.b32.xlu0 %v5313, 16
      %v5387 = vpop.permute.xlu0 %5386
      %5390 = vrot.lane.b32.xlu0 %v5296, 32
      %v5391 = vpop.permute.xlu0 %5390
      %5394 = vrot.lane.b32.xlu0 %v5314, 48
      %v5395 = vpop.permute.xlu0 %5394
      %5398 = vrot.lane.b32.xlu0 %v5305, 64
      %v5399 = vpop.permute.xlu0 %5398
      %5402 = vrot.lane.b32.xlu0 %v5315, 80
      %v5403 = vpop.permute.xlu0 %5402
      %5406 = vrot.lane.b32.xlu0 %v5312, 96
      %v5407 = vpop.permute.xlu0 %5406
      %5410 = vrot.lane.b32.xlu0 %v5316, 112
      %v5411 = vpop.permute.xlu0 %5410
      %5414 = vrot.lane.b32.xlu0 %v5381, 16
      %v5415 = vpop.permute.xlu0 %5414
      %5418 = vrot.lane.b32.xlu0 %v5364, 32
      %v5419 = vpop.permute.xlu0 %5418
      %5422 = vrot.lane.b32.xlu0 %v5382, 48
      %v5423 = vpop.permute.xlu0 %5422
      %5426 = vrot.lane.b32.xlu0 %v5373, 64
      %v5427 = vpop.permute.xlu0 %5426
      %5430 = vrot.lane.b32.xlu0 %v5383, 80
      %v5431 = vpop.permute.xlu0 %5430
      %5434 = vrot.lane.b32.xlu0 %v5380, 96
      %v5435 = vpop.permute.xlu0 %5434
      %5438 = vrot.lane.b32.xlu0 %v5384, 112
      %v5439 = vpop.permute.xlu0 %5438
      %v5441 = vsel %vm930, %v5289, %v5387
      %v5442 = vsel %vm932, %v5441, %v5391
      %v5443 = vsel %vm934, %v5442, %v5395
      %v5444 = vsel %vm936, %v5443, %v5399
      %v5445 = vsel %vm938, %v5444, %v5403
      %v5446 = vsel %vm940, %v5445, %v5407
      %v5447 = vsel %vm942, %v5446, %v5411
      %v5448 = vsel %vm930, %v5357, %v5415
      %v5449 = vsel %vm932, %v5448, %v5419
      %v5450 = vsel %vm934, %v5449, %v5423
      %v5451 = vsel %vm936, %v5450, %v5427
      %v5452 = vsel %vm938, %v5451, %v5431
      %v5453 = vsel %vm940, %v5452, %v5435
      %v5454 = vsel %vm942, %v5453, %v5439
      %5455 = vst [vmem:[#allocation3 + $0x40] sm:$0xf] %v5447
      %5456 = vst [vmem:[#allocation3 + $0x48] sm:$0xf] %v5454
      %v5457 = vld [vmem:[%s4] sm:$0x3]
      %v5458 = vld [vmem:[#allocation3] sm:$0xff]
      %v5459 = vld [vmem:[#allocation3 + $0x8] sm:$0xff]
      %v5460 = vld [vmem:[#allocation3 + $0x10] sm:$0xff]
      %v5461 = vld [vmem:[#allocation3 + $0x18] sm:$0xff]
      %v5462 = vld [vmem:[#allocation3 + $0x20] sm:$0xff]
      %v5463 = vld [vmem:[#allocation3 + $0x28] sm:$0xff]
      %v5464 = vld [vmem:[#allocation3 + $0x30] sm:$0xff]
      %v5465 = vld [vmem:[#allocation3 + $0x38] sm:$0xff]
      %v5466 = vld [vmem:[#allocation3 + $0x40] sm:$0xf]
      %v5467 = vld [vmem:[#allocation3 + $0x48] sm:$0xf]
      %v5468 = vpack.c.bf16 %v5460, %v5458
      %v5469 = vpack.c.bf16 %v5461, %v5459
      %v5470 = vpack.c.bf16 %v5464, %v5462
      %v5471 = vpack.c.bf16 %v5465, %v5463
      %v5472 = vpack.c.bf16 %v5466, %v5466
      %v5473 = vpack.c.bf16 %v5467, %v5467
      %v5475 = vsel %vm2872, %v5457, 0
      %v5478 = vsel %vm2876, %v5472, 0
      %v5481 = vsel %vm2876, %v5473, 0
      %5483 = vmatprep.subr.bf16.mxu0 %v5469
      %5484 = vmatpush1.bf16.msra.mxu0 %v5468
      %5485 = vmatprep.subr.bf16.mxu0 %v5471
      %5486 = vmatpush1.bf16.msra.mxu0 %v5470
      %5487 = vmatprep.subr.bf16.mxu0 %v5481
      %5488 = vmatpush1.bf16.msra.mxu0 %v5478
      %5489 = vmatprep.subr.bf16.mxu0 0
      %5490 = vmatpush1.bf16.msra.mxu0 0
      %5491 = vmatprep.subr.bf16.mxu0 0
      %5492 = vmatpush1.bf16.msra.mxu0 0
      %5493 = vmatprep.subr.bf16.mxu0 0
      %5494 = vmatpush1.bf16.msra.mxu0 0
      %5495 = vmatprep.subr.bf16.mxu0 0
      %5496 = vmatpush1.bf16.msra.mxu0 0
      %5497 = vmatprep.subr.bf16.mxu0 0
      %5498 = vmatpush1.bf16.msra.mxu0 0
      %5499 = vmatprep.subr.bf16.mxu0 0
      %5500 = vmatpush1.bf16.msra.mxu0 0
      %5501 = vmatprep.subr.bf16.mxu0 0
      %5502 = vmatpush1.bf16.msra.mxu0 0
      %5503 = vmatprep.subr.bf16.mxu0 0
      %5504 = vmatpush1.bf16.msra.mxu0 0
      %5505 = vmatprep.subr.bf16.mxu0 0
      %5506 = vmatpush1.bf16.msra.mxu0 0
      %5507 = vmatprep.subr.bf16.mxu0 0
      %5508 = vmatpush1.bf16.msra.mxu0 0
      %5509 = vmatprep.subr.bf16.mxu0 0
      %5510 = vmatpush1.bf16.msra.mxu0 0
      %5511 = vmatprep.subr.bf16.mxu0 0
      %5512 = vmatpush1.bf16.msra.mxu0 0
      %5513 = vmatprep.subr.bf16.mxu0 0
      %5514 = vmatpush1.bf16.msra.mxu0 0
      %5515 = vmatprep.mubr.bf16.mxu0 0
      %5516 = vmatmul.mubr.bf16.gmra.mrb[0].mxu0 %v5475
      %v5517 = vpop.f32.mrb[0].mxu0
      %v5518 = vadd.f32 0.0, %v5517
      %v5519 = vpop.f32.mrb[0].mxu0
      %v5520 = vadd.f32 0.0, %v5519
      %v5521 = vpop.f32.mrb[0].mxu0
      %v5522 = vpop.f32.mrb[0].mxu0
      %5523 = vdwg.mxu0
      %v5524 = vld [vmem:[%s5] sm:$0xf]
      %v5525 = vld [vmem:[%s6] sm:$0xf]
      %v5526 = vsel %vm2926, %v5518, 0.0
      %v5527 = vsel %vm2926, %v5520, 0.0
      %v5528 = vadd.f32 %v5526, %v5527
      %5529 = vadd.xlane.f32.xlu0 %v5528
      %v5530 = vpop.xlane.xlu0 %5529
      %v5531 = vmul.f32 %v5530, 0.00390625
      %v5532 = vmul.f32 %v5518, %v5518
      %v5533 = vmul.f32 %v5520, %v5520
      %v5534 = vsel %vm2926, %v5532, 0.0
      %v5535 = vsel %vm2926, %v5533, 0.0
      %v5536 = vadd.f32 %v5534, %v5535
      %5537 = vadd.xlane.f32.xlu0 %v5536
      %v5538 = vpop.xlane.xlu0 %5537
      %v5539 = vmul.f32 %v5538, 0.00390625
      %v5540 = vmul.f32 %v5531, %v5531
      %v5541 = vsub.f32 %v5539, %v5540
      %v5542 = vadd.f32 %v5541, 1e-05
      %v5543 = vrsqrt.pop %v5542
      %v5544 = vmul.f32 %v5524, %v5543
      %5546 = vset.pattern.permute.xlu0 0
      %5547 = vperm.xlu0 %5546, %v5544
      %v5548 = vpop.permute.xlu0 %5547
      %v5550 = vmul.f32 %v5518, %v5548
      %v5551 = vmul.f32 %v5520, %v5548
      %v5552 = vmul.f32 %v5531, %v5544
      %v5553 = vsub.f32 %v5525, %v5552
      %5555 = vset.pattern.permute.xlu0 0
      %5556 = vperm.xlu0 %5555, %v5553
      %v5557 = vpop.permute.xlu0 %5556
      %v5559 = vadd.f32 %v5550, %v5557
      %v5560 = vadd.f32 %v5551, %v5557
      %v5563 = vcombine.low %v5559, %v5560
      %v5565 = vadd.f32 %v280, %v5563
      %5566 = vst [vmem:[%s278] sm:$0xff] %v5565
      %p5567 = scmp.lt.s32.totalorder %s18, 1
      %s5568 = scalar_select %p5567, %s18, 1
      %s5569 = smul.addr %s5568, 2
      %s5570 = smul.addr %s5569, 4
      %s5571 = scalar_lea.vmem %s7, %s5570
      // Predicated region
      $region49: #{residual_block.1} parent=47 // pred_check
        %p5572 = pneg %p188
      $region50: #{residual_block.1} parent=47 // pred_check_branch
        %5574 = sbr.rel (%p5572) target = $region52
      $region51: #{residual_block.1} parent=47 // pred_region
        _
      $region52: #{residual_block.1} parent=47 // pred_fallthru
        _
    $region48: #{residual_block.1} parent=5 // pred_fallthru
      _
    %p5575 = scmp.le.s32.totalorder 2, %s13
    // Predicated region
    $region53: #{residual_block.1} parent=5 // pred_check
      %p5576 = pneg %p5575
    $region54: #{residual_block.1} parent=5 // pred_check_branch
      %5578 = sbr.rel (%p5576) target = $region56
    $region55: #{residual_block.1} parent=5 // pred_region
      %s5579 = ssub.s32 %s13, 2
      // Predicated region
      $region57: #{residual_block.1} parent=55 // pred_check
        %p5580 = pneg %p194
      $region58: #{residual_block.1} parent=55 // pred_check_branch
        %5582 = sbr.rel (%p5580) target = $region60
      $region59: #{residual_block.1} parent=55 // pred_region
        %p5583 = scmp.lt.s32.totalorder %s19, 1
        %s5584 = scalar_select %p5583, %s19, 1
        %s5585 = smul.addr %s5584, 2
        %s5586 = smul.addr %s5585, 4
        %s5587 = scalar_lea.vmem %s7, %s5586
      $region60: #{residual_block.1} parent=55 // pred_fallthru
        _
    $region56: #{residual_block.1} parent=5 // pred_fallthru
      _
  $region6: #{residual_block.1} parent=0 // loop_footer
    %s17 = sadd.s32 1, %s13
  $region7: #{residual_block.1} parent=0 // loop_footer_branch
    %12 = sbr.rel target = $region3
  $region8: #{residual_block.1} parent=0 // loop_exit
    _

</llo_original>
